<compile_context>
chip_gen: v7x
topology: tpu7x:2x2x1
jax: 0.10.0
libtpu: 0.0.40
codegen_flags: <defaults>
</compile_context>

<pallas_src>
import jax
import jax.numpy as jnp
from jax.experimental import pallas as pl
from jax.experimental.pallas import tpu as pltpu


def autoencoder_kernel(x_ref,
                       w1_ref, b1_ref, w2_ref, b2_ref,   # encoder params
                       w3_ref, b3_ref, w4_ref, b4_ref,   # decoder params
                       out_ref):
    mm_dtype = w1_ref.dtype                       # bf16 MXU inputs
    x = x_ref[...].astype(mm_dtype)               # f32 HBM stream -> bf16 in-kernel

    # ---- encoder ----
    h = jnp.dot(x, w1_ref[...], preferred_element_type=jnp.float32) + b1_ref[...]
    h = jnp.maximum(h, 0.0)                       # ReLU (f32 epilogue)
    z = jnp.dot(h.astype(mm_dtype), w2_ref[...],
                preferred_element_type=jnp.float32) + b2_ref[...]

    # ---- decoder ----
    d = jnp.dot(z.astype(mm_dtype), w3_ref[...],
                preferred_element_type=jnp.float32) + b3_ref[...]
    d = jnp.maximum(d, 0.0)                       # ReLU (f32 epilogue)
    y = jnp.dot(d.astype(mm_dtype), w4_ref[...],
                preferred_element_type=jnp.float32) + b4_ref[...]

    out_ref[...] = y.astype(out_ref.dtype)


def _round_up(n, m):
    return ((n + m - 1) // m) * m


_DEFAULT_SCOPED_VMEM = 16 << 20      # v5e default scoped limit (v6e/v7x: 32 MiB)


def _vmem_budget_bytes():
    """Conservative per-core VMEM budget (headroom left for compiler scratch)."""
    try:
        cap = pltpu.get_tpu_info().vmem_capacity_bytes
    except Exception:
        cap = 64 << 20                # v7x per-TensorCore VMEM (smallest generation)
    return int(cap * 0.7)


def _vmem_footprint_bytes(tb, d, hid, zp, param_bytes):
    # x/out streams double-buffered f32; bf16 cast of x + f32 activations live in
    # VMEM/vregs during compute; params counted double-buffered as a worst case.
    streams = 2 * tb * d * 4 + 2 * tb * d * 4
    temps = tb * (2 * d + 4 * (hid + zp + hid + d))
    return streams + temps + 2 * param_bytes


def _choose_batch_tile(b, batch_tile, fits):
    """Pick a batch tile (multiple of 8 sublanes) that (1) fits the VMEM budget,
    (2) keeps batch-padding waste <=10%, and (3) gives the grid >=2 steps when
    the batch allows (v7x shards the 'parallel' axis across 2 TensorCores)."""
    b8 = _round_up(max(b, 1), 8)
    tb = max(8, min(_round_up(batch_tile, 8), b8))
    while tb > 8 and not fits(tb):
        tb -= 8
    for cand in range(tb, 7, -8):
        bp = _round_up(b8, cand)
        if (bp - b) / bp <= 0.10 and bp // cand >= 2:
            return cand, bp
    return tb, _round_up(b8, tb)      # tiny batches: single step over the 8-padded batch


def autoencoder_forward(x_nchw, params, *, batch_tile=1024,
                        mm_dtype=jnp.bfloat16, param_single_buffer=True):
    """params = (w1, b1, w2, b2, w3, b3, w4, b4) with weights stored as (in, out)."""
    B, C, H, W = x_nchw.shape
    D = C * H * W
    out_dtype = x_nchw.dtype

    w1, b1, w2, b2, w3, b3, w4, b4 = params
    HID = w1.shape[1]
    Z = w2.shape[1]

    # Pad the latent width to 128 lanes (exact: padded z columns are zero because
    # the padded w2/b2 columns are zero, and the padded w3 rows are zero).
    ZP = max(_round_up(Z, 128), 128)
    if ZP != Z:
        w2 = jnp.pad(w2, ((0, 0), (0, ZP - Z)))
        b2 = jnp.pad(b2, ((0, 0), (0, ZP - Z)))
        w3 = jnp.pad(w3, ((0, ZP - Z), (0, 0)))

    # bf16 MXU inputs for the (VMEM-resident) weights; f32 biases for the f32
    # bias-add/ReLU epilogue on the f32 accumulator.
    w1, w2, w3, w4 = (w.astype(mm_dtype) for w in (w1, w2, w3, w4))
    b1, b2, b3, b4 = (b.astype(jnp.float32) for b in (b1, b2, b3, b4))
    weight_args = (w1, b1, w2, b2, w3, b3, w4, b4)

    itemsize = lambda a: a.size * a.dtype.itemsize
    param_bytes = sum(itemsize(a) for a in weight_args)

    # --- batch tiling ---
    budget = _vmem_budget_bytes()
    fits = lambda tb: _vmem_footprint_bytes(tb, D, HID, ZP, param_bytes) <= budget
    TB, Bp = _choose_batch_tile(B, batch_tile, fits)

    x2d = x_nchw.reshape(B, D)                    # stays f32; bf16 cast happens in-kernel
    if Bp != B:
        x2d = jnp.pad(x2d, ((0, Bp - B), (0, 0)))

    # Only raise the scoped-VMEM limit when the footprint actually needs it.
    need = _vmem_footprint_bytes(TB, D, HID, ZP, param_bytes)
    vmem_limit = min(int(need * 1.5), budget) if need > _DEFAULT_SCOPED_VMEM else None

    flops = 2 * Bp * (D * HID + HID * ZP + ZP * HID + HID * D)
    bytes_accessed = (Bp * D * 4                                  # x read (f32)
                      + Bp * D * jnp.dtype(out_dtype).itemsize    # out write
                      + param_bytes)                              # params fetched once

    x_spec = pl.BlockSpec((TB, D), lambda i: (i, 0))
    out_spec = pl.BlockSpec((TB, D), lambda i: (i, 0))

    def param_spec(shape, single_buffer):
        index_map = lambda i: tuple(0 for _ in shape)   # constant -> VMEM-resident
        if single_buffer:
            return pl.BlockSpec(shape, index_map, pipeline_mode=pl.Buffered(1))
        return pl.BlockSpec(shape, index_map)

    def run(single_buffer):
        return pl.pallas_call(
            autoencoder_kernel,
            out_shape=jax.ShapeDtypeStruct((Bp, D), out_dtype),
            grid=(Bp // TB,),
            in_specs=[x_spec] + [param_spec(a.shape, single_buffer)
                                 for a in weight_args],
            out_specs=out_spec,
            compiler_params=pltpu.CompilerParams(
                dimension_semantics=("parallel",),
                vmem_limit_bytes=vmem_limit),
            cost_estimate=pl.CostEstimate(
                flops=flops, transcendentals=0, bytes_accessed=bytes_accessed),
        )(x2d, *weight_args)

    try:
        out2d = run(param_single_buffer)
    except Exception:
        if not param_single_buffer:
            raise
        out2d = run(False)            # fall back to default double-buffered params

    if Bp != B:
        out2d = out2d[:B]
    return out2d.reshape(B, C, H, W)


def init_linear(key, in_f, out_f):
    # PyTorch nn.Linear default init: U(-k, k), k = 1/sqrt(in_features)
    kw, kb = jax.random.split(key)
    k = 1.0 / jnp.sqrt(jnp.float32(in_f))
    w = jax.random.uniform(kw, (in_f, out_f), jnp.float32, -k, k)   # (in, out) = W.T
    b = jax.random.uniform(kb, (1, out_f), jnp.float32, -k, k)      # kept 2D for TPU
    return w, b


if __name__ == "__main__":
    B, C, H, W = 2, 4, 16, 16
    D = C * H * W          # 1024
    HID = 128
    Z = 32

    key = jax.random.PRNGKey(0)
    kx, k1, k2, k3, k4 = jax.random.split(key, 5)

    x = jax.random.normal(kx, (B, C, H, W), jnp.float32)

    w1, b1 = init_linear(k1, D, HID)    # encoder layer 1
    w2, b2 = init_linear(k2, HID, Z)    # encoder layer 2 (embedding)
    w3, b3 = init_linear(k3, Z, HID)    # decoder layer 1
    w4, b4 = init_linear(k4, HID, D)    # decoder layer 2

    params = (w1, b1, w2, b2, w3, b3, w4, b4)

    out = autoencoder_forward(x, params)
    jax.block_until_ready(out)

    # reference with the SAME dtype pipeline (bf16 MXU inputs, f32 accumulation)
    bf16 = jnp.bfloat16
    xb = x.reshape(B, D).astype(bf16)
    w1b, w2b, w3b, w4b = (w.astype(bf16) for w in (w1, w2, w3, w4))
    h = jnp.maximum(jnp.dot(xb, w1b, preferred_element_type=jnp.float32) + b1, 0.0)
    z = jnp.dot(h.astype(bf16), w2b, preferred_element_type=jnp.float32) + b2
    d = jnp.maximum(jnp.dot(z.astype(bf16), w3b,
                            preferred_element_type=jnp.float32) + b3, 0.0)
    ref = (jnp.dot(d.astype(bf16), w4b,
                   preferred_element_type=jnp.float32) + b4).reshape(B, C, H, W)

    assert jnp.allclose(out, ref, atol=2e-3, rtol=2e-3), "mismatch vs reference"

    print("KERNEL_OK")
</pallas_src>

<mosaic_0001>
module attributes {stable_mosaic.version = 11 : i64} {
  func.func @autoencoder_kernel(%arg0: i32, %arg1: memref<8x1024xf32, #tpu.memory_space<vmem>>, %arg2: memref<1024x128xbf16, #tpu.memory_space<vmem>>, %arg3: memref<1x128xf32, #tpu.memory_space<vmem>>, %arg4: memref<128x128xbf16, #tpu.memory_space<vmem>>, %arg5: memref<1x128xf32, #tpu.memory_space<vmem>>, %arg6: memref<128x128xbf16, #tpu.memory_space<vmem>>, %arg7: memref<1x128xf32, #tpu.memory_space<vmem>>, %arg8: memref<128x1024xbf16, #tpu.memory_space<vmem>>, %arg9: memref<1x1024xf32, #tpu.memory_space<vmem>>, %arg10: memref<8x1024xf32, #tpu.memory_space<vmem>>) attributes {dimension_semantics = [#tpu.dimension_semantics<parallel>], iteration_bounds = array<i64: 1>, scalar_prefetch = 0 : i64, scratch_operands = 0 : i64, tpu.core_type = #tpu.core_type<tc>, window_params = [{transform_indices = @transform_0, window_bounds = array<i64: 8, 1024>}, {pipeline_mode = #tpu.pipeline_mode<synchronous>, transform_indices = @transform_1, window_bounds = array<i64: 1024, 128>}, {pipeline_mode = #tpu.pipeline_mode<synchronous>, transform_indices = @transform_2, window_bounds = array<i64: 1, 128>}, {pipeline_mode = #tpu.pipeline_mode<synchronous>, transform_indices = @transform_3, window_bounds = array<i64: 128, 128>}, {pipeline_mode = #tpu.pipeline_mode<synchronous>, transform_indices = @transform_4, window_bounds = array<i64: 1, 128>}, {pipeline_mode = #tpu.pipeline_mode<synchronous>, transform_indices = @transform_5, window_bounds = array<i64: 128, 128>}, {pipeline_mode = #tpu.pipeline_mode<synchronous>, transform_indices = @transform_6, window_bounds = array<i64: 1, 128>}, {pipeline_mode = #tpu.pipeline_mode<synchronous>, transform_indices = @transform_7, window_bounds = array<i64: 128, 1024>}, {pipeline_mode = #tpu.pipeline_mode<synchronous>, transform_indices = @transform_8, window_bounds = array<i64: 1, 1024>}, {transform_indices = @transform_9, window_bounds = array<i64: 8, 1024>}]} {
    %c0 = arith.constant 0 : index
    %c0_0 = arith.constant 0 : index
    %0 = vector.load %arg1[%c0, %c0_0] : memref<8x1024xf32, #tpu.memory_space<vmem>>, vector<8x1024xf32>
    %1 = arith.truncf %0 : vector<8x1024xf32> to vector<8x1024xbf16>
    %c0_1 = arith.constant 0 : index
    %c0_2 = arith.constant 0 : index
    %2 = vector.load %arg2[%c0_1, %c0_2] : memref<1024x128xbf16, #tpu.memory_space<vmem>>, vector<1024x128xbf16>
    %cst = arith.constant dense<0.000000e+00> : vector<8x128xf32>
    %3 = tpu.matmul %1, %2, %cst {dimension_numbers = #tpu.dot_dimension_numbers<[1], [0], [0], [1], [0, 0, 1, 1], [], []>} : vector<8x1024xbf16>, vector<1024x128xbf16>, vector<8x128xf32> -> vector<8x128xf32>
    %c0_3 = arith.constant 0 : index
    %c0_4 = arith.constant 0 : index
    %4 = vector.load %arg3[%c0_3, %c0_4] : memref<1x128xf32, #tpu.memory_space<vmem>>, vector<1x128xf32>
    %5 = vector.broadcast %4 : vector<1x128xf32> to vector<8x128xf32>
    %6 = arith.addf %3, %5 : vector<8x128xf32>
    %cst_5 = arith.constant 0.000000e+00 : f32
    %7 = vector.broadcast %cst_5 : f32 to vector<8x128xf32>
    %8 = arith.maximumf %6, %7 : vector<8x128xf32>
    %9 = arith.truncf %8 : vector<8x128xf32> to vector<8x128xbf16>
    %c0_6 = arith.constant 0 : index
    %c0_7 = arith.constant 0 : index
    %10 = vector.load %arg4[%c0_6, %c0_7] : memref<128x128xbf16, #tpu.memory_space<vmem>>, vector<128x128xbf16>
    %cst_8 = arith.constant dense<0.000000e+00> : vector<8x128xf32>
    %11 = tpu.matmul %9, %10, %cst_8 {dimension_numbers = #tpu.dot_dimension_numbers<[1], [0], [0], [1], [0, 0, 1, 1], [], []>} : vector<8x128xbf16>, vector<128x128xbf16>, vector<8x128xf32> -> vector<8x128xf32>
    %c0_9 = arith.constant 0 : index
    %c0_10 = arith.constant 0 : index
    %12 = vector.load %arg5[%c0_9, %c0_10] : memref<1x128xf32, #tpu.memory_space<vmem>>, vector<1x128xf32>
    %13 = vector.broadcast %12 : vector<1x128xf32> to vector<8x128xf32>
    %14 = arith.addf %11, %13 : vector<8x128xf32>
    %15 = arith.truncf %14 : vector<8x128xf32> to vector<8x128xbf16>
    %c0_11 = arith.constant 0 : index
    %c0_12 = arith.constant 0 : index
    %16 = vector.load %arg6[%c0_11, %c0_12] : memref<128x128xbf16, #tpu.memory_space<vmem>>, vector<128x128xbf16>
    %cst_13 = arith.constant dense<0.000000e+00> : vector<8x128xf32>
    %17 = tpu.matmul %15, %16, %cst_13 {dimension_numbers = #tpu.dot_dimension_numbers<[1], [0], [0], [1], [0, 0, 1, 1], [], []>} : vector<8x128xbf16>, vector<128x128xbf16>, vector<8x128xf32> -> vector<8x128xf32>
    %c0_14 = arith.constant 0 : index
    %c0_15 = arith.constant 0 : index
    %18 = vector.load %arg7[%c0_14, %c0_15] : memref<1x128xf32, #tpu.memory_space<vmem>>, vector<1x128xf32>
    %19 = vector.broadcast %18 : vector<1x128xf32> to vector<8x128xf32>
    %20 = arith.addf %17, %19 : vector<8x128xf32>
    %cst_16 = arith.constant 0.000000e+00 : f32
    %21 = vector.broadcast %cst_16 : f32 to vector<8x128xf32>
    %22 = arith.maximumf %20, %21 : vector<8x128xf32>
    %23 = arith.truncf %22 : vector<8x128xf32> to vector<8x128xbf16>
    %c0_17 = arith.constant 0 : index
    %c0_18 = arith.constant 0 : index
    %24 = vector.load %arg8[%c0_17, %c0_18] : memref<128x1024xbf16, #tpu.memory_space<vmem>>, vector<128x1024xbf16>
    %cst_19 = arith.constant dense<0.000000e+00> : vector<8x1024xf32>
    %25 = tpu.matmul %23, %24, %cst_19 {dimension_numbers = #tpu.dot_dimension_numbers<[1], [0], [0], [1], [0, 0, 1, 1], [], []>} : vector<8x128xbf16>, vector<128x1024xbf16>, vector<8x1024xf32> -> vector<8x1024xf32>
    %c0_20 = arith.constant 0 : index
    %c0_21 = arith.constant 0 : index
    %26 = vector.load %arg9[%c0_20, %c0_21] : memref<1x1024xf32, #tpu.memory_space<vmem>>, vector<1x1024xf32>
    %27 = vector.broadcast %26 : vector<1x1024xf32> to vector<8x1024xf32>
    %28 = arith.addf %25, %27 : vector<8x1024xf32>
    %c0_22 = arith.constant 0 : index
    %c0_23 = arith.constant 0 : index
    %29 = vector.load %arg10[%c0_22, %c0_23] : memref<8x1024xf32, #tpu.memory_space<vmem>>, vector<8x1024xf32>
    tpu.vector_store %arg10[%c0_22, %c0_23], %28 {strides = array<i32>} : memref<8x1024xf32, #tpu.memory_space<vmem>>, vector<8x1024xf32>,
    return
  }
  func.func @transform_0(%arg0: i32) -> (i32, i32) {
    %c0_i32 = arith.constant 0 : i32
    %c0_i32_0 = arith.constant 0 : i32
    return %arg0, %c0_i32 : i32, i32
  }
  func.func @transform_1(%arg0: i32) -> (i32, i32) {
    %c0_i32 = arith.constant 0 : i32
    %c0_i32_0 = arith.constant 0 : i32
    %c0_i32_1 = arith.constant 0 : i32
    return %c0_i32, %c0_i32_0 : i32, i32
  }
  func.func @transform_2(%arg0: i32) -> (i32, i32) {
    %c0_i32 = arith.constant 0 : i32
    %c0_i32_0 = arith.constant 0 : i32
    %c0_i32_1 = arith.constant 0 : i32
    return %c0_i32, %c0_i32_0 : i32, i32
  }
  func.func @transform_3(%arg0: i32) -> (i32, i32) {
    %c0_i32 = arith.constant 0 : i32
    %c0_i32_0 = arith.constant 0 : i32
    %c0_i32_1 = arith.constant 0 : i32
    return %c0_i32, %c0_i32_0 : i32, i32
  }
  func.func @transform_4(%arg0: i32) -> (i32, i32) {
    %c0_i32 = arith.constant 0 : i32
    %c0_i32_0 = arith.constant 0 : i32
    %c0_i32_1 = arith.constant 0 : i32
    return %c0_i32, %c0_i32_0 : i32, i32
  }
  func.func @transform_5(%arg0: i32) -> (i32, i32) {
    %c0_i32 = arith.constant 0 : i32
    %c0_i32_0 = arith.constant 0 : i32
    %c0_i32_1 = arith.constant 0 : i32
    return %c0_i32, %c0_i32_0 : i32, i32
  }
  func.func @transform_6(%arg0: i32) -> (i32, i32) {
    %c0_i32 = arith.constant 0 : i32
    %c0_i32_0 = arith.constant 0 : i32
    %c0_i32_1 = arith.constant 0 : i32
    return %c0_i32, %c0_i32_0 : i32, i32
  }
  func.func @transform_7(%arg0: i32) -> (i32, i32) {
    %c0_i32 = arith.constant 0 : i32
    %c0_i32_0 = arith.constant 0 : i32
    %c0_i32_1 = arith.constant 0 : i32
    return %c0_i32, %c0_i32_0 : i32, i32
  }
  func.func @transform_8(%arg0: i32) -> (i32, i32) {
    %c0_i32 = arith.constant 0 : i32
    %c0_i32_0 = arith.constant 0 : i32
    %c0_i32_1 = arith.constant 0 : i32
    return %c0_i32, %c0_i32_0 : i32, i32
  }
  func.func @transform_9(%arg0: i32) -> (i32, i32) {
    %c0_i32 = arith.constant 0 : i32
    %c0_i32_0 = arith.constant 0 : i32
    return %arg0, %c0_i32 : i32, i32
  }
}

module attributes {stable_mosaic.version = 11 : i64} {
  func.func @autoencoder_kernel(%arg0: i32, %arg1: memref<8x1024xf32, #tpu.memory_space<vmem>>, %arg2: memref<1024x128xbf16, #tpu.memory_space<vmem>>, %arg3: memref<1x128xf32, #tpu.memory_space<vmem>>, %arg4: memref<128x128xbf16, #tpu.memory_space<vmem>>, %arg5: memref<1x128xf32, #tpu.memory_space<vmem>>, %arg6: memref<128x128xbf16, #tpu.memory_space<vmem>>, %arg7: memref<1x128xf32, #tpu.memory_space<vmem>>, %arg8: memref<128x1024xbf16, #tpu.memory_space<vmem>>, %arg9: memref<1x1024xf32, #tpu.memory_space<vmem>>, %arg10: memref<8x1024xf32, #tpu.memory_space<vmem>>) attributes {dimension_semantics = [#tpu.dimension_semantics<parallel>], iteration_bounds = array<i64: 1>, scalar_prefetch = 0 : i64, scratch_operands = 0 : i64, tpu.core_type = #tpu.core_type<tc>, window_params = [{transform_indices = @transform_0, window_bounds = array<i64: 8, 1024>}, {pipeline_mode = #tpu.pipeline_mode<synchronous>, transform_indices = @transform_1, window_bounds = array<i64: 1024, 128>}, {pipeline_mode = #tpu.pipeline_mode<synchronous>, transform_indices = @transform_2, window_bounds = array<i64: 1, 128>}, {pipeline_mode = #tpu.pipeline_mode<synchronous>, transform_indices = @transform_3, window_bounds = array<i64: 128, 128>}, {pipeline_mode = #tpu.pipeline_mode<synchronous>, transform_indices = @transform_4, window_bounds = array<i64: 1, 128>}, {pipeline_mode = #tpu.pipeline_mode<synchronous>, transform_indices = @transform_5, window_bounds = array<i64: 128, 128>}, {pipeline_mode = #tpu.pipeline_mode<synchronous>, transform_indices = @transform_6, window_bounds = array<i64: 1, 128>}, {pipeline_mode = #tpu.pipeline_mode<synchronous>, transform_indices = @transform_7, window_bounds = array<i64: 128, 1024>}, {pipeline_mode = #tpu.pipeline_mode<synchronous>, transform_indices = @transform_8, window_bounds = array<i64: 1, 1024>}, {transform_indices = @transform_9, window_bounds = array<i64: 8, 1024>}]} {
    %c0 = arith.constant 0 : index
    %c0_0 = arith.constant 0 : index
    %0 = vector.load %arg1[%c0, %c0_0] : memref<8x1024xf32, #tpu.memory_space<vmem>>, vector<8x1024xf32>
    %1 = arith.truncf %0 : vector<8x1024xf32> to vector<8x1024xbf16>
    %c0_1 = arith.constant 0 : index
    %c0_2 = arith.constant 0 : index
    %2 = vector.load %arg2[%c0_1, %c0_2] : memref<1024x128xbf16, #tpu.memory_space<vmem>>, vector<1024x128xbf16>
    %cst = arith.constant dense<0.000000e+00> : vector<8x128xf32>
    %3 = tpu.matmul %1, %2, %cst {dimension_numbers = #tpu.dot_dimension_numbers<[1], [0], [0], [1], [0, 0, 1, 1], [], []>} : vector<8x1024xbf16>, vector<1024x128xbf16>, vector<8x128xf32> -> vector<8x128xf32>
    %c0_3 = arith.constant 0 : index
    %c0_4 = arith.constant 0 : index
    %4 = vector.load %arg3[%c0_3, %c0_4] : memref<1x128xf32, #tpu.memory_space<vmem>>, vector<1x128xf32>
    %5 = vector.broadcast %4 : vector<1x128xf32> to vector<8x128xf32>
    %6 = arith.addf %3, %5 : vector<8x128xf32>
    %cst_5 = arith.constant 0.000000e+00 : f32
    %7 = vector.broadcast %cst_5 : f32 to vector<8x128xf32>
    %8 = arith.maximumf %6, %7 : vector<8x128xf32>
    %9 = arith.truncf %8 : vector<8x128xf32> to vector<8x128xbf16>
    %c0_6 = arith.constant 0 : index
    %c0_7 = arith.constant 0 : index
    %10 = vector.load %arg4[%c0_6, %c0_7] : memref<128x128xbf16, #tpu.memory_space<vmem>>, vector<128x128xbf16>
    %cst_8 = arith.constant dense<0.000000e+00> : vector<8x128xf32>
    %11 = tpu.matmul %9, %10, %cst_8 {dimension_numbers = #tpu.dot_dimension_numbers<[1], [0], [0], [1], [0, 0, 1, 1], [], []>} : vector<8x128xbf16>, vector<128x128xbf16>, vector<8x128xf32> -> vector<8x128xf32>
    %c0_9 = arith.constant 0 : index
    %c0_10 = arith.constant 0 : index
    %12 = vector.load %arg5[%c0_9, %c0_10] : memref<1x128xf32, #tpu.memory_space<vmem>>, vector<1x128xf32>
    %13 = vector.broadcast %12 : vector<1x128xf32> to vector<8x128xf32>
    %14 = arith.addf %11, %13 : vector<8x128xf32>
    %15 = arith.truncf %14 : vector<8x128xf32> to vector<8x128xbf16>
    %c0_11 = arith.constant 0 : index
    %c0_12 = arith.constant 0 : index
    %16 = vector.load %arg6[%c0_11, %c0_12] : memref<128x128xbf16, #tpu.memory_space<vmem>>, vector<128x128xbf16>
    %cst_13 = arith.constant dense<0.000000e+00> : vector<8x128xf32>
    %17 = tpu.matmul %15, %16, %cst_13 {dimension_numbers = #tpu.dot_dimension_numbers<[1], [0], [0], [1], [0, 0, 1, 1], [], []>} : vector<8x128xbf16>, vector<128x128xbf16>, vector<8x128xf32> -> vector<8x128xf32>
    %c0_14 = arith.constant 0 : index
    %c0_15 = arith.constant 0 : index
    %18 = vector.load %arg7[%c0_14, %c0_15] : memref<1x128xf32, #tpu.memory_space<vmem>>, vector<1x128xf32>
    %19 = vector.broadcast %18 : vector<1x128xf32> to vector<8x128xf32>
    %20 = arith.addf %17, %19 : vector<8x128xf32>
    %cst_16 = arith.constant 0.000000e+00 : f32
    %21 = vector.broadcast %cst_16 : f32 to vector<8x128xf32>
    %22 = arith.maximumf %20, %21 : vector<8x128xf32>
    %23 = arith.truncf %22 : vector<8x128xf32> to vector<8x128xbf16>
    %c0_17 = arith.constant 0 : index
    %c0_18 = arith.constant 0 : index
    %24 = vector.load %arg8[%c0_17, %c0_18] : memref<128x1024xbf16, #tpu.memory_space<vmem>>, vector<128x1024xbf16>
    %cst_19 = arith.constant dense<0.000000e+00> : vector<8x1024xf32>
    %25 = tpu.matmul %23, %24, %cst_19 {dimension_numbers = #tpu.dot_dimension_numbers<[1], [0], [0], [1], [0, 0, 1, 1], [], []>} : vector<8x128xbf16>, vector<128x1024xbf16>, vector<8x1024xf32> -> vector<8x1024xf32>
    %c0_20 = arith.constant 0 : index
    %c0_21 = arith.constant 0 : index
    %26 = vector.load %arg9[%c0_20, %c0_21] : memref<1x1024xf32, #tpu.memory_space<vmem>>, vector<1x1024xf32>
    %27 = vector.broadcast %26 : vector<1x1024xf32> to vector<8x1024xf32>
    %28 = arith.addf %25, %27 : vector<8x1024xf32>
    %c0_22 = arith.constant 0 : index
    %c0_23 = arith.constant 0 : index
    %29 = vector.load %arg10[%c0_22, %c0_23] : memref<8x1024xf32, #tpu.memory_space<vmem>>, vector<8x1024xf32>
    tpu.vector_store %arg10[%c0_22, %c0_23], %28 {strides = array<i32>} : memref<8x1024xf32, #tpu.memory_space<vmem>>, vector<8x1024xf32>,
    return
  }
  func.func @transform_0(%arg0: i32) -> (i32, i32) {
    %c0_i32 = arith.constant 0 : i32
    %c0_i32_0 = arith.constant 0 : i32
    return %arg0, %c0_i32 : i32, i32
  }
  func.func @transform_1(%arg0: i32) -> (i32, i32) {
    %c0_i32 = arith.constant 0 : i32
    %c0_i32_0 = arith.constant 0 : i32
    %c0_i32_1 = arith.constant 0 : i32
    return %c0_i32, %c0_i32_0 : i32, i32
  }
  func.func @transform_2(%arg0: i32) -> (i32, i32) {
    %c0_i32 = arith.constant 0 : i32
    %c0_i32_0 = arith.constant 0 : i32
    %c0_i32_1 = arith.constant 0 : i32
    return %c0_i32, %c0_i32_0 : i32, i32
  }
  func.func @transform_3(%arg0: i32) -> (i32, i32) {
    %c0_i32 = arith.constant 0 : i32
    %c0_i32_0 = arith.constant 0 : i32
    %c0_i32_1 = arith.constant 0 : i32
    return %c0_i32, %c0_i32_0 : i32, i32
  }
  func.func @transform_4(%arg0: i32) -> (i32, i32) {
    %c0_i32 = arith.constant 0 : i32
    %c0_i32_0 = arith.constant 0 : i32
    %c0_i32_1 = arith.constant 0 : i32
    return %c0_i32, %c0_i32_0 : i32, i32
  }
  func.func @transform_5(%arg0: i32) -> (i32, i32) {
    %c0_i32 = arith.constant 0 : i32
    %c0_i32_0 = arith.constant 0 : i32
    %c0_i32_1 = arith.constant 0 : i32
    return %c0_i32, %c0_i32_0 : i32, i32
  }
  func.func @transform_6(%arg0: i32) -> (i32, i32) {
    %c0_i32 = arith.constant 0 : i32
    %c0_i32_0 = arith.constant 0 : i32
    %c0_i32_1 = arith.constant 0 : i32
    return %c0_i32, %c0_i32_0 : i32, i32
  }
  func.func @transform_7(%arg0: i32) -> (i32, i32) {
    %c0_i32 = arith.constant 0 : i32
    %c0_i32_0 = arith.constant 0 : i32
    %c0_i32_1 = arith.constant 0 : i32
    return %c0_i32, %c0_i32_0 : i32, i32
  }
  func.func @transform_8(%arg0: i32) -> (i32, i32) {
    %c0_i32 = arith.constant 0 : i32
    %c0_i32_0 = arith.constant 0 : i32
    %c0_i32_1 = arith.constant 0 : i32
    return %c0_i32, %c0_i32_0 : i32, i32
  }
  func.func @transform_9(%arg0: i32) -> (i32, i32) {
    %c0_i32 = arith.constant 0 : i32
    %c0_i32_0 = arith.constant 0 : i32
    return %arg0, %c0_i32 : i32, i32
  }
}

</mosaic_0001>

<llo_original>
// kernel: tpu_custom_call.1
$region0: #{tpu_custom_call.1}
  #allocation0 [shape = 'u32[]', space=smem, size = 0x4, offset = 0x4, fixed_abs, tag = 'smem constant byte address 0x4 - core index']
  #allocation1 [shape = 'u32[144,128]{1,0:T(1,128)}', space=vmem, size = 0x12000, scoped, tag = 'internal scratch']
  %s0 = inlined_call_operand.hbm [shape: f32[8,1024], index: 0, kind: input, shape index: {}]
  %s1 = inlined_call_operand.hbm [shape: bf16[1024,128], index: 1, kind: input, shape index: {}]
  %s2 = inlined_call_operand.vmem [shape: f32[1,128], index: 2, kind: input, shape index: {}]
  %s3 = inlined_call_operand.hbm [shape: bf16[128,128], index: 3, kind: input, shape index: {}]
  %s4 = inlined_call_operand.vmem [shape: f32[1,128], index: 4, kind: input, shape index: {}]
  %s5 = inlined_call_operand.hbm [shape: bf16[128,128], index: 5, kind: input, shape index: {}]
  %s6 = inlined_call_operand.vmem [shape: f32[1,128], index: 6, kind: input, shape index: {}]
  %s7 = inlined_call_operand.hbm [shape: bf16[128,1024], index: 7, kind: input, shape index: {}]
  %s8 = inlined_call_operand.vmem [shape: f32[1,1024], index: 8, kind: input, shape index: {}]
  %s9 = inlined_call_operand.hbm [shape: f32[8,1024], index: 9, kind: output, shape index: {}]
  %s10 = sld [smem:[#allocation0]]
  $region66: #{tpu_custom_call.1} parent=0
    _
  %s12 = ssub.s32 1, %s10
  %s13 = scalar_select 0, %s12, %s10
  $region1: #{tpu_custom_call.1} parent=0
    #allocation2 [shape = 'u8[32768]{0}', space=vmem, size = 0x8000, scoped, tag = 'input window, operand 0, single buffered']
    #allocation3 [shape = 's32[1]{0}', space=sflag, size = 0x4, scoped, tag = 'scoped memory for tpu_custom_call.1']
    #allocation4 [shape = 's32[1]{0}', space=sflag, size = 0x4, scoped, tag = 'scoped memory for tpu_custom_call.1']
    #allocation5 [shape = 'u8[262144]{0}', space=vmem, size = 0x40000, scoped, tag = 'input window, operand 1, single buffered']
    #allocation6 [shape = 's32[1]{0}', space=sflag, size = 0x4, scoped, tag = 'scoped memory for tpu_custom_call.1']
    #allocation7 [shape = 'u8[32768]{0}', space=vmem, size = 0x8000, scoped, tag = 'input window, operand 3, single buffered']
    #allocation8 [shape = 'u8[32768]{0}', space=vmem, size = 0x8000, scoped, tag = 'input window, operand 5, single buffered']
    #allocation9 [shape = 's32[1]{0}', space=sflag, size = 0x4, scoped, tag = 'scoped memory for tpu_custom_call.1']
    #allocation10 [shape = 'u8[262144]{0}', space=vmem, size = 0x40000, scoped, tag = 'input window, operand 7, single buffered']
    #allocation11 [shape = 'u8[32768]{0}', space=vmem, size = 0x8000, scoped, tag = 'output window, operand 0, single buffered']
    %14 = vsyncpa [#allocation3], 0
    %15 = vsyncpa [#allocation6], 0
    %16 = vsyncpa [#allocation9], 0
    %17 = vsyncpa [#allocation4], 0
    // Predicated region
    $region2: #{tpu_custom_call.1} parent=1 // pred_check
      _
    $region3: #{tpu_custom_call.1} parent=1 // pred_check_branch
      %19 = sbr.rel (0) target = $region5
    $region4: #{tpu_custom_call.1} parent=1 // pred_region
      %s21 = ssub.s32 1024, 1024
      %22 = vsyncadd [#allocation3], %s21
      %s24 = sshll.u32 [#allocation2], 4
      %s25 = int_to_ptr.vmem [resolvable:$true] %s24
      %27 = dma.hbm_to_vmem [thread:$0]  %s0, 1024, %s25, [#allocation3]
    $region5: #{tpu_custom_call.1} parent=1 // pred_fallthru
      _
    // Predicated region
    $region6: #{tpu_custom_call.1} parent=1 // pred_check
      _
    $region7: #{tpu_custom_call.1} parent=1 // pred_check_branch
      %29 = sbr.rel (0) target = $region9
    $region8: #{tpu_custom_call.1} parent=1 // pred_region
      %s31 = ssub.s32 8192, 8192
      %32 = vsyncadd [#allocation6], %s31
      %s33 = sshll.u32 [#allocation5], 4
      %s34 = int_to_ptr.vmem [resolvable:$true] %s33
      %39 = dma.hbm_to_vmem [thread:$0]  %s1, 8192, %s34, [#allocation6], 64, 64, 4
    $region9: #{tpu_custom_call.1} parent=1 // pred_fallthru
      _
    // Predicated region
    $region10: #{tpu_custom_call.1} parent=1 // pred_check
      _
    $region11: #{tpu_custom_call.1} parent=1 // pred_check_branch
      %41 = sbr.rel (0) target = $region13
    $region12: #{tpu_custom_call.1} parent=1 // pred_region
      _
    $region13: #{tpu_custom_call.1} parent=1 // pred_fallthru
      _
    // Predicated region
    $region14: #{tpu_custom_call.1} parent=1 // pred_check
      _
    $region15: #{tpu_custom_call.1} parent=1 // pred_check_branch
      %43 = sbr.rel (0) target = $region17
    $region16: #{tpu_custom_call.1} parent=1 // pred_region
      %s45 = ssub.s32 1024, 1024
      %46 = vsyncadd [#allocation6], %s45
      %s47 = sshll.u32 [#allocation7], 4
      %s48 = int_to_ptr.vmem [resolvable:$true] %s47
      %53 = dma.hbm_to_vmem [thread:$0]  %s3, 1024, %s48, [#allocation6], 64, 64, 4
    $region17: #{tpu_custom_call.1} parent=1 // pred_fallthru
      _
    // Predicated region
    $region18: #{tpu_custom_call.1} parent=1 // pred_check
      _
    $region19: #{tpu_custom_call.1} parent=1 // pred_check_branch
      %55 = sbr.rel (0) target = $region21
    $region20: #{tpu_custom_call.1} parent=1 // pred_region
      _
    $region21: #{tpu_custom_call.1} parent=1 // pred_fallthru
      _
    // Predicated region
    $region22: #{tpu_custom_call.1} parent=1 // pred_check
      _
    $region23: #{tpu_custom_call.1} parent=1 // pred_check_branch
      %57 = sbr.rel (0) target = $region25
    $region24: #{tpu_custom_call.1} parent=1 // pred_region
      %s59 = ssub.s32 1024, 1024
      %60 = vsyncadd [#allocation9], %s59
      %s61 = sshll.u32 [#allocation8], 4
      %s62 = int_to_ptr.vmem [resolvable:$true] %s61
      %67 = dma.hbm_to_vmem [thread:$0]  %s5, 1024, %s62, [#allocation9], 64, 64, 4
    $region25: #{tpu_custom_call.1} parent=1 // pred_fallthru
      _
    // Predicated region
    $region26: #{tpu_custom_call.1} parent=1 // pred_check
      _
    $region27: #{tpu_custom_call.1} parent=1 // pred_check_branch
      %69 = sbr.rel (0) target = $region29
    $region28: #{tpu_custom_call.1} parent=1 // pred_region
      _
    $region29: #{tpu_custom_call.1} parent=1 // pred_fallthru
      _
    // Predicated region
    $region30: #{tpu_custom_call.1} parent=1 // pred_check
      _
    $region31: #{tpu_custom_call.1} parent=1 // pred_check_branch
      %71 = sbr.rel (0) target = $region33
    $region32: #{tpu_custom_call.1} parent=1 // pred_region
      %s73 = ssub.s32 8192, 8192
      %74 = vsyncadd [#allocation9], %s73
      %s75 = sshll.u32 [#allocation10], 4
      %s76 = int_to_ptr.vmem [resolvable:$true] %s75
      %81 = dma.hbm_to_vmem [thread:$0]  %s7, 8192, %s76, [#allocation9], 512, 512, 32
    $region33: #{tpu_custom_call.1} parent=1 // pred_fallthru
      _
    // Predicated region
    $region34: #{tpu_custom_call.1} parent=1 // pred_check
      _
    $region35: #{tpu_custom_call.1} parent=1 // pred_check_branch
      %83 = sbr.rel (0) target = $region37
    $region36: #{tpu_custom_call.1} parent=1 // pred_region
      _
    $region37: #{tpu_custom_call.1} parent=1 // pred_fallthru
      _
    // Predicated region
    $region38: #{tpu_custom_call.1} parent=1 // pred_check
      _
    $region39: #{tpu_custom_call.1} parent=1 // pred_check_branch
      %85 = sbr.rel (0) target = $region41
    $region40: #{tpu_custom_call.1} parent=1 // pred_region
      %86 = dma.done [#allocation3], 1024
    $region41: #{tpu_custom_call.1} parent=1 // pred_fallthru
      _
    // Predicated region
    $region42: #{tpu_custom_call.1} parent=1 // pred_check
      _
    $region43: #{tpu_custom_call.1} parent=1 // pred_check_branch
      %88 = sbr.rel (0) target = $region45
    $region44: #{tpu_custom_call.1} parent=1 // pred_region
      %89 = dma.done [#allocation6], 8192
    $region45: #{tpu_custom_call.1} parent=1 // pred_fallthru
      _
    // Predicated region
    $region46: #{tpu_custom_call.1} parent=1 // pred_check
      _
    $region47: #{tpu_custom_call.1} parent=1 // pred_check_branch
      %91 = sbr.rel (0) target = $region49
    $region48: #{tpu_custom_call.1} parent=1 // pred_region
      %92 = dma.done [#allocation6], 1024
    $region49: #{tpu_custom_call.1} parent=1 // pred_fallthru
      _
    // Predicated region
    $region50: #{tpu_custom_call.1} parent=1 // pred_check
      _
    $region51: #{tpu_custom_call.1} parent=1 // pred_check_branch
      %94 = sbr.rel (0) target = $region53
    $region52: #{tpu_custom_call.1} parent=1 // pred_region
      %95 = dma.done [#allocation9], 1024
    $region53: #{tpu_custom_call.1} parent=1 // pred_fallthru
      _
    // Predicated region
    $region54: #{tpu_custom_call.1} parent=1 // pred_check
      _
    $region55: #{tpu_custom_call.1} parent=1 // pred_check_branch
      %97 = sbr.rel (0) target = $region57
    $region56: #{tpu_custom_call.1} parent=1 // pred_region
      %98 = dma.done [#allocation9], 8192
    $region57: #{tpu_custom_call.1} parent=1 // pred_fallthru
      _
    %v100 = vld [vmem:[#allocation2] sm:$0xff]
    %v101 = vld [vmem:[#allocation2 + $0x8] sm:$0xff]
    %v102 = vld [vmem:[#allocation2 + $0x10] sm:$0xff]
    %v103 = vld [vmem:[#allocation2 + $0x18] sm:$0xff]
    %v104 = vld [vmem:[#allocation2 + $0x20] sm:$0xff]
    %v105 = vld [vmem:[#allocation2 + $0x28] sm:$0xff]
    %v106 = vld [vmem:[#allocation2 + $0x30] sm:$0xff]
    %v107 = vld [vmem:[#allocation2 + $0x38] sm:$0xff]
    %v108 = vpack.c.bf16 %v100, %v100
    %v109 = vpack.c.bf16 %v101, %v101
    %v110 = vpack.c.bf16 %v102, %v102
    %v111 = vpack.c.bf16 %v103, %v103
    %v112 = vpack.c.bf16 %v104, %v104
    %v113 = vpack.c.bf16 %v105, %v105
    %v114 = vpack.c.bf16 %v106, %v106
    %v115 = vpack.c.bf16 %v107, %v107
    %v116 = vld [vmem:[#allocation5] sm:$0xf]
    %v117 = vld [vmem:[#allocation5 + $0x4] sm:$0xf]
    %v118 = vld [vmem:[#allocation5 + $0x8] sm:$0xf]
    %v119 = vld [vmem:[#allocation5 + $0xc] sm:$0xf]
    %v120 = vld [vmem:[#allocation5 + $0x10] sm:$0xf]
    %v121 = vld [vmem:[#allocation5 + $0x14] sm:$0xf]
    %v122 = vld [vmem:[#allocation5 + $0x18] sm:$0xf]
    %v123 = vld [vmem:[#allocation5 + $0x1c] sm:$0xf]
    %v124 = vld [vmem:[#allocation5 + $0x20] sm:$0xf]
    %v125 = vld [vmem:[#allocation5 + $0x24] sm:$0xf]
    %v126 = vld [vmem:[#allocation5 + $0x28] sm:$0xf]
    %v127 = vld [vmem:[#allocation5 + $0x2c] sm:$0xf]
    %v128 = vld [vmem:[#allocation5 + $0x30] sm:$0xf]
    %v129 = vld [vmem:[#allocation5 + $0x34] sm:$0xf]
    %v130 = vld [vmem:[#allocation5 + $0x38] sm:$0xf]
    %v131 = vld [vmem:[#allocation5 + $0x3c] sm:$0xf]
    %v132 = vld [vmem:[#allocation5 + $0x40] sm:$0xf]
    %v133 = vld [vmem:[#allocation5 + $0x44] sm:$0xf]
    %v134 = vld [vmem:[#allocation5 + $0x48] sm:$0xf]
    %v135 = vld [vmem:[#allocation5 + $0x4c] sm:$0xf]
    %v136 = vld [vmem:[#allocation5 + $0x50] sm:$0xf]
    %v137 = vld [vmem:[#allocation5 + $0x54] sm:$0xf]
    %v138 = vld [vmem:[#allocation5 + $0x58] sm:$0xf]
    %v139 = vld [vmem:[#allocation5 + $0x5c] sm:$0xf]
    %v140 = vld [vmem:[#allocation5 + $0x60] sm:$0xf]
    %v141 = vld [vmem:[#allocation5 + $0x64] sm:$0xf]
    %v142 = vld [vmem:[#allocation5 + $0x68] sm:$0xf]
    %v143 = vld [vmem:[#allocation5 + $0x6c] sm:$0xf]
    %v144 = vld [vmem:[#allocation5 + $0x70] sm:$0xf]
    %v145 = vld [vmem:[#allocation5 + $0x74] sm:$0xf]
    %v146 = vld [vmem:[#allocation5 + $0x78] sm:$0xf]
    %v147 = vld [vmem:[#allocation5 + $0x7c] sm:$0xf]
    %v148 = vld [vmem:[#allocation5 + $0x80] sm:$0xf]
    %v149 = vld [vmem:[#allocation5 + $0x84] sm:$0xf]
    %v150 = vld [vmem:[#allocation5 + $0x88] sm:$0xf]
    %v151 = vld [vmem:[#allocation5 + $0x8c] sm:$0xf]
    %v152 = vld [vmem:[#allocation5 + $0x90] sm:$0xf]
    %v153 = vld [vmem:[#allocation5 + $0x94] sm:$0xf]
    %v154 = vld [vmem:[#allocation5 + $0x98] sm:$0xf]
    %v155 = vld [vmem:[#allocation5 + $0x9c] sm:$0xf]
    %v156 = vld [vmem:[#allocation5 + $0xa0] sm:$0xf]
    %v157 = vld [vmem:[#allocation5 + $0xa4] sm:$0xf]
    %v158 = vld [vmem:[#allocation5 + $0xa8] sm:$0xf]
    %v159 = vld [vmem:[#allocation5 + $0xac] sm:$0xf]
    %v160 = vld [vmem:[#allocation5 + $0xb0] sm:$0xf]
    %v161 = vld [vmem:[#allocation5 + $0xb4] sm:$0xf]
    %v162 = vld [vmem:[#allocation5 + $0xb8] sm:$0xf]
    %v163 = vld [vmem:[#allocation5 + $0xbc] sm:$0xf]
    %v164 = vld [vmem:[#allocation5 + $0xc0] sm:$0xf]
    %v165 = vld [vmem:[#allocation5 + $0xc4] sm:$0xf]
    %v166 = vld [vmem:[#allocation5 + $0xc8] sm:$0xf]
    %v167 = vld [vmem:[#allocation5 + $0xcc] sm:$0xf]
    %v168 = vld [vmem:[#allocation5 + $0xd0] sm:$0xf]
    %v169 = vld [vmem:[#allocation5 + $0xd4] sm:$0xf]
    %v170 = vld [vmem:[#allocation5 + $0xd8] sm:$0xf]
    %v171 = vld [vmem:[#allocation5 + $0xdc] sm:$0xf]
    %v172 = vld [vmem:[#allocation5 + $0xe0] sm:$0xf]
    %v173 = vld [vmem:[#allocation5 + $0xe4] sm:$0xf]
    %v174 = vld [vmem:[#allocation5 + $0xe8] sm:$0xf]
    %v175 = vld [vmem:[#allocation5 + $0xec] sm:$0xf]
    %v176 = vld [vmem:[#allocation5 + $0xf0] sm:$0xf]
    %v177 = vld [vmem:[#allocation5 + $0xf4] sm:$0xf]
    %v178 = vld [vmem:[#allocation5 + $0xf8] sm:$0xf]
    %v179 = vld [vmem:[#allocation5 + $0xfc] sm:$0xf]
    %v180 = vld [vmem:[#allocation5 + $0x100] sm:$0xf]
    %v181 = vld [vmem:[#allocation5 + $0x104] sm:$0xf]
    %v182 = vld [vmem:[#allocation5 + $0x108] sm:$0xf]
    %v183 = vld [vmem:[#allocation5 + $0x10c] sm:$0xf]
    %v184 = vld [vmem:[#allocation5 + $0x110] sm:$0xf]
    %v185 = vld [vmem:[#allocation5 + $0x114] sm:$0xf]
    %v186 = vld [vmem:[#allocation5 + $0x118] sm:$0xf]
    %v187 = vld [vmem:[#allocation5 + $0x11c] sm:$0xf]
    %v188 = vld [vmem:[#allocation5 + $0x120] sm:$0xf]
    %v189 = vld [vmem:[#allocation5 + $0x124] sm:$0xf]
    %v190 = vld [vmem:[#allocation5 + $0x128] sm:$0xf]
    %v191 = vld [vmem:[#allocation5 + $0x12c] sm:$0xf]
    %v192 = vld [vmem:[#allocation5 + $0x130] sm:$0xf]
    %v193 = vld [vmem:[#allocation5 + $0x134] sm:$0xf]
    %v194 = vld [vmem:[#allocation5 + $0x138] sm:$0xf]
    %v195 = vld [vmem:[#allocation5 + $0x13c] sm:$0xf]
    %v196 = vld [vmem:[#allocation5 + $0x140] sm:$0xf]
    %v197 = vld [vmem:[#allocation5 + $0x144] sm:$0xf]
    %v198 = vld [vmem:[#allocation5 + $0x148] sm:$0xf]
    %v199 = vld [vmem:[#allocation5 + $0x14c] sm:$0xf]
    %v200 = vld [vmem:[#allocation5 + $0x150] sm:$0xf]
    %v201 = vld [vmem:[#allocation5 + $0x154] sm:$0xf]
    %v202 = vld [vmem:[#allocation5 + $0x158] sm:$0xf]
    %v203 = vld [vmem:[#allocation5 + $0x15c] sm:$0xf]
    %v204 = vld [vmem:[#allocation5 + $0x160] sm:$0xf]
    %v205 = vld [vmem:[#allocation5 + $0x164] sm:$0xf]
    %v206 = vld [vmem:[#allocation5 + $0x168] sm:$0xf]
    %v207 = vld [vmem:[#allocation5 + $0x16c] sm:$0xf]
    %v208 = vld [vmem:[#allocation5 + $0x170] sm:$0xf]
    %v209 = vld [vmem:[#allocation5 + $0x174] sm:$0xf]
    %v210 = vld [vmem:[#allocation5 + $0x178] sm:$0xf]
    %v211 = vld [vmem:[#allocation5 + $0x17c] sm:$0xf]
    %v212 = vld [vmem:[#allocation5 + $0x180] sm:$0xf]
    %v213 = vld [vmem:[#allocation5 + $0x184] sm:$0xf]
    %v214 = vld [vmem:[#allocation5 + $0x188] sm:$0xf]
    %v215 = vld [vmem:[#allocation5 + $0x18c] sm:$0xf]
    %v216 = vld [vmem:[#allocation5 + $0x190] sm:$0xf]
    %v217 = vld [vmem:[#allocation5 + $0x194] sm:$0xf]
    %v218 = vld [vmem:[#allocation5 + $0x198] sm:$0xf]
    %v219 = vld [vmem:[#allocation5 + $0x19c] sm:$0xf]
    %v220 = vld [vmem:[#allocation5 + $0x1a0] sm:$0xf]
    %v221 = vld [vmem:[#allocation5 + $0x1a4] sm:$0xf]
    %v222 = vld [vmem:[#allocation5 + $0x1a8] sm:$0xf]
    %v223 = vld [vmem:[#allocation5 + $0x1ac] sm:$0xf]
    %v224 = vld [vmem:[#allocation5 + $0x1b0] sm:$0xf]
    %v225 = vld [vmem:[#allocation5 + $0x1b4] sm:$0xf]
    %v226 = vld [vmem:[#allocation5 + $0x1b8] sm:$0xf]
    %v227 = vld [vmem:[#allocation5 + $0x1bc] sm:$0xf]
    %v228 = vld [vmem:[#allocation5 + $0x1c0] sm:$0xf]
    %v229 = vld [vmem:[#allocation5 + $0x1c4] sm:$0xf]
    %v230 = vld [vmem:[#allocation5 + $0x1c8] sm:$0xf]
    %v231 = vld [vmem:[#allocation5 + $0x1cc] sm:$0xf]
    %v232 = vld [vmem:[#allocation5 + $0x1d0] sm:$0xf]
    %v233 = vld [vmem:[#allocation5 + $0x1d4] sm:$0xf]
    %v234 = vld [vmem:[#allocation5 + $0x1d8] sm:$0xf]
    %v235 = vld [vmem:[#allocation5 + $0x1dc] sm:$0xf]
    %v236 = vld [vmem:[#allocation5 + $0x1e0] sm:$0xf]
    %v237 = vld [vmem:[#allocation5 + $0x1e4] sm:$0xf]
    %v238 = vld [vmem:[#allocation5 + $0x1e8] sm:$0xf]
    %v239 = vld [vmem:[#allocation5 + $0x1ec] sm:$0xf]
    %v240 = vld [vmem:[#allocation5 + $0x1f0] sm:$0xf]
    %v241 = vld [vmem:[#allocation5 + $0x1f4] sm:$0xf]
    %v242 = vld [vmem:[#allocation5 + $0x1f8] sm:$0xf]
    %v243 = vld [vmem:[#allocation5 + $0x1fc] sm:$0xf]
    %v244 = vld [vmem:[%s2] sm:$0x1]
    %v246 = vlaneseq
    %v247 = vshrl.u32 %v246, 7
    %v248 = vsub.s32 0, %v247
    %v249 = vrot.slane %v244, %v248
    %v379 = vunpack.c.l.b16 %v116
    %v380 = vunpack.c.l.b16 %v117
    %v381 = vunpack.c.l.b16 %v118
    %v382 = vunpack.c.l.b16 %v119
    %v383 = vunpack.c.l.b16 %v120
    %v384 = vunpack.c.l.b16 %v121
    %v385 = vunpack.c.l.b16 %v122
    %v386 = vunpack.c.l.b16 %v123
    %v387 = vunpack.c.l.b16 %v124
    %v388 = vunpack.c.l.b16 %v125
    %v389 = vunpack.c.l.b16 %v126
    %v390 = vunpack.c.l.b16 %v127
    %v391 = vunpack.c.l.b16 %v128
    %v392 = vunpack.c.l.b16 %v129
    %v393 = vunpack.c.l.b16 %v130
    %v394 = vunpack.c.l.b16 %v131
    %v395 = vunpack.c.l.b16 %v132
    %v396 = vunpack.c.l.b16 %v133
    %v397 = vunpack.c.l.b16 %v134
    %v398 = vunpack.c.l.b16 %v135
    %v399 = vunpack.c.l.b16 %v136
    %v400 = vunpack.c.l.b16 %v137
    %v401 = vunpack.c.l.b16 %v138
    %v402 = vunpack.c.l.b16 %v139
    %v403 = vunpack.c.l.b16 %v140
    %v404 = vunpack.c.l.b16 %v141
    %v405 = vunpack.c.l.b16 %v142
    %v406 = vunpack.c.l.b16 %v143
    %v407 = vunpack.c.l.b16 %v144
    %v408 = vunpack.c.l.b16 %v145
    %v409 = vunpack.c.l.b16 %v146
    %v410 = vunpack.c.l.b16 %v147
    %v411 = vunpack.c.l.b16 %v148
    %v412 = vunpack.c.l.b16 %v149
    %v413 = vunpack.c.l.b16 %v150
    %v414 = vunpack.c.l.b16 %v151
    %v415 = vunpack.c.l.b16 %v152
    %v416 = vunpack.c.l.b16 %v153
    %v417 = vunpack.c.l.b16 %v154
    %v418 = vunpack.c.l.b16 %v155
    %v419 = vunpack.c.l.b16 %v156
    %v420 = vunpack.c.l.b16 %v157
    %v421 = vunpack.c.l.b16 %v158
    %v422 = vunpack.c.l.b16 %v159
    %v423 = vunpack.c.l.b16 %v160
    %v424 = vunpack.c.l.b16 %v161
    %v425 = vunpack.c.l.b16 %v162
    %v426 = vunpack.c.l.b16 %v163
    %v427 = vunpack.c.l.b16 %v164
    %v428 = vunpack.c.l.b16 %v165
    %v429 = vunpack.c.l.b16 %v166
    %v430 = vunpack.c.l.b16 %v167
    %v431 = vunpack.c.l.b16 %v168
    %v432 = vunpack.c.l.b16 %v169
    %v433 = vunpack.c.l.b16 %v170
    %v434 = vunpack.c.l.b16 %v171
    %v435 = vunpack.c.l.b16 %v172
    %v436 = vunpack.c.l.b16 %v173
    %v437 = vunpack.c.l.b16 %v174
    %v438 = vunpack.c.l.b16 %v175
    %v439 = vunpack.c.l.b16 %v176
    %v440 = vunpack.c.l.b16 %v177
    %v441 = vunpack.c.l.b16 %v178
    %v442 = vunpack.c.l.b16 %v179
    %v443 = vunpack.c.l.b16 %v180
    %v444 = vunpack.c.l.b16 %v181
    %v445 = vunpack.c.l.b16 %v182
    %v446 = vunpack.c.l.b16 %v183
    %v447 = vunpack.c.l.b16 %v184
    %v448 = vunpack.c.l.b16 %v185
    %v449 = vunpack.c.l.b16 %v186
    %v450 = vunpack.c.l.b16 %v187
    %v451 = vunpack.c.l.b16 %v188
    %v452 = vunpack.c.l.b16 %v189
    %v453 = vunpack.c.l.b16 %v190
    %v454 = vunpack.c.l.b16 %v191
    %v455 = vunpack.c.l.b16 %v192
    %v456 = vunpack.c.l.b16 %v193
    %v457 = vunpack.c.l.b16 %v194
    %v458 = vunpack.c.l.b16 %v195
    %v459 = vunpack.c.l.b16 %v196
    %v460 = vunpack.c.l.b16 %v197
    %v461 = vunpack.c.l.b16 %v198
    %v462 = vunpack.c.l.b16 %v199
    %v463 = vunpack.c.l.b16 %v200
    %v464 = vunpack.c.l.b16 %v201
    %v465 = vunpack.c.l.b16 %v202
    %v466 = vunpack.c.l.b16 %v203
    %v467 = vunpack.c.l.b16 %v204
    %v468 = vunpack.c.l.b16 %v205
    %v469 = vunpack.c.l.b16 %v206
    %v470 = vunpack.c.l.b16 %v207
    %v471 = vunpack.c.l.b16 %v208
    %v472 = vunpack.c.l.b16 %v209
    %v473 = vunpack.c.l.b16 %v210
    %v474 = vunpack.c.l.b16 %v211
    %v475 = vunpack.c.l.b16 %v212
    %v476 = vunpack.c.l.b16 %v213
    %v477 = vunpack.c.l.b16 %v214
    %v478 = vunpack.c.l.b16 %v215
    %v479 = vunpack.c.l.b16 %v216
    %v480 = vunpack.c.l.b16 %v217
    %v481 = vunpack.c.l.b16 %v218
    %v482 = vunpack.c.l.b16 %v219
    %v483 = vunpack.c.l.b16 %v220
    %v484 = vunpack.c.l.b16 %v221
    %v485 = vunpack.c.l.b16 %v222
    %v486 = vunpack.c.l.b16 %v223
    %v487 = vunpack.c.l.b16 %v224
    %v488 = vunpack.c.l.b16 %v225
    %v489 = vunpack.c.l.b16 %v226
    %v490 = vunpack.c.l.b16 %v227
    %v491 = vunpack.c.l.b16 %v228
    %v492 = vunpack.c.l.b16 %v229
    %v493 = vunpack.c.l.b16 %v230
    %v494 = vunpack.c.l.b16 %v231
    %v495 = vunpack.c.l.b16 %v232
    %v496 = vunpack.c.l.b16 %v233
    %v497 = vunpack.c.l.b16 %v234
    %v498 = vunpack.c.l.b16 %v235
    %v499 = vunpack.c.l.b16 %v236
    %v500 = vunpack.c.l.b16 %v237
    %v501 = vunpack.c.l.b16 %v238
    %v502 = vunpack.c.l.b16 %v239
    %v503 = vunpack.c.l.b16 %v240
    %v504 = vunpack.c.l.b16 %v241
    %v505 = vunpack.c.l.b16 %v242
    %v506 = vunpack.c.l.b16 %v243
    %v507 = vpack.c.b16 %v380, %v379
    %v508 = vpack.c.b16 %v382, %v381
    %v509 = vpack.c.b16 %v384, %v383
    %v510 = vpack.c.b16 %v386, %v385
    %v511 = vpack.c.b16 %v388, %v387
    %v512 = vpack.c.b16 %v390, %v389
    %v513 = vpack.c.b16 %v392, %v391
    %v514 = vpack.c.b16 %v394, %v393
    %v515 = vpack.c.b16 %v396, %v395
    %v516 = vpack.c.b16 %v398, %v397
    %v517 = vpack.c.b16 %v400, %v399
    %v518 = vpack.c.b16 %v402, %v401
    %v519 = vpack.c.b16 %v404, %v403
    %v520 = vpack.c.b16 %v406, %v405
    %v521 = vpack.c.b16 %v408, %v407
    %v522 = vpack.c.b16 %v410, %v409
    %v523 = vpack.c.b16 %v412, %v411
    %v524 = vpack.c.b16 %v414, %v413
    %v525 = vpack.c.b16 %v416, %v415
    %v526 = vpack.c.b16 %v418, %v417
    %v527 = vpack.c.b16 %v420, %v419
    %v528 = vpack.c.b16 %v422, %v421
    %v529 = vpack.c.b16 %v424, %v423
    %v530 = vpack.c.b16 %v426, %v425
    %v531 = vpack.c.b16 %v428, %v427
    %v532 = vpack.c.b16 %v430, %v429
    %v533 = vpack.c.b16 %v432, %v431
    %v534 = vpack.c.b16 %v434, %v433
    %v535 = vpack.c.b16 %v436, %v435
    %v536 = vpack.c.b16 %v438, %v437
    %v537 = vpack.c.b16 %v440, %v439
    %v538 = vpack.c.b16 %v442, %v441
    %v539 = vpack.c.b16 %v444, %v443
    %v540 = vpack.c.b16 %v446, %v445
    %v541 = vpack.c.b16 %v448, %v447
    %v542 = vpack.c.b16 %v450, %v449
    %v543 = vpack.c.b16 %v452, %v451
    %v544 = vpack.c.b16 %v454, %v453
    %v545 = vpack.c.b16 %v456, %v455
    %v546 = vpack.c.b16 %v458, %v457
    %v547 = vpack.c.b16 %v460, %v459
    %v548 = vpack.c.b16 %v462, %v461
    %v549 = vpack.c.b16 %v464, %v463
    %v550 = vpack.c.b16 %v466, %v465
    %v551 = vpack.c.b16 %v468, %v467
    %v552 = vpack.c.b16 %v470, %v469
    %v553 = vpack.c.b16 %v472, %v471
    %v554 = vpack.c.b16 %v474, %v473
    %v555 = vpack.c.b16 %v476, %v475
    %v556 = vpack.c.b16 %v478, %v477
    %v557 = vpack.c.b16 %v480, %v479
    %v558 = vpack.c.b16 %v482, %v481
    %v559 = vpack.c.b16 %v484, %v483
    %v560 = vpack.c.b16 %v486, %v485
    %v561 = vpack.c.b16 %v488, %v487
    %v562 = vpack.c.b16 %v490, %v489
    %v563 = vpack.c.b16 %v492, %v491
    %v564 = vpack.c.b16 %v494, %v493
    %v565 = vpack.c.b16 %v496, %v495
    %v566 = vpack.c.b16 %v498, %v497
    %v567 = vpack.c.b16 %v500, %v499
    %v568 = vpack.c.b16 %v502, %v501
    %v569 = vpack.c.b16 %v504, %v503
    %v570 = vpack.c.b16 %v506, %v505
    %635 = vmatprep.subr.bf16.mxu0 0
    %636 = vmatpush1.bf16.msra.mxu0 %v507
    %637 = vmatprep.subr.bf16.mxu0 0
    %638 = vmatpush1.bf16.msra.mxu0 %v508
    %639 = vmatprep.subr.bf16.mxu0 0
    %640 = vmatpush1.bf16.msra.mxu0 %v509
    %641 = vmatprep.subr.bf16.mxu0 0
    %642 = vmatpush1.bf16.msra.mxu0 %v510
    %643 = vmatprep.subr.bf16.mxu0 0
    %644 = vmatpush1.bf16.msra.mxu0 %v511
    %645 = vmatprep.subr.bf16.mxu0 0
    %646 = vmatpush1.bf16.msra.mxu0 %v512
    %647 = vmatprep.subr.bf16.mxu0 0
    %648 = vmatpush1.bf16.msra.mxu0 %v513
    %649 = vmatprep.subr.bf16.mxu0 0
    %650 = vmatpush1.bf16.msra.mxu0 %v514
    %651 = vmatprep.subr.bf16.mxu0 0
    %652 = vmatpush1.bf16.msra.mxu0 %v515
    %653 = vmatprep.subr.bf16.mxu0 0
    %654 = vmatpush1.bf16.msra.mxu0 %v516
    %655 = vmatprep.subr.bf16.mxu0 0
    %656 = vmatpush1.bf16.msra.mxu0 %v517
    %657 = vmatprep.subr.bf16.mxu0 0
    %658 = vmatpush1.bf16.msra.mxu0 %v518
    %659 = vmatprep.subr.bf16.mxu0 0
    %660 = vmatpush1.bf16.msra.mxu0 %v519
    %661 = vmatprep.subr.bf16.mxu0 0
    %662 = vmatpush1.bf16.msra.mxu0 %v520
    %663 = vmatprep.subr.bf16.mxu0 0
    %664 = vmatpush1.bf16.msra.mxu0 %v521
    %665 = vmatprep.subr.bf16.mxu0 0
    %666 = vmatpush1.bf16.msra.mxu0 %v522
    %667 = vmatprep.mubr.bf16.mxu0 %v109
    %668 = vmatmul.mubr.bf16.gmra.mrb[0].mxu0 %v108
    %v669 = vpop.f32.mrb[0].mxu0
    %v670 = vadd.f32 %v249, %v669
    %v671 = vpop.f32.mrb[0].mxu0
    %v672 = vpop.f32.mrb[0].mxu0
    %v673 = vpop.f32.mrb[0].mxu0
    %674 = vdwg.mxu0
    %675 = vmatprep.subr.bf16.mxu0 0
    %676 = vmatpush1.bf16.msra.mxu0 %v523
    %677 = vmatprep.subr.bf16.mxu0 0
    %678 = vmatpush1.bf16.msra.mxu0 %v524
    %679 = vmatprep.subr.bf16.mxu0 0
    %680 = vmatpush1.bf16.msra.mxu0 %v525
    %681 = vmatprep.subr.bf16.mxu0 0
    %682 = vmatpush1.bf16.msra.mxu0 %v526
    %683 = vmatprep.subr.bf16.mxu0 0
    %684 = vmatpush1.bf16.msra.mxu0 %v527
    %685 = vmatprep.subr.bf16.mxu0 0
    %686 = vmatpush1.bf16.msra.mxu0 %v528
    %687 = vmatprep.subr.bf16.mxu0 0
    %688 = vmatpush1.bf16.msra.mxu0 %v529
    %689 = vmatprep.subr.bf16.mxu0 0
    %690 = vmatpush1.bf16.msra.mxu0 %v530
    %691 = vmatprep.subr.bf16.mxu0 0
    %692 = vmatpush1.bf16.msra.mxu0 %v531
    %693 = vmatprep.subr.bf16.mxu0 0
    %694 = vmatpush1.bf16.msra.mxu0 %v532
    %695 = vmatprep.subr.bf16.mxu0 0
    %696 = vmatpush1.bf16.msra.mxu0 %v533
    %697 = vmatprep.subr.bf16.mxu0 0
    %698 = vmatpush1.bf16.msra.mxu0 %v534
    %699 = vmatprep.subr.bf16.mxu0 0
    %700 = vmatpush1.bf16.msra.mxu0 %v535
    %701 = vmatprep.subr.bf16.mxu0 0
    %702 = vmatpush1.bf16.msra.mxu0 %v536
    %703 = vmatprep.subr.bf16.mxu0 0
    %704 = vmatpush1.bf16.msra.mxu0 %v537
    %705 = vmatprep.subr.bf16.mxu0 0
    %706 = vmatpush1.bf16.msra.mxu0 %v538
    %707 = vmatprep.mubr.bf16.mxu0 %v111
    %708 = vmatmul.mubr.bf16.gmra.mrb[0].mxu0 %v110
    %v709 = vpop.f32.mrb[0].mxu0
    %v710 = vadd.f32 %v670, %v709
    %v711 = vpop.f32.mrb[0].mxu0
    %v712 = vpop.f32.mrb[0].mxu0
    %v713 = vpop.f32.mrb[0].mxu0
    %714 = vdwg.mxu0
    %715 = vmatprep.subr.bf16.mxu0 0
    %716 = vmatpush1.bf16.msra.mxu0 %v539
    %717 = vmatprep.subr.bf16.mxu0 0
    %718 = vmatpush1.bf16.msra.mxu0 %v540
    %719 = vmatprep.subr.bf16.mxu0 0
    %720 = vmatpush1.bf16.msra.mxu0 %v541
    %721 = vmatprep.subr.bf16.mxu0 0
    %722 = vmatpush1.bf16.msra.mxu0 %v542
    %723 = vmatprep.subr.bf16.mxu0 0
    %724 = vmatpush1.bf16.msra.mxu0 %v543
    %725 = vmatprep.subr.bf16.mxu0 0
    %726 = vmatpush1.bf16.msra.mxu0 %v544
    %727 = vmatprep.subr.bf16.mxu0 0
    %728 = vmatpush1.bf16.msra.mxu0 %v545
    %729 = vmatprep.subr.bf16.mxu0 0
    %730 = vmatpush1.bf16.msra.mxu0 %v546
    %731 = vmatprep.subr.bf16.mxu0 0
    %732 = vmatpush1.bf16.msra.mxu0 %v547
    %733 = vmatprep.subr.bf16.mxu0 0
    %734 = vmatpush1.bf16.msra.mxu0 %v548
    %735 = vmatprep.subr.bf16.mxu0 0
    %736 = vmatpush1.bf16.msra.mxu0 %v549
    %737 = vmatprep.subr.bf16.mxu0 0
    %738 = vmatpush1.bf16.msra.mxu0 %v550
    %739 = vmatprep.subr.bf16.mxu0 0
    %740 = vmatpush1.bf16.msra.mxu0 %v551
    %741 = vmatprep.subr.bf16.mxu0 0
    %742 = vmatpush1.bf16.msra.mxu0 %v552
    %743 = vmatprep.subr.bf16.mxu0 0
    %744 = vmatpush1.bf16.msra.mxu0 %v553
    %745 = vmatprep.subr.bf16.mxu0 0
    %746 = vmatpush1.bf16.msra.mxu0 %v554
    %747 = vmatprep.mubr.bf16.mxu0 %v113
    %748 = vmatmul.mubr.bf16.gmra.mrb[0].mxu0 %v112
    %v749 = vpop.f32.mrb[0].mxu0
    %v750 = vadd.f32 %v710, %v749
    %v751 = vpop.f32.mrb[0].mxu0
    %v752 = vpop.f32.mrb[0].mxu0
    %v753 = vpop.f32.mrb[0].mxu0
    %754 = vdwg.mxu0
    %755 = vmatprep.subr.bf16.mxu0 0
    %756 = vmatpush1.bf16.msra.mxu0 %v555
    %757 = vmatprep.subr.bf16.mxu0 0
    %758 = vmatpush1.bf16.msra.mxu0 %v556
    %759 = vmatprep.subr.bf16.mxu0 0
    %760 = vmatpush1.bf16.msra.mxu0 %v557
    %761 = vmatprep.subr.bf16.mxu0 0
    %762 = vmatpush1.bf16.msra.mxu0 %v558
    %763 = vmatprep.subr.bf16.mxu0 0
    %764 = vmatpush1.bf16.msra.mxu0 %v559
    %765 = vmatprep.subr.bf16.mxu0 0
    %766 = vmatpush1.bf16.msra.mxu0 %v560
    %767 = vmatprep.subr.bf16.mxu0 0
    %768 = vmatpush1.bf16.msra.mxu0 %v561
    %769 = vmatprep.subr.bf16.mxu0 0
    %770 = vmatpush1.bf16.msra.mxu0 %v562
    %771 = vmatprep.subr.bf16.mxu0 0
    %772 = vmatpush1.bf16.msra.mxu0 %v563
    %773 = vmatprep.subr.bf16.mxu0 0
    %774 = vmatpush1.bf16.msra.mxu0 %v564
    %775 = vmatprep.subr.bf16.mxu0 0
    %776 = vmatpush1.bf16.msra.mxu0 %v565
    %777 = vmatprep.subr.bf16.mxu0 0
    %778 = vmatpush1.bf16.msra.mxu0 %v566
    %779 = vmatprep.subr.bf16.mxu0 0
    %780 = vmatpush1.bf16.msra.mxu0 %v567
    %781 = vmatprep.subr.bf16.mxu0 0
    %782 = vmatpush1.bf16.msra.mxu0 %v568
    %783 = vmatprep.subr.bf16.mxu0 0
    %784 = vmatpush1.bf16.msra.mxu0 %v569
    %785 = vmatprep.subr.bf16.mxu0 0
    %786 = vmatpush1.bf16.msra.mxu0 %v570
    %787 = vmatprep.mubr.bf16.mxu0 %v115
    %788 = vmatmul.mubr.bf16.gmra.mrb[0].mxu0 %v114
    %v789 = vpop.f32.mrb[0].mxu0
    %v790 = vadd.f32 %v750, %v789
    %v791 = vpop.f32.mrb[0].mxu0
    %v792 = vpop.f32.mrb[0].mxu0
    %v793 = vpop.f32.mrb[0].mxu0
    %794 = vdwg.mxu0
    %v795 = vmax.f32 %v790, 0.0
    %v796 = vpack.c.bf16 %v795, %v795
    %v797 = vld [vmem:[#allocation7] sm:$0xf]
    %v798 = vld [vmem:[#allocation7 + $0x4] sm:$0xf]
    %v799 = vld [vmem:[#allocation7 + $0x8] sm:$0xf]
    %v800 = vld [vmem:[#allocation7 + $0xc] sm:$0xf]
    %v801 = vld [vmem:[#allocation7 + $0x10] sm:$0xf]
    %v802 = vld [vmem:[#allocation7 + $0x14] sm:$0xf]
    %v803 = vld [vmem:[#allocation7 + $0x18] sm:$0xf]
    %v804 = vld [vmem:[#allocation7 + $0x1c] sm:$0xf]
    %v805 = vld [vmem:[#allocation7 + $0x20] sm:$0xf]
    %v806 = vld [vmem:[#allocation7 + $0x24] sm:$0xf]
    %v807 = vld [vmem:[#allocation7 + $0x28] sm:$0xf]
    %v808 = vld [vmem:[#allocation7 + $0x2c] sm:$0xf]
    %v809 = vld [vmem:[#allocation7 + $0x30] sm:$0xf]
    %v810 = vld [vmem:[#allocation7 + $0x34] sm:$0xf]
    %v811 = vld [vmem:[#allocation7 + $0x38] sm:$0xf]
    %v812 = vld [vmem:[#allocation7 + $0x3c] sm:$0xf]
    %v813 = vld [vmem:[%s4] sm:$0x1]
    %v815 = vlaneseq
    %v816 = vshrl.u32 %v815, 7
    %v817 = vsub.s32 0, %v816
    %v818 = vrot.slane %v813, %v817
    %v836 = vunpack.c.l.b16 %v797
    %v837 = vunpack.c.l.b16 %v798
    %v838 = vunpack.c.l.b16 %v799
    %v839 = vunpack.c.l.b16 %v800
    %v840 = vunpack.c.l.b16 %v801
    %v841 = vunpack.c.l.b16 %v802
    %v842 = vunpack.c.l.b16 %v803
    %v843 = vunpack.c.l.b16 %v804
    %v844 = vunpack.c.l.b16 %v805
    %v845 = vunpack.c.l.b16 %v806
    %v846 = vunpack.c.l.b16 %v807
    %v847 = vunpack.c.l.b16 %v808
    %v848 = vunpack.c.l.b16 %v809
    %v849 = vunpack.c.l.b16 %v810
    %v850 = vunpack.c.l.b16 %v811
    %v851 = vunpack.c.l.b16 %v812
    %v852 = vpack.c.b16 %v837, %v836
    %v853 = vpack.c.b16 %v839, %v838
    %v854 = vpack.c.b16 %v841, %v840
    %v855 = vpack.c.b16 %v843, %v842
    %v856 = vpack.c.b16 %v845, %v844
    %v857 = vpack.c.b16 %v847, %v846
    %v858 = vpack.c.b16 %v849, %v848
    %v859 = vpack.c.b16 %v851, %v850
    %868 = vmatprep.subr.bf16.mxu0 0
    %869 = vmatpush1.bf16.msra.mxu0 %v852
    %870 = vmatprep.subr.bf16.mxu0 0
    %871 = vmatpush1.bf16.msra.mxu0 %v853
    %872 = vmatprep.subr.bf16.mxu0 0
    %873 = vmatpush1.bf16.msra.mxu0 %v854
    %874 = vmatprep.subr.bf16.mxu0 0
    %875 = vmatpush1.bf16.msra.mxu0 %v855
    %876 = vmatprep.subr.bf16.mxu0 0
    %877 = vmatpush1.bf16.msra.mxu0 %v856
    %878 = vmatprep.subr.bf16.mxu0 0
    %879 = vmatpush1.bf16.msra.mxu0 %v857
    %880 = vmatprep.subr.bf16.mxu0 0
    %881 = vmatpush1.bf16.msra.mxu0 %v858
    %882 = vmatprep.subr.bf16.mxu0 0
    %883 = vmatpush1.bf16.msra.mxu0 %v859
    %884 = vmatprep.subr.bf16.mxu0 0
    %885 = vmatpush1.bf16.msra.mxu0 0
    %886 = vmatprep.subr.bf16.mxu0 0
    %887 = vmatpush1.bf16.msra.mxu0 0
    %888 = vmatprep.subr.bf16.mxu0 0
    %889 = vmatpush1.bf16.msra.mxu0 0
    %890 = vmatprep.subr.bf16.mxu0 0
    %891 = vmatpush1.bf16.msra.mxu0 0
    %892 = vmatprep.subr.bf16.mxu0 0
    %893 = vmatpush1.bf16.msra.mxu0 0
    %894 = vmatprep.subr.bf16.mxu0 0
    %895 = vmatpush1.bf16.msra.mxu0 0
    %896 = vmatprep.subr.bf16.mxu0 0
    %897 = vmatpush1.bf16.msra.mxu0 0
    %898 = vmatprep.subr.bf16.mxu0 0
    %899 = vmatpush1.bf16.msra.mxu0 0
    %900 = vmatprep.mubr.bf16.mxu0 0
    %901 = vmatmul.mubr.bf16.gmra.mrb[0].mxu0 %v796
    %v902 = vpop.f32.mrb[0].mxu0
    %v903 = vadd.f32 %v818, %v902
    %v904 = vpop.f32.mrb[0].mxu0
    %v905 = vpop.f32.mrb[0].mxu0
    %v906 = vpop.f32.mrb[0].mxu0
    %907 = vdwg.mxu0
    %v908 = vpack.c.bf16 %v903, %v903
    %v909 = vld [vmem:[#allocation8] sm:$0xf]
    %v910 = vld [vmem:[#allocation8 + $0x4] sm:$0xf]
    %v911 = vld [vmem:[#allocation8 + $0x8] sm:$0xf]
    %v912 = vld [vmem:[#allocation8 + $0xc] sm:$0xf]
    %v913 = vld [vmem:[#allocation8 + $0x10] sm:$0xf]
    %v914 = vld [vmem:[#allocation8 + $0x14] sm:$0xf]
    %v915 = vld [vmem:[#allocation8 + $0x18] sm:$0xf]
    %v916 = vld [vmem:[#allocation8 + $0x1c] sm:$0xf]
    %v917 = vld [vmem:[#allocation8 + $0x20] sm:$0xf]
    %v918 = vld [vmem:[#allocation8 + $0x24] sm:$0xf]
    %v919 = vld [vmem:[#allocation8 + $0x28] sm:$0xf]
    %v920 = vld [vmem:[#allocation8 + $0x2c] sm:$0xf]
    %v921 = vld [vmem:[#allocation8 + $0x30] sm:$0xf]
    %v922 = vld [vmem:[#allocation8 + $0x34] sm:$0xf]
    %v923 = vld [vmem:[#allocation8 + $0x38] sm:$0xf]
    %v924 = vld [vmem:[#allocation8 + $0x3c] sm:$0xf]
    %v925 = vld [vmem:[%s6] sm:$0x1]
    %v927 = vlaneseq
    %v928 = vshrl.u32 %v927, 7
    %v929 = vsub.s32 0, %v928
    %v930 = vrot.slane %v925, %v929
    %v948 = vunpack.c.l.b16 %v909
    %v949 = vunpack.c.l.b16 %v910
    %v950 = vunpack.c.l.b16 %v911
    %v951 = vunpack.c.l.b16 %v912
    %v952 = vunpack.c.l.b16 %v913
    %v953 = vunpack.c.l.b16 %v914
    %v954 = vunpack.c.l.b16 %v915
    %v955 = vunpack.c.l.b16 %v916
    %v956 = vunpack.c.l.b16 %v917
    %v957 = vunpack.c.l.b16 %v918
    %v958 = vunpack.c.l.b16 %v919
    %v959 = vunpack.c.l.b16 %v920
    %v960 = vunpack.c.l.b16 %v921
    %v961 = vunpack.c.l.b16 %v922
    %v962 = vunpack.c.l.b16 %v923
    %v963 = vunpack.c.l.b16 %v924
    %v964 = vpack.c.b16 %v949, %v948
    %v965 = vpack.c.b16 %v951, %v950
    %v966 = vpack.c.b16 %v953, %v952
    %v967 = vpack.c.b16 %v955, %v954
    %v968 = vpack.c.b16 %v957, %v956
    %v969 = vpack.c.b16 %v959, %v958
    %v970 = vpack.c.b16 %v961, %v960
    %v971 = vpack.c.b16 %v963, %v962
    %980 = vmatprep.subr.bf16.mxu0 0
    %981 = vmatpush1.bf16.msra.mxu0 %v964
    %982 = vmatprep.subr.bf16.mxu0 0
    %983 = vmatpush1.bf16.msra.mxu0 %v965
    %984 = vmatprep.subr.bf16.mxu0 0
    %985 = vmatpush1.bf16.msra.mxu0 %v966
    %986 = vmatprep.subr.bf16.mxu0 0
    %987 = vmatpush1.bf16.msra.mxu0 %v967
    %988 = vmatprep.subr.bf16.mxu0 0
    %989 = vmatpush1.bf16.msra.mxu0 %v968
    %990 = vmatprep.subr.bf16.mxu0 0
    %991 = vmatpush1.bf16.msra.mxu0 %v969
    %992 = vmatprep.subr.bf16.mxu0 0
    %993 = vmatpush1.bf16.msra.mxu0 %v970
    %994 = vmatprep.subr.bf16.mxu0 0
    %995 = vmatpush1.bf16.msra.mxu0 %v971
    %996 = vmatprep.subr.bf16.mxu0 0
    %997 = vmatpush1.bf16.msra.mxu0 0
    %998 = vmatprep.subr.bf16.mxu0 0
    %999 = vmatpush1.bf16.msra.mxu0 0
    %1000 = vmatprep.subr.bf16.mxu0 0
    %1001 = vmatpush1.bf16.msra.mxu0 0
    %1002 = vmatprep.subr.bf16.mxu0 0
    %1003 = vmatpush1.bf16.msra.mxu0 0
    %1004 = vmatprep.subr.bf16.mxu0 0
    %1005 = vmatpush1.bf16.msra.mxu0 0
    %1006 = vmatprep.subr.bf16.mxu0 0
    %1007 = vmatpush1.bf16.msra.mxu0 0
    %1008 = vmatprep.subr.bf16.mxu0 0
    %1009 = vmatpush1.bf16.msra.mxu0 0
    %1010 = vmatprep.subr.bf16.mxu0 0
    %1011 = vmatpush1.bf16.msra.mxu0 0
    %1012 = vmatprep.mubr.bf16.mxu0 0
    %1013 = vmatmul.mubr.bf16.gmra.mrb[0].mxu0 %v908
    %v1014 = vpop.f32.mrb[0].mxu0
    %v1015 = vadd.f32 %v930, %v1014
    %v1016 = vpop.f32.mrb[0].mxu0
    %v1017 = vpop.f32.mrb[0].mxu0
    %v1018 = vpop.f32.mrb[0].mxu0
    %1019 = vdwg.mxu0
    %v1020 = vmax.f32 %v1015, 0.0
    %v1021 = vpack.c.bf16 %v1020, %v1020
    %v1022 = vld [vmem:[#allocation10] sm:$0xff]
    %v1023 = vld [vmem:[#allocation10 + $0x8] sm:$0xff]
    %v1024 = vld [vmem:[#allocation10 + $0x10] sm:$0xff]
    %v1025 = vld [vmem:[#allocation10 + $0x18] sm:$0xff]
    %v1026 = vld [vmem:[#allocation10 + $0x20] sm:$0xff]
    %v1027 = vld [vmem:[#allocation10 + $0x28] sm:$0xff]
    %v1028 = vld [vmem:[#allocation10 + $0x30] sm:$0xff]
    %v1029 = vld [vmem:[#allocation10 + $0x38] sm:$0xff]
    %v1030 = vld [vmem:[#allocation10 + $0x40] sm:$0xff]
    %v1031 = vld [vmem:[#allocation10 + $0x48] sm:$0xff]
    %v1032 = vld [vmem:[#allocation10 + $0x50] sm:$0xff]
    %v1033 = vld [vmem:[#allocation10 + $0x58] sm:$0xff]
    %v1034 = vld [vmem:[#allocation10 + $0x60] sm:$0xff]
    %v1035 = vld [vmem:[#allocation10 + $0x68] sm:$0xff]
    %v1036 = vld [vmem:[#allocation10 + $0x70] sm:$0xff]
    %v1037 = vld [vmem:[#allocation10 + $0x78] sm:$0xff]
    %v1038 = vld [vmem:[#allocation10 + $0x80] sm:$0xff]
    %v1039 = vld [vmem:[#allocation10 + $0x88] sm:$0xff]
    %v1040 = vld [vmem:[#allocation10 + $0x90] sm:$0xff]
    %v1041 = vld [vmem:[#allocation10 + $0x98] sm:$0xff]
    %v1042 = vld [vmem:[#allocation10 + $0xa0] sm:$0xff]
    %v1043 = vld [vmem:[#allocation10 + $0xa8] sm:$0xff]
    %v1044 = vld [vmem:[#allocation10 + $0xb0] sm:$0xff]
    %v1045 = vld [vmem:[#allocation10 + $0xb8] sm:$0xff]
    %v1046 = vld [vmem:[#allocation10 + $0xc0] sm:$0xff]
    %v1047 = vld [vmem:[#allocation10 + $0xc8] sm:$0xff]
    %v1048 = vld [vmem:[#allocation10 + $0xd0] sm:$0xff]
    %v1049 = vld [vmem:[#allocation10 + $0xd8] sm:$0xff]
    %v1050 = vld [vmem:[#allocation10 + $0xe0] sm:$0xff]
    %v1051 = vld [vmem:[#allocation10 + $0xe8] sm:$0xff]
    %v1052 = vld [vmem:[#allocation10 + $0xf0] sm:$0xff]
    %v1053 = vld [vmem:[#allocation10 + $0xf8] sm:$0xff]
    %v1054 = vld [vmem:[#allocation10 + $0x100] sm:$0xff]
    %v1055 = vld [vmem:[#allocation10 + $0x108] sm:$0xff]
    %v1056 = vld [vmem:[#allocation10 + $0x110] sm:$0xff]
    %v1057 = vld [vmem:[#allocation10 + $0x118] sm:$0xff]
    %v1058 = vld [vmem:[#allocation10 + $0x120] sm:$0xff]
    %v1059 = vld [vmem:[#allocation10 + $0x128] sm:$0xff]
    %v1060 = vld [vmem:[#allocation10 + $0x130] sm:$0xff]
    %v1061 = vld [vmem:[#allocation10 + $0x138] sm:$0xff]
    %v1062 = vld [vmem:[#allocation10 + $0x140] sm:$0xff]
    %v1063 = vld [vmem:[#allocation10 + $0x148] sm:$0xff]
    %v1064 = vld [vmem:[#allocation10 + $0x150] sm:$0xff]
    %v1065 = vld [vmem:[#allocation10 + $0x158] sm:$0xff]
    %v1066 = vld [vmem:[#allocation10 + $0x160] sm:$0xff]
    %v1067 = vld [vmem:[#allocation10 + $0x168] sm:$0xff]
    %v1068 = vld [vmem:[#allocation10 + $0x170] sm:$0xff]
    %v1069 = vld [vmem:[#allocation10 + $0x178] sm:$0xff]
    %v1070 = vld [vmem:[#allocation10 + $0x180] sm:$0xff]
    %v1071 = vld [vmem:[#allocation10 + $0x188] sm:$0xff]
    %v1072 = vld [vmem:[#allocation10 + $0x190] sm:$0xff]
    %v1073 = vld [vmem:[#allocation10 + $0x198] sm:$0xff]
    %v1074 = vld [vmem:[#allocation10 + $0x1a0] sm:$0xff]
    %v1075 = vld [vmem:[#allocation10 + $0x1a8] sm:$0xff]
    %v1076 = vld [vmem:[#allocation10 + $0x1b0] sm:$0xff]
    %v1077 = vld [vmem:[#allocation10 + $0x1b8] sm:$0xff]
    %v1078 = vld [vmem:[#allocation10 + $0x1c0] sm:$0xff]
    %v1079 = vld [vmem:[#allocation10 + $0x1c8] sm:$0xff]
    %v1080 = vld [vmem:[#allocation10 + $0x1d0] sm:$0xff]
    %v1081 = vld [vmem:[#allocation10 + $0x1d8] sm:$0xff]
    %v1082 = vld [vmem:[#allocation10 + $0x1e0] sm:$0xff]
    %v1083 = vld [vmem:[#allocation10 + $0x1e8] sm:$0xff]
    %v1084 = vld [vmem:[#allocation10 + $0x1f0] sm:$0xff]
    %v1085 = vld [vmem:[#allocation10 + $0x1f8] sm:$0xff]
    %v1086 = vld [vmem:[%s8] sm:$0xff]
    %v1088 = vlaneseq
    %v1089 = vshrl.u32 %v1088, 7
    %v1090 = vsub.s32 0, %v1089
    %v1091 = vrot.slane %v1086, %v1090
    %v1092 = vlaneseq
    %v1093 = vshrl.u32 %v1092, 7
    %v1094 = vsub.s32 1, %v1093
    %v1095 = vrot.slane %v1086, %v1094
    %v1096 = vlaneseq
    %v1097 = vshrl.u32 %v1096, 7
    %v1098 = vsub.s32 2, %v1097
    %v1099 = vrot.slane %v1086, %v1098
    %v1100 = vlaneseq
    %v1101 = vshrl.u32 %v1100, 7
    %v1102 = vsub.s32 3, %v1101
    %v1103 = vrot.slane %v1086, %v1102
    %v1104 = vlaneseq
    %v1105 = vshrl.u32 %v1104, 7
    %v1106 = vsub.s32 4, %v1105
    %v1107 = vrot.slane %v1086, %v1106
    %v1108 = vlaneseq
    %v1109 = vshrl.u32 %v1108, 7
    %v1110 = vsub.s32 5, %v1109
    %v1111 = vrot.slane %v1086, %v1110
    %v1112 = vlaneseq
    %v1113 = vshrl.u32 %v1112, 7
    %v1114 = vsub.s32 6, %v1113
    %v1115 = vrot.slane %v1086, %v1114
    %v1116 = vlaneseq
    %v1117 = vshrl.u32 %v1116, 7
    %v1118 = vsub.s32 7, %v1117
    %v1119 = vrot.slane %v1086, %v1118
    %v1192 = vunpack.c.l.b16 %v1022
    %v1193 = vunpack.c.h.b16 %v1022
    %v1194 = vunpack.c.l.b16 %v1023
    %v1195 = vunpack.c.h.b16 %v1023
    %v1196 = vunpack.c.l.b16 %v1024
    %v1197 = vunpack.c.h.b16 %v1024
    %v1198 = vunpack.c.l.b16 %v1025
    %v1199 = vunpack.c.h.b16 %v1025
    %v1200 = vunpack.c.l.b16 %v1026
    %v1201 = vunpack.c.h.b16 %v1026
    %v1202 = vunpack.c.l.b16 %v1027
    %v1203 = vunpack.c.h.b16 %v1027
    %v1204 = vunpack.c.l.b16 %v1028
    %v1205 = vunpack.c.h.b16 %v1028
    %v1206 = vunpack.c.l.b16 %v1029
    %v1207 = vunpack.c.h.b16 %v1029
    %v1208 = vunpack.c.l.b16 %v1030
    %v1209 = vunpack.c.h.b16 %v1030
    %v1210 = vunpack.c.l.b16 %v1031
    %v1211 = vunpack.c.h.b16 %v1031
    %v1212 = vunpack.c.l.b16 %v1032
    %v1213 = vunpack.c.h.b16 %v1032
    %v1214 = vunpack.c.l.b16 %v1033
    %v1215 = vunpack.c.h.b16 %v1033
    %v1216 = vunpack.c.l.b16 %v1034
    %v1217 = vunpack.c.h.b16 %v1034
    %v1218 = vunpack.c.l.b16 %v1035
    %v1219 = vunpack.c.h.b16 %v1035
    %v1220 = vunpack.c.l.b16 %v1036
    %v1221 = vunpack.c.h.b16 %v1036
    %v1222 = vunpack.c.l.b16 %v1037
    %v1223 = vunpack.c.h.b16 %v1037
    %v1224 = vunpack.c.l.b16 %v1038
    %v1225 = vunpack.c.h.b16 %v1038
    %v1226 = vunpack.c.l.b16 %v1039
    %v1227 = vunpack.c.h.b16 %v1039
    %v1228 = vunpack.c.l.b16 %v1040
    %v1229 = vunpack.c.h.b16 %v1040
    %v1230 = vunpack.c.l.b16 %v1041
    %v1231 = vunpack.c.h.b16 %v1041
    %v1232 = vunpack.c.l.b16 %v1042
    %v1233 = vunpack.c.h.b16 %v1042
    %v1234 = vunpack.c.l.b16 %v1043
    %v1235 = vunpack.c.h.b16 %v1043
    %v1236 = vunpack.c.l.b16 %v1044
    %v1237 = vunpack.c.h.b16 %v1044
    %v1238 = vunpack.c.l.b16 %v1045
    %v1239 = vunpack.c.h.b16 %v1045
    %v1240 = vunpack.c.l.b16 %v1046
    %v1241 = vunpack.c.h.b16 %v1046
    %v1242 = vunpack.c.l.b16 %v1047
    %v1243 = vunpack.c.h.b16 %v1047
    %v1244 = vunpack.c.l.b16 %v1048
    %v1245 = vunpack.c.h.b16 %v1048
    %v1246 = vunpack.c.l.b16 %v1049
    %v1247 = vunpack.c.h.b16 %v1049
    %v1248 = vunpack.c.l.b16 %v1050
    %v1249 = vunpack.c.h.b16 %v1050
    %v1250 = vunpack.c.l.b16 %v1051
    %v1251 = vunpack.c.h.b16 %v1051
    %v1252 = vunpack.c.l.b16 %v1052
    %v1253 = vunpack.c.h.b16 %v1052
    %v1254 = vunpack.c.l.b16 %v1053
    %v1255 = vunpack.c.h.b16 %v1053
    %v1256 = vunpack.c.l.b16 %v1054
    %v1257 = vunpack.c.h.b16 %v1054
    %v1258 = vunpack.c.l.b16 %v1055
    %v1259 = vunpack.c.h.b16 %v1055
    %v1260 = vunpack.c.l.b16 %v1056
    %v1261 = vunpack.c.h.b16 %v1056
    %v1262 = vunpack.c.l.b16 %v1057
    %v1263 = vunpack.c.h.b16 %v1057
    %v1264 = vunpack.c.l.b16 %v1058
    %v1265 = vunpack.c.h.b16 %v1058
    %v1266 = vunpack.c.l.b16 %v1059
    %v1267 = vunpack.c.h.b16 %v1059
    %v1268 = vunpack.c.l.b16 %v1060
    %v1269 = vunpack.c.h.b16 %v1060
    %v1270 = vunpack.c.l.b16 %v1061
    %v1271 = vunpack.c.h.b16 %v1061
    %v1272 = vunpack.c.l.b16 %v1062
    %v1273 = vunpack.c.h.b16 %v1062
    %v1274 = vunpack.c.l.b16 %v1063
    %v1275 = vunpack.c.h.b16 %v1063
    %v1276 = vunpack.c.l.b16 %v1064
    %v1277 = vunpack.c.h.b16 %v1064
    %v1278 = vunpack.c.l.b16 %v1065
    %v1279 = vunpack.c.h.b16 %v1065
    %v1280 = vunpack.c.l.b16 %v1066
    %v1281 = vunpack.c.h.b16 %v1066
    %v1282 = vunpack.c.l.b16 %v1067
    %v1283 = vunpack.c.h.b16 %v1067
    %v1284 = vunpack.c.l.b16 %v1068
    %v1285 = vunpack.c.h.b16 %v1068
    %v1286 = vunpack.c.l.b16 %v1069
    %v1287 = vunpack.c.h.b16 %v1069
    %v1288 = vunpack.c.l.b16 %v1070
    %v1289 = vunpack.c.h.b16 %v1070
    %v1290 = vunpack.c.l.b16 %v1071
    %v1291 = vunpack.c.h.b16 %v1071
    %v1292 = vunpack.c.l.b16 %v1072
    %v1293 = vunpack.c.h.b16 %v1072
    %v1294 = vunpack.c.l.b16 %v1073
    %v1295 = vunpack.c.h.b16 %v1073
    %v1296 = vunpack.c.l.b16 %v1074
    %v1297 = vunpack.c.h.b16 %v1074
    %v1298 = vunpack.c.l.b16 %v1075
    %v1299 = vunpack.c.h.b16 %v1075
    %v1300 = vunpack.c.l.b16 %v1076
    %v1301 = vunpack.c.h.b16 %v1076
    %v1302 = vunpack.c.l.b16 %v1077
    %v1303 = vunpack.c.h.b16 %v1077
    %v1304 = vunpack.c.l.b16 %v1078
    %v1305 = vunpack.c.h.b16 %v1078
    %v1306 = vunpack.c.l.b16 %v1079
    %v1307 = vunpack.c.h.b16 %v1079
    %v1308 = vunpack.c.l.b16 %v1080
    %v1309 = vunpack.c.h.b16 %v1080
    %v1310 = vunpack.c.l.b16 %v1081
    %v1311 = vunpack.c.h.b16 %v1081
    %v1312 = vunpack.c.l.b16 %v1082
    %v1313 = vunpack.c.h.b16 %v1082
    %v1314 = vunpack.c.l.b16 %v1083
    %v1315 = vunpack.c.h.b16 %v1083
    %v1316 = vunpack.c.l.b16 %v1084
    %v1317 = vunpack.c.h.b16 %v1084
    %v1318 = vunpack.c.l.b16 %v1085
    %v1319 = vunpack.c.h.b16 %v1085
    %v1320 = vpack.c.b16 %v1200, %v1192
    %v1321 = vpack.c.b16 %v1201, %v1193
    %v1322 = vpack.c.b16 %v1202, %v1194
    %v1323 = vpack.c.b16 %v1203, %v1195
    %v1324 = vpack.c.b16 %v1204, %v1196
    %v1325 = vpack.c.b16 %v1205, %v1197
    %v1326 = vpack.c.b16 %v1206, %v1198
    %v1327 = vpack.c.b16 %v1207, %v1199
    %v1328 = vpack.c.b16 %v1216, %v1208
    %v1329 = vpack.c.b16 %v1217, %v1209
    %v1330 = vpack.c.b16 %v1218, %v1210
    %v1331 = vpack.c.b16 %v1219, %v1211
    %v1332 = vpack.c.b16 %v1220, %v1212
    %v1333 = vpack.c.b16 %v1221, %v1213
    %v1334 = vpack.c.b16 %v1222, %v1214
    %v1335 = vpack.c.b16 %v1223, %v1215
    %v1336 = vpack.c.b16 %v1232, %v1224
    %v1337 = vpack.c.b16 %v1233, %v1225
    %v1338 = vpack.c.b16 %v1234, %v1226
    %v1339 = vpack.c.b16 %v1235, %v1227
    %v1340 = vpack.c.b16 %v1236, %v1228
    %v1341 = vpack.c.b16 %v1237, %v1229
    %v1342 = vpack.c.b16 %v1238, %v1230
    %v1343 = vpack.c.b16 %v1239, %v1231
    %v1344 = vpack.c.b16 %v1248, %v1240
    %v1345 = vpack.c.b16 %v1249, %v1241
    %v1346 = vpack.c.b16 %v1250, %v1242
    %v1347 = vpack.c.b16 %v1251, %v1243
    %v1348 = vpack.c.b16 %v1252, %v1244
    %v1349 = vpack.c.b16 %v1253, %v1245
    %v1350 = vpack.c.b16 %v1254, %v1246
    %v1351 = vpack.c.b16 %v1255, %v1247
    %v1352 = vpack.c.b16 %v1264, %v1256
    %v1353 = vpack.c.b16 %v1265, %v1257
    %v1354 = vpack.c.b16 %v1266, %v1258
    %v1355 = vpack.c.b16 %v1267, %v1259
    %v1356 = vpack.c.b16 %v1268, %v1260
    %v1357 = vpack.c.b16 %v1269, %v1261
    %v1358 = vpack.c.b16 %v1270, %v1262
    %v1359 = vpack.c.b16 %v1271, %v1263
    %v1360 = vpack.c.b16 %v1280, %v1272
    %v1361 = vpack.c.b16 %v1281, %v1273
    %v1362 = vpack.c.b16 %v1282, %v1274
    %v1363 = vpack.c.b16 %v1283, %v1275
    %v1364 = vpack.c.b16 %v1284, %v1276
    %v1365 = vpack.c.b16 %v1285, %v1277
    %v1366 = vpack.c.b16 %v1286, %v1278
    %v1367 = vpack.c.b16 %v1287, %v1279
    %v1368 = vpack.c.b16 %v1296, %v1288
    %v1369 = vpack.c.b16 %v1297, %v1289
    %v1370 = vpack.c.b16 %v1298, %v1290
    %v1371 = vpack.c.b16 %v1299, %v1291
    %v1372 = vpack.c.b16 %v1300, %v1292
    %v1373 = vpack.c.b16 %v1301, %v1293
    %v1374 = vpack.c.b16 %v1302, %v1294
    %v1375 = vpack.c.b16 %v1303, %v1295
    %v1376 = vpack.c.b16 %v1312, %v1304
    %v1377 = vpack.c.b16 %v1313, %v1305
    %v1378 = vpack.c.b16 %v1314, %v1306
    %v1379 = vpack.c.b16 %v1315, %v1307
    %v1380 = vpack.c.b16 %v1316, %v1308
    %v1381 = vpack.c.b16 %v1317, %v1309
    %v1382 = vpack.c.b16 %v1318, %v1310
    %v1383 = vpack.c.b16 %v1319, %v1311
    %1448 = vmatprep.subr.bf16.mxu0 %v1321
    %1449 = vmatpush1.bf16.msra.mxu0 %v1320
    %1450 = vmatprep.subr.bf16.mxu0 %v1329
    %1451 = vmatpush1.bf16.msra.mxu0 %v1328
    %1452 = vmatprep.subr.bf16.mxu0 %v1337
    %1453 = vmatpush1.bf16.msra.mxu0 %v1336
    %1454 = vmatprep.subr.bf16.mxu0 %v1345
    %1455 = vmatpush1.bf16.msra.mxu0 %v1344
    %1456 = vmatprep.subr.bf16.mxu0 %v1353
    %1457 = vmatpush1.bf16.msra.mxu0 %v1352
    %1458 = vmatprep.subr.bf16.mxu0 %v1361
    %1459 = vmatpush1.bf16.msra.mxu0 %v1360
    %1460 = vmatprep.subr.bf16.mxu0 %v1369
    %1461 = vmatpush1.bf16.msra.mxu0 %v1368
    %1462 = vmatprep.subr.bf16.mxu0 %v1377
    %1463 = vmatpush1.bf16.msra.mxu0 %v1376
    %1464 = vmatprep.subr.bf16.mxu0 0
    %1465 = vmatpush1.bf16.msra.mxu0 0
    %1466 = vmatprep.subr.bf16.mxu0 0
    %1467 = vmatpush1.bf16.msra.mxu0 0
    %1468 = vmatprep.subr.bf16.mxu0 0
    %1469 = vmatpush1.bf16.msra.mxu0 0
    %1470 = vmatprep.subr.bf16.mxu0 0
    %1471 = vmatpush1.bf16.msra.mxu0 0
    %1472 = vmatprep.subr.bf16.mxu0 0
    %1473 = vmatpush1.bf16.msra.mxu0 0
    %1474 = vmatprep.subr.bf16.mxu0 0
    %1475 = vmatpush1.bf16.msra.mxu0 0
    %1476 = vmatprep.subr.bf16.mxu0 0
    %1477 = vmatpush1.bf16.msra.mxu0 0
    %1478 = vmatprep.subr.bf16.mxu0 0
    %1479 = vmatpush1.bf16.msra.mxu0 0
    %1480 = vmatprep.mubr.bf16.mxu0 0
    %1481 = vmatmul.mubr.bf16.gmra.mrb[0].mxu0 %v1021
    %v1482 = vpop.f32.mrb[0].mxu0
    %v1483 = vadd.f32 %v1091, %v1482
    %v1484 = vpop.f32.mrb[0].mxu0
    %v1485 = vadd.f32 %v1095, %v1484
    %v1486 = vpop.f32.mrb[0].mxu0
    %v1487 = vpop.f32.mrb[0].mxu0
    %1488 = vdwg.mxu0
    %1489 = vmatprep.subr.bf16.mxu0 %v1323
    %1490 = vmatpush1.bf16.msra.mxu0 %v1322
    %1491 = vmatprep.subr.bf16.mxu0 %v1331
    %1492 = vmatpush1.bf16.msra.mxu0 %v1330
    %1493 = vmatprep.subr.bf16.mxu0 %v1339
    %1494 = vmatpush1.bf16.msra.mxu0 %v1338
    %1495 = vmatprep.subr.bf16.mxu0 %v1347
    %1496 = vmatpush1.bf16.msra.mxu0 %v1346
    %1497 = vmatprep.subr.bf16.mxu0 %v1355
    %1498 = vmatpush1.bf16.msra.mxu0 %v1354
    %1499 = vmatprep.subr.bf16.mxu0 %v1363
    %1500 = vmatpush1.bf16.msra.mxu0 %v1362
    %1501 = vmatprep.subr.bf16.mxu0 %v1371
    %1502 = vmatpush1.bf16.msra.mxu0 %v1370
    %1503 = vmatprep.subr.bf16.mxu0 %v1379
    %1504 = vmatpush1.bf16.msra.mxu0 %v1378
    %1505 = vmatprep.subr.bf16.mxu0 0
    %1506 = vmatpush1.bf16.msra.mxu0 0
    %1507 = vmatprep.subr.bf16.mxu0 0
    %1508 = vmatpush1.bf16.msra.mxu0 0
    %1509 = vmatprep.subr.bf16.mxu0 0
    %1510 = vmatpush1.bf16.msra.mxu0 0
    %1511 = vmatprep.subr.bf16.mxu0 0
    %1512 = vmatpush1.bf16.msra.mxu0 0
    %1513 = vmatprep.subr.bf16.mxu0 0
    %1514 = vmatpush1.bf16.msra.mxu0 0
    %1515 = vmatprep.subr.bf16.mxu0 0
    %1516 = vmatpush1.bf16.msra.mxu0 0
    %1517 = vmatprep.subr.bf16.mxu0 0
    %1518 = vmatpush1.bf16.msra.mxu0 0
    %1519 = vmatprep.subr.bf16.mxu0 0
    %1520 = vmatpush1.bf16.msra.mxu0 0
    %1521 = vmatprep.mubr.bf16.mxu0 0
    %1522 = vmatmul.mubr.bf16.gmra.mrb[0].mxu0 %v1021
    %v1523 = vpop.f32.mrb[0].mxu0
    %v1524 = vadd.f32 %v1099, %v1523
    %v1525 = vpop.f32.mrb[0].mxu0
    %v1526 = vadd.f32 %v1103, %v1525
    %v1527 = vpop.f32.mrb[0].mxu0
    %v1528 = vpop.f32.mrb[0].mxu0
    %1529 = vdwg.mxu0
    %1530 = vmatprep.subr.bf16.mxu0 %v1325
    %1531 = vmatpush1.bf16.msra.mxu0 %v1324
    %1532 = vmatprep.subr.bf16.mxu0 %v1333
    %1533 = vmatpush1.bf16.msra.mxu0 %v1332
    %1534 = vmatprep.subr.bf16.mxu0 %v1341
    %1535 = vmatpush1.bf16.msra.mxu0 %v1340
    %1536 = vmatprep.subr.bf16.mxu0 %v1349
    %1537 = vmatpush1.bf16.msra.mxu0 %v1348
    %1538 = vmatprep.subr.bf16.mxu0 %v1357
    %1539 = vmatpush1.bf16.msra.mxu0 %v1356
    %1540 = vmatprep.subr.bf16.mxu0 %v1365
    %1541 = vmatpush1.bf16.msra.mxu0 %v1364
    %1542 = vmatprep.subr.bf16.mxu0 %v1373
    %1543 = vmatpush1.bf16.msra.mxu0 %v1372
    %1544 = vmatprep.subr.bf16.mxu0 %v1381
    %1545 = vmatpush1.bf16.msra.mxu0 %v1380
    %1546 = vmatprep.subr.bf16.mxu0 0
    %1547 = vmatpush1.bf16.msra.mxu0 0
    %1548 = vmatprep.subr.bf16.mxu0 0
    %1549 = vmatpush1.bf16.msra.mxu0 0
    %1550 = vmatprep.subr.bf16.mxu0 0
    %1551 = vmatpush1.bf16.msra.mxu0 0
    %1552 = vmatprep.subr.bf16.mxu0 0
    %1553 = vmatpush1.bf16.msra.mxu0 0
    %1554 = vmatprep.subr.bf16.mxu0 0
    %1555 = vmatpush1.bf16.msra.mxu0 0
    %1556 = vmatprep.subr.bf16.mxu0 0
    %1557 = vmatpush1.bf16.msra.mxu0 0
    %1558 = vmatprep.subr.bf16.mxu0 0
    %1559 = vmatpush1.bf16.msra.mxu0 0
    %1560 = vmatprep.subr.bf16.mxu0 0
    %1561 = vmatpush1.bf16.msra.mxu0 0
    %1562 = vmatprep.mubr.bf16.mxu0 0
    %1563 = vmatmul.mubr.bf16.gmra.mrb[0].mxu0 %v1021
    %v1564 = vpop.f32.mrb[0].mxu0
    %v1565 = vadd.f32 %v1107, %v1564
    %v1566 = vpop.f32.mrb[0].mxu0
    %v1567 = vadd.f32 %v1111, %v1566
    %v1568 = vpop.f32.mrb[0].mxu0
    %v1569 = vpop.f32.mrb[0].mxu0
    %1570 = vdwg.mxu0
    %1571 = vmatprep.subr.bf16.mxu0 %v1327
    %1572 = vmatpush1.bf16.msra.mxu0 %v1326
    %1573 = vmatprep.subr.bf16.mxu0 %v1335
    %1574 = vmatpush1.bf16.msra.mxu0 %v1334
    %1575 = vmatprep.subr.bf16.mxu0 %v1343
    %1576 = vmatpush1.bf16.msra.mxu0 %v1342
    %1577 = vmatprep.subr.bf16.mxu0 %v1351
    %1578 = vmatpush1.bf16.msra.mxu0 %v1350
    %1579 = vmatprep.subr.bf16.mxu0 %v1359
    %1580 = vmatpush1.bf16.msra.mxu0 %v1358
    %1581 = vmatprep.subr.bf16.mxu0 %v1367
    %1582 = vmatpush1.bf16.msra.mxu0 %v1366
    %1583 = vmatprep.subr.bf16.mxu0 %v1375
    %1584 = vmatpush1.bf16.msra.mxu0 %v1374
    %1585 = vmatprep.subr.bf16.mxu0 %v1383
    %1586 = vmatpush1.bf16.msra.mxu0 %v1382
    %1587 = vmatprep.subr.bf16.mxu0 0
    %1588 = vmatpush1.bf16.msra.mxu0 0
    %1589 = vmatprep.subr.bf16.mxu0 0
    %1590 = vmatpush1.bf16.msra.mxu0 0
    %1591 = vmatprep.subr.bf16.mxu0 0
    %1592 = vmatpush1.bf16.msra.mxu0 0
    %1593 = vmatprep.subr.bf16.mxu0 0
    %1594 = vmatpush1.bf16.msra.mxu0 0
    %1595 = vmatprep.subr.bf16.mxu0 0
    %1596 = vmatpush1.bf16.msra.mxu0 0
    %1597 = vmatprep.subr.bf16.mxu0 0
    %1598 = vmatpush1.bf16.msra.mxu0 0
    %1599 = vmatprep.subr.bf16.mxu0 0
    %1600 = vmatpush1.bf16.msra.mxu0 0
    %1601 = vmatprep.subr.bf16.mxu0 0
    %1602 = vmatpush1.bf16.msra.mxu0 0
    %1603 = vmatprep.mubr.bf16.mxu0 0
    %1604 = vmatmul.mubr.bf16.gmra.mrb[0].mxu0 %v1021
    %v1605 = vpop.f32.mrb[0].mxu0
    %v1606 = vadd.f32 %v1115, %v1605
    %v1607 = vpop.f32.mrb[0].mxu0
    %v1608 = vadd.f32 %v1119, %v1607
    %v1609 = vpop.f32.mrb[0].mxu0
    %v1610 = vpop.f32.mrb[0].mxu0
    %1611 = vdwg.mxu0
    %1612 = vst [vmem:[#allocation11] sm:$0xff] %v1483
    %1613 = vst [vmem:[#allocation11 + $0x8] sm:$0xff] %v1485
    %1614 = vst [vmem:[#allocation11 + $0x10] sm:$0xff] %v1524
    %1615 = vst [vmem:[#allocation11 + $0x18] sm:$0xff] %v1526
    %1616 = vst [vmem:[#allocation11 + $0x20] sm:$0xff] %v1565
    %1617 = vst [vmem:[#allocation11 + $0x28] sm:$0xff] %v1567
    %1618 = vst [vmem:[#allocation11 + $0x30] sm:$0xff] %v1606
    %1619 = vst [vmem:[#allocation11 + $0x38] sm:$0xff] %v1608
    // Predicated region
    $region58: #{tpu_custom_call.1} parent=1 // pred_check
      _
    $region59: #{tpu_custom_call.1} parent=1 // pred_check_branch
      %1621 = sbr.rel (0) target = $region61
    $region60: #{tpu_custom_call.1} parent=1 // pred_region
      %s1623 = ssub.s32 1024, 1024
      %1624 = vsyncadd [#allocation4], %s1623
      %s1626 = sshll.u32 [#allocation11], 4
      %s1627 = int_to_ptr.vmem [resolvable:$true] %s1626
      %1629 = dma.vmem_to_hbm [thread:$0]  %s1627, 1024, %s9, [#allocation4]
    $region61: #{tpu_custom_call.1} parent=1 // pred_fallthru
      _
    // Predicated region
    $region62: #{tpu_custom_call.1} parent=1 // pred_check
      _
    $region63: #{tpu_custom_call.1} parent=1 // pred_check_branch
      %1631 = sbr.rel (0) target = $region65
    $region64: #{tpu_custom_call.1} parent=1 // pred_region
      %1632 = dma.done [#allocation4], 1024
    $region65: #{tpu_custom_call.1} parent=1 // pred_fallthru
      _
    %1633 = vsyncpa [#allocation3], 1
    %1634 = vsyncpa [#allocation6], 1
    %1635 = vsyncpa [#allocation9], 1
    %1636 = vsyncpa [#allocation4], 1

// kernel: tpu_custom_call.1
$region0: #{tpu_custom_call.1}
  #allocation0 [shape = 'u32[]', space=smem, size = 0x4, offset = 0x4, fixed_abs, tag = 'smem constant byte address 0x4 - core index']
  #allocation1 [shape = 'u32[144,128]{1,0:T(1,128)}', space=vmem, size = 0x12000, scoped, tag = 'internal scratch']
  %s0 = inlined_call_operand.hbm [shape: f32[8,1024], index: 0, kind: input, shape index: {}]
  %s1 = inlined_call_operand.hbm [shape: bf16[1024,128], index: 1, kind: input, shape index: {}]
  %s2 = inlined_call_operand.vmem [shape: f32[1,128], index: 2, kind: input, shape index: {}]
  %s3 = inlined_call_operand.hbm [shape: bf16[128,128], index: 3, kind: input, shape index: {}]
  %s4 = inlined_call_operand.vmem [shape: f32[1,128], index: 4, kind: input, shape index: {}]
  %s5 = inlined_call_operand.hbm [shape: bf16[128,128], index: 5, kind: input, shape index: {}]
  %s6 = inlined_call_operand.vmem [shape: f32[1,128], index: 6, kind: input, shape index: {}]
  %s7 = inlined_call_operand.hbm [shape: bf16[128,1024], index: 7, kind: input, shape index: {}]
  %s8 = inlined_call_operand.vmem [shape: f32[1,1024], index: 8, kind: input, shape index: {}]
  %s9 = inlined_call_operand.hbm [shape: f32[8,1024], index: 9, kind: output, shape index: {}]
  %s10 = sld [smem:[#allocation0]]
  $region66: #{tpu_custom_call.1} parent=0
    _
  %s12 = ssub.s32 1, %s10
  %s13 = scalar_select 0, %s12, %s10
  $region1: #{tpu_custom_call.1} parent=0
    #allocation2 [shape = 'u8[32768]{0}', space=vmem, size = 0x8000, scoped, tag = 'input window, operand 0, single buffered']
    #allocation3 [shape = 's32[1]{0}', space=sflag, size = 0x4, scoped, tag = 'scoped memory for tpu_custom_call.1']
    #allocation4 [shape = 's32[1]{0}', space=sflag, size = 0x4, scoped, tag = 'scoped memory for tpu_custom_call.1']
    #allocation5 [shape = 'u8[262144]{0}', space=vmem, size = 0x40000, scoped, tag = 'input window, operand 1, single buffered']
    #allocation6 [shape = 's32[1]{0}', space=sflag, size = 0x4, scoped, tag = 'scoped memory for tpu_custom_call.1']
    #allocation7 [shape = 'u8[32768]{0}', space=vmem, size = 0x8000, scoped, tag = 'input window, operand 3, single buffered']
    #allocation8 [shape = 'u8[32768]{0}', space=vmem, size = 0x8000, scoped, tag = 'input window, operand 5, single buffered']
    #allocation9 [shape = 's32[1]{0}', space=sflag, size = 0x4, scoped, tag = 'scoped memory for tpu_custom_call.1']
    #allocation10 [shape = 'u8[262144]{0}', space=vmem, size = 0x40000, scoped, tag = 'input window, operand 7, single buffered']
    #allocation11 [shape = 'u8[32768]{0}', space=vmem, size = 0x8000, scoped, tag = 'output window, operand 0, single buffered']
    %14 = vsyncpa [#allocation3], 0
    %15 = vsyncpa [#allocation6], 0
    %16 = vsyncpa [#allocation9], 0
    %17 = vsyncpa [#allocation4], 0
    // Predicated region
    $region2: #{tpu_custom_call.1} parent=1 // pred_check
      _
    $region3: #{tpu_custom_call.1} parent=1 // pred_check_branch
      %19 = sbr.rel (0) target = $region5
    $region4: #{tpu_custom_call.1} parent=1 // pred_region
      %s21 = ssub.s32 1024, 1024
      %22 = vsyncadd [#allocation3], %s21
      %s24 = sshll.u32 [#allocation2], 4
      %s25 = int_to_ptr.vmem [resolvable:$true] %s24
      %27 = dma.hbm_to_vmem [thread:$0]  %s0, 1024, %s25, [#allocation3]
    $region5: #{tpu_custom_call.1} parent=1 // pred_fallthru
      _
    // Predicated region
    $region6: #{tpu_custom_call.1} parent=1 // pred_check
      _
    $region7: #{tpu_custom_call.1} parent=1 // pred_check_branch
      %29 = sbr.rel (0) target = $region9
    $region8: #{tpu_custom_call.1} parent=1 // pred_region
      %s31 = ssub.s32 8192, 8192
      %32 = vsyncadd [#allocation6], %s31
      %s33 = sshll.u32 [#allocation5], 4
      %s34 = int_to_ptr.vmem [resolvable:$true] %s33
      %39 = dma.hbm_to_vmem [thread:$0]  %s1, 8192, %s34, [#allocation6], 64, 64, 4
    $region9: #{tpu_custom_call.1} parent=1 // pred_fallthru
      _
    // Predicated region
    $region10: #{tpu_custom_call.1} parent=1 // pred_check
      _
    $region11: #{tpu_custom_call.1} parent=1 // pred_check_branch
      %41 = sbr.rel (0) target = $region13
    $region12: #{tpu_custom_call.1} parent=1 // pred_region
      _
    $region13: #{tpu_custom_call.1} parent=1 // pred_fallthru
      _
    // Predicated region
    $region14: #{tpu_custom_call.1} parent=1 // pred_check
      _
    $region15: #{tpu_custom_call.1} parent=1 // pred_check_branch
      %43 = sbr.rel (0) target = $region17
    $region16: #{tpu_custom_call.1} parent=1 // pred_region
      %s45 = ssub.s32 1024, 1024
      %46 = vsyncadd [#allocation6], %s45
      %s47 = sshll.u32 [#allocation7], 4
      %s48 = int_to_ptr.vmem [resolvable:$true] %s47
      %53 = dma.hbm_to_vmem [thread:$0]  %s3, 1024, %s48, [#allocation6], 64, 64, 4
    $region17: #{tpu_custom_call.1} parent=1 // pred_fallthru
      _
    // Predicated region
    $region18: #{tpu_custom_call.1} parent=1 // pred_check
      _
    $region19: #{tpu_custom_call.1} parent=1 // pred_check_branch
      %55 = sbr.rel (0) target = $region21
    $region20: #{tpu_custom_call.1} parent=1 // pred_region
      _
    $region21: #{tpu_custom_call.1} parent=1 // pred_fallthru
      _
    // Predicated region
    $region22: #{tpu_custom_call.1} parent=1 // pred_check
      _
    $region23: #{tpu_custom_call.1} parent=1 // pred_check_branch
      %57 = sbr.rel (0) target = $region25
    $region24: #{tpu_custom_call.1} parent=1 // pred_region
      %s59 = ssub.s32 1024, 1024
      %60 = vsyncadd [#allocation9], %s59
      %s61 = sshll.u32 [#allocation8], 4
      %s62 = int_to_ptr.vmem [resolvable:$true] %s61
      %67 = dma.hbm_to_vmem [thread:$0]  %s5, 1024, %s62, [#allocation9], 64, 64, 4
    $region25: #{tpu_custom_call.1} parent=1 // pred_fallthru
      _
    // Predicated region
    $region26: #{tpu_custom_call.1} parent=1 // pred_check
      _
    $region27: #{tpu_custom_call.1} parent=1 // pred_check_branch
      %69 = sbr.rel (0) target = $region29
    $region28: #{tpu_custom_call.1} parent=1 // pred_region
      _
    $region29: #{tpu_custom_call.1} parent=1 // pred_fallthru
      _
    // Predicated region
    $region30: #{tpu_custom_call.1} parent=1 // pred_check
      _
    $region31: #{tpu_custom_call.1} parent=1 // pred_check_branch
      %71 = sbr.rel (0) target = $region33
    $region32: #{tpu_custom_call.1} parent=1 // pred_region
      %s73 = ssub.s32 8192, 8192
      %74 = vsyncadd [#allocation9], %s73
      %s75 = sshll.u32 [#allocation10], 4
      %s76 = int_to_ptr.vmem [resolvable:$true] %s75
      %81 = dma.hbm_to_vmem [thread:$0]  %s7, 8192, %s76, [#allocation9], 512, 512, 32
    $region33: #{tpu_custom_call.1} parent=1 // pred_fallthru
      _
    // Predicated region
    $region34: #{tpu_custom_call.1} parent=1 // pred_check
      _
    $region35: #{tpu_custom_call.1} parent=1 // pred_check_branch
      %83 = sbr.rel (0) target = $region37
    $region36: #{tpu_custom_call.1} parent=1 // pred_region
      _
    $region37: #{tpu_custom_call.1} parent=1 // pred_fallthru
      _
    // Predicated region
    $region38: #{tpu_custom_call.1} parent=1 // pred_check
      _
    $region39: #{tpu_custom_call.1} parent=1 // pred_check_branch
      %85 = sbr.rel (0) target = $region41
    $region40: #{tpu_custom_call.1} parent=1 // pred_region
      %86 = dma.done [#allocation3], 1024
    $region41: #{tpu_custom_call.1} parent=1 // pred_fallthru
      _
    // Predicated region
    $region42: #{tpu_custom_call.1} parent=1 // pred_check
      _
    $region43: #{tpu_custom_call.1} parent=1 // pred_check_branch
      %88 = sbr.rel (0) target = $region45
    $region44: #{tpu_custom_call.1} parent=1 // pred_region
      %89 = dma.done [#allocation6], 8192
    $region45: #{tpu_custom_call.1} parent=1 // pred_fallthru
      _
    // Predicated region
    $region46: #{tpu_custom_call.1} parent=1 // pred_check
      _
    $region47: #{tpu_custom_call.1} parent=1 // pred_check_branch
      %91 = sbr.rel (0) target = $region49
    $region48: #{tpu_custom_call.1} parent=1 // pred_region
      %92 = dma.done [#allocation6], 1024
    $region49: #{tpu_custom_call.1} parent=1 // pred_fallthru
      _
    // Predicated region
    $region50: #{tpu_custom_call.1} parent=1 // pred_check
      _
    $region51: #{tpu_custom_call.1} parent=1 // pred_check_branch
      %94 = sbr.rel (0) target = $region53
    $region52: #{tpu_custom_call.1} parent=1 // pred_region
      %95 = dma.done [#allocation9], 1024
    $region53: #{tpu_custom_call.1} parent=1 // pred_fallthru
      _
    // Predicated region
    $region54: #{tpu_custom_call.1} parent=1 // pred_check
      _
    $region55: #{tpu_custom_call.1} parent=1 // pred_check_branch
      %97 = sbr.rel (0) target = $region57
    $region56: #{tpu_custom_call.1} parent=1 // pred_region
      %98 = dma.done [#allocation9], 8192
    $region57: #{tpu_custom_call.1} parent=1 // pred_fallthru
      _
    %v100 = vld [vmem:[#allocation2] sm:$0xff]
    %v101 = vld [vmem:[#allocation2 + $0x8] sm:$0xff]
    %v102 = vld [vmem:[#allocation2 + $0x10] sm:$0xff]
    %v103 = vld [vmem:[#allocation2 + $0x18] sm:$0xff]
    %v104 = vld [vmem:[#allocation2 + $0x20] sm:$0xff]
    %v105 = vld [vmem:[#allocation2 + $0x28] sm:$0xff]
    %v106 = vld [vmem:[#allocation2 + $0x30] sm:$0xff]
    %v107 = vld [vmem:[#allocation2 + $0x38] sm:$0xff]
    %v108 = vpack.c.bf16 %v100, %v100
    %v109 = vpack.c.bf16 %v101, %v101
    %v110 = vpack.c.bf16 %v102, %v102
    %v111 = vpack.c.bf16 %v103, %v103
    %v112 = vpack.c.bf16 %v104, %v104
    %v113 = vpack.c.bf16 %v105, %v105
    %v114 = vpack.c.bf16 %v106, %v106
    %v115 = vpack.c.bf16 %v107, %v107
    %v116 = vld [vmem:[#allocation5] sm:$0xf]
    %v117 = vld [vmem:[#allocation5 + $0x4] sm:$0xf]
    %v118 = vld [vmem:[#allocation5 + $0x8] sm:$0xf]
    %v119 = vld [vmem:[#allocation5 + $0xc] sm:$0xf]
    %v120 = vld [vmem:[#allocation5 + $0x10] sm:$0xf]
    %v121 = vld [vmem:[#allocation5 + $0x14] sm:$0xf]
    %v122 = vld [vmem:[#allocation5 + $0x18] sm:$0xf]
    %v123 = vld [vmem:[#allocation5 + $0x1c] sm:$0xf]
    %v124 = vld [vmem:[#allocation5 + $0x20] sm:$0xf]
    %v125 = vld [vmem:[#allocation5 + $0x24] sm:$0xf]
    %v126 = vld [vmem:[#allocation5 + $0x28] sm:$0xf]
    %v127 = vld [vmem:[#allocation5 + $0x2c] sm:$0xf]
    %v128 = vld [vmem:[#allocation5 + $0x30] sm:$0xf]
    %v129 = vld [vmem:[#allocation5 + $0x34] sm:$0xf]
    %v130 = vld [vmem:[#allocation5 + $0x38] sm:$0xf]
    %v131 = vld [vmem:[#allocation5 + $0x3c] sm:$0xf]
    %v132 = vld [vmem:[#allocation5 + $0x40] sm:$0xf]
    %v133 = vld [vmem:[#allocation5 + $0x44] sm:$0xf]
    %v134 = vld [vmem:[#allocation5 + $0x48] sm:$0xf]
    %v135 = vld [vmem:[#allocation5 + $0x4c] sm:$0xf]
    %v136 = vld [vmem:[#allocation5 + $0x50] sm:$0xf]
    %v137 = vld [vmem:[#allocation5 + $0x54] sm:$0xf]
    %v138 = vld [vmem:[#allocation5 + $0x58] sm:$0xf]
    %v139 = vld [vmem:[#allocation5 + $0x5c] sm:$0xf]
    %v140 = vld [vmem:[#allocation5 + $0x60] sm:$0xf]
    %v141 = vld [vmem:[#allocation5 + $0x64] sm:$0xf]
    %v142 = vld [vmem:[#allocation5 + $0x68] sm:$0xf]
    %v143 = vld [vmem:[#allocation5 + $0x6c] sm:$0xf]
    %v144 = vld [vmem:[#allocation5 + $0x70] sm:$0xf]
    %v145 = vld [vmem:[#allocation5 + $0x74] sm:$0xf]
    %v146 = vld [vmem:[#allocation5 + $0x78] sm:$0xf]
    %v147 = vld [vmem:[#allocation5 + $0x7c] sm:$0xf]
    %v148 = vld [vmem:[#allocation5 + $0x80] sm:$0xf]
    %v149 = vld [vmem:[#allocation5 + $0x84] sm:$0xf]
    %v150 = vld [vmem:[#allocation5 + $0x88] sm:$0xf]
    %v151 = vld [vmem:[#allocation5 + $0x8c] sm:$0xf]
    %v152 = vld [vmem:[#allocation5 + $0x90] sm:$0xf]
    %v153 = vld [vmem:[#allocation5 + $0x94] sm:$0xf]
    %v154 = vld [vmem:[#allocation5 + $0x98] sm:$0xf]
    %v155 = vld [vmem:[#allocation5 + $0x9c] sm:$0xf]
    %v156 = vld [vmem:[#allocation5 + $0xa0] sm:$0xf]
    %v157 = vld [vmem:[#allocation5 + $0xa4] sm:$0xf]
    %v158 = vld [vmem:[#allocation5 + $0xa8] sm:$0xf]
    %v159 = vld [vmem:[#allocation5 + $0xac] sm:$0xf]
    %v160 = vld [vmem:[#allocation5 + $0xb0] sm:$0xf]
    %v161 = vld [vmem:[#allocation5 + $0xb4] sm:$0xf]
    %v162 = vld [vmem:[#allocation5 + $0xb8] sm:$0xf]
    %v163 = vld [vmem:[#allocation5 + $0xbc] sm:$0xf]
    %v164 = vld [vmem:[#allocation5 + $0xc0] sm:$0xf]
    %v165 = vld [vmem:[#allocation5 + $0xc4] sm:$0xf]
    %v166 = vld [vmem:[#allocation5 + $0xc8] sm:$0xf]
    %v167 = vld [vmem:[#allocation5 + $0xcc] sm:$0xf]
    %v168 = vld [vmem:[#allocation5 + $0xd0] sm:$0xf]
    %v169 = vld [vmem:[#allocation5 + $0xd4] sm:$0xf]
    %v170 = vld [vmem:[#allocation5 + $0xd8] sm:$0xf]
    %v171 = vld [vmem:[#allocation5 + $0xdc] sm:$0xf]
    %v172 = vld [vmem:[#allocation5 + $0xe0] sm:$0xf]
    %v173 = vld [vmem:[#allocation5 + $0xe4] sm:$0xf]
    %v174 = vld [vmem:[#allocation5 + $0xe8] sm:$0xf]
    %v175 = vld [vmem:[#allocation5 + $0xec] sm:$0xf]
    %v176 = vld [vmem:[#allocation5 + $0xf0] sm:$0xf]
    %v177 = vld [vmem:[#allocation5 + $0xf4] sm:$0xf]
    %v178 = vld [vmem:[#allocation5 + $0xf8] sm:$0xf]
    %v179 = vld [vmem:[#allocation5 + $0xfc] sm:$0xf]
    %v180 = vld [vmem:[#allocation5 + $0x100] sm:$0xf]
    %v181 = vld [vmem:[#allocation5 + $0x104] sm:$0xf]
    %v182 = vld [vmem:[#allocation5 + $0x108] sm:$0xf]
    %v183 = vld [vmem:[#allocation5 + $0x10c] sm:$0xf]
    %v184 = vld [vmem:[#allocation5 + $0x110] sm:$0xf]
    %v185 = vld [vmem:[#allocation5 + $0x114] sm:$0xf]
    %v186 = vld [vmem:[#allocation5 + $0x118] sm:$0xf]
    %v187 = vld [vmem:[#allocation5 + $0x11c] sm:$0xf]
    %v188 = vld [vmem:[#allocation5 + $0x120] sm:$0xf]
    %v189 = vld [vmem:[#allocation5 + $0x124] sm:$0xf]
    %v190 = vld [vmem:[#allocation5 + $0x128] sm:$0xf]
    %v191 = vld [vmem:[#allocation5 + $0x12c] sm:$0xf]
    %v192 = vld [vmem:[#allocation5 + $0x130] sm:$0xf]
    %v193 = vld [vmem:[#allocation5 + $0x134] sm:$0xf]
    %v194 = vld [vmem:[#allocation5 + $0x138] sm:$0xf]
    %v195 = vld [vmem:[#allocation5 + $0x13c] sm:$0xf]
    %v196 = vld [vmem:[#allocation5 + $0x140] sm:$0xf]
    %v197 = vld [vmem:[#allocation5 + $0x144] sm:$0xf]
    %v198 = vld [vmem:[#allocation5 + $0x148] sm:$0xf]
    %v199 = vld [vmem:[#allocation5 + $0x14c] sm:$0xf]
    %v200 = vld [vmem:[#allocation5 + $0x150] sm:$0xf]
    %v201 = vld [vmem:[#allocation5 + $0x154] sm:$0xf]
    %v202 = vld [vmem:[#allocation5 + $0x158] sm:$0xf]
    %v203 = vld [vmem:[#allocation5 + $0x15c] sm:$0xf]
    %v204 = vld [vmem:[#allocation5 + $0x160] sm:$0xf]
    %v205 = vld [vmem:[#allocation5 + $0x164] sm:$0xf]
    %v206 = vld [vmem:[#allocation5 + $0x168] sm:$0xf]
    %v207 = vld [vmem:[#allocation5 + $0x16c] sm:$0xf]
    %v208 = vld [vmem:[#allocation5 + $0x170] sm:$0xf]
    %v209 = vld [vmem:[#allocation5 + $0x174] sm:$0xf]
    %v210 = vld [vmem:[#allocation5 + $0x178] sm:$0xf]
    %v211 = vld [vmem:[#allocation5 + $0x17c] sm:$0xf]
    %v212 = vld [vmem:[#allocation5 + $0x180] sm:$0xf]
    %v213 = vld [vmem:[#allocation5 + $0x184] sm:$0xf]
    %v214 = vld [vmem:[#allocation5 + $0x188] sm:$0xf]
    %v215 = vld [vmem:[#allocation5 + $0x18c] sm:$0xf]
    %v216 = vld [vmem:[#allocation5 + $0x190] sm:$0xf]
    %v217 = vld [vmem:[#allocation5 + $0x194] sm:$0xf]
    %v218 = vld [vmem:[#allocation5 + $0x198] sm:$0xf]
    %v219 = vld [vmem:[#allocation5 + $0x19c] sm:$0xf]
    %v220 = vld [vmem:[#allocation5 + $0x1a0] sm:$0xf]
    %v221 = vld [vmem:[#allocation5 + $0x1a4] sm:$0xf]
    %v222 = vld [vmem:[#allocation5 + $0x1a8] sm:$0xf]
    %v223 = vld [vmem:[#allocation5 + $0x1ac] sm:$0xf]
    %v224 = vld [vmem:[#allocation5 + $0x1b0] sm:$0xf]
    %v225 = vld [vmem:[#allocation5 + $0x1b4] sm:$0xf]
    %v226 = vld [vmem:[#allocation5 + $0x1b8] sm:$0xf]
    %v227 = vld [vmem:[#allocation5 + $0x1bc] sm:$0xf]
    %v228 = vld [vmem:[#allocation5 + $0x1c0] sm:$0xf]
    %v229 = vld [vmem:[#allocation5 + $0x1c4] sm:$0xf]
    %v230 = vld [vmem:[#allocation5 + $0x1c8] sm:$0xf]
    %v231 = vld [vmem:[#allocation5 + $0x1cc] sm:$0xf]
    %v232 = vld [vmem:[#allocation5 + $0x1d0] sm:$0xf]
    %v233 = vld [vmem:[#allocation5 + $0x1d4] sm:$0xf]
    %v234 = vld [vmem:[#allocation5 + $0x1d8] sm:$0xf]
    %v235 = vld [vmem:[#allocation5 + $0x1dc] sm:$0xf]
    %v236 = vld [vmem:[#allocation5 + $0x1e0] sm:$0xf]
    %v237 = vld [vmem:[#allocation5 + $0x1e4] sm:$0xf]
    %v238 = vld [vmem:[#allocation5 + $0x1e8] sm:$0xf]
    %v239 = vld [vmem:[#allocation5 + $0x1ec] sm:$0xf]
    %v240 = vld [vmem:[#allocation5 + $0x1f0] sm:$0xf]
    %v241 = vld [vmem:[#allocation5 + $0x1f4] sm:$0xf]
    %v242 = vld [vmem:[#allocation5 + $0x1f8] sm:$0xf]
    %v243 = vld [vmem:[#allocation5 + $0x1fc] sm:$0xf]
    %v244 = vld [vmem:[%s2] sm:$0x1]
    %v246 = vlaneseq
    %v247 = vshrl.u32 %v246, 7
    %v248 = vsub.s32 0, %v247
    %v249 = vrot.slane %v244, %v248
    %v379 = vunpack.c.l.b16 %v116
    %v380 = vunpack.c.l.b16 %v117
    %v381 = vunpack.c.l.b16 %v118
    %v382 = vunpack.c.l.b16 %v119
    %v383 = vunpack.c.l.b16 %v120
    %v384 = vunpack.c.l.b16 %v121
    %v385 = vunpack.c.l.b16 %v122
    %v386 = vunpack.c.l.b16 %v123
    %v387 = vunpack.c.l.b16 %v124
    %v388 = vunpack.c.l.b16 %v125
    %v389 = vunpack.c.l.b16 %v126
    %v390 = vunpack.c.l.b16 %v127
    %v391 = vunpack.c.l.b16 %v128
    %v392 = vunpack.c.l.b16 %v129
    %v393 = vunpack.c.l.b16 %v130
    %v394 = vunpack.c.l.b16 %v131
    %v395 = vunpack.c.l.b16 %v132
    %v396 = vunpack.c.l.b16 %v133
    %v397 = vunpack.c.l.b16 %v134
    %v398 = vunpack.c.l.b16 %v135
    %v399 = vunpack.c.l.b16 %v136
    %v400 = vunpack.c.l.b16 %v137
    %v401 = vunpack.c.l.b16 %v138
    %v402 = vunpack.c.l.b16 %v139
    %v403 = vunpack.c.l.b16 %v140
    %v404 = vunpack.c.l.b16 %v141
    %v405 = vunpack.c.l.b16 %v142
    %v406 = vunpack.c.l.b16 %v143
    %v407 = vunpack.c.l.b16 %v144
    %v408 = vunpack.c.l.b16 %v145
    %v409 = vunpack.c.l.b16 %v146
    %v410 = vunpack.c.l.b16 %v147
    %v411 = vunpack.c.l.b16 %v148
    %v412 = vunpack.c.l.b16 %v149
    %v413 = vunpack.c.l.b16 %v150
    %v414 = vunpack.c.l.b16 %v151
    %v415 = vunpack.c.l.b16 %v152
    %v416 = vunpack.c.l.b16 %v153
    %v417 = vunpack.c.l.b16 %v154
    %v418 = vunpack.c.l.b16 %v155
    %v419 = vunpack.c.l.b16 %v156
    %v420 = vunpack.c.l.b16 %v157
    %v421 = vunpack.c.l.b16 %v158
    %v422 = vunpack.c.l.b16 %v159
    %v423 = vunpack.c.l.b16 %v160
    %v424 = vunpack.c.l.b16 %v161
    %v425 = vunpack.c.l.b16 %v162
    %v426 = vunpack.c.l.b16 %v163
    %v427 = vunpack.c.l.b16 %v164
    %v428 = vunpack.c.l.b16 %v165
    %v429 = vunpack.c.l.b16 %v166
    %v430 = vunpack.c.l.b16 %v167
    %v431 = vunpack.c.l.b16 %v168
    %v432 = vunpack.c.l.b16 %v169
    %v433 = vunpack.c.l.b16 %v170
    %v434 = vunpack.c.l.b16 %v171
    %v435 = vunpack.c.l.b16 %v172
    %v436 = vunpack.c.l.b16 %v173
    %v437 = vunpack.c.l.b16 %v174
    %v438 = vunpack.c.l.b16 %v175
    %v439 = vunpack.c.l.b16 %v176
    %v440 = vunpack.c.l.b16 %v177
    %v441 = vunpack.c.l.b16 %v178
    %v442 = vunpack.c.l.b16 %v179
    %v443 = vunpack.c.l.b16 %v180
    %v444 = vunpack.c.l.b16 %v181
    %v445 = vunpack.c.l.b16 %v182
    %v446 = vunpack.c.l.b16 %v183
    %v447 = vunpack.c.l.b16 %v184
    %v448 = vunpack.c.l.b16 %v185
    %v449 = vunpack.c.l.b16 %v186
    %v450 = vunpack.c.l.b16 %v187
    %v451 = vunpack.c.l.b16 %v188
    %v452 = vunpack.c.l.b16 %v189
    %v453 = vunpack.c.l.b16 %v190
    %v454 = vunpack.c.l.b16 %v191
    %v455 = vunpack.c.l.b16 %v192
    %v456 = vunpack.c.l.b16 %v193
    %v457 = vunpack.c.l.b16 %v194
    %v458 = vunpack.c.l.b16 %v195
    %v459 = vunpack.c.l.b16 %v196
    %v460 = vunpack.c.l.b16 %v197
    %v461 = vunpack.c.l.b16 %v198
    %v462 = vunpack.c.l.b16 %v199
    %v463 = vunpack.c.l.b16 %v200
    %v464 = vunpack.c.l.b16 %v201
    %v465 = vunpack.c.l.b16 %v202
    %v466 = vunpack.c.l.b16 %v203
    %v467 = vunpack.c.l.b16 %v204
    %v468 = vunpack.c.l.b16 %v205
    %v469 = vunpack.c.l.b16 %v206
    %v470 = vunpack.c.l.b16 %v207
    %v471 = vunpack.c.l.b16 %v208
    %v472 = vunpack.c.l.b16 %v209
    %v473 = vunpack.c.l.b16 %v210
    %v474 = vunpack.c.l.b16 %v211
    %v475 = vunpack.c.l.b16 %v212
    %v476 = vunpack.c.l.b16 %v213
    %v477 = vunpack.c.l.b16 %v214
    %v478 = vunpack.c.l.b16 %v215
    %v479 = vunpack.c.l.b16 %v216
    %v480 = vunpack.c.l.b16 %v217
    %v481 = vunpack.c.l.b16 %v218
    %v482 = vunpack.c.l.b16 %v219
    %v483 = vunpack.c.l.b16 %v220
    %v484 = vunpack.c.l.b16 %v221
    %v485 = vunpack.c.l.b16 %v222
    %v486 = vunpack.c.l.b16 %v223
    %v487 = vunpack.c.l.b16 %v224
    %v488 = vunpack.c.l.b16 %v225
    %v489 = vunpack.c.l.b16 %v226
    %v490 = vunpack.c.l.b16 %v227
    %v491 = vunpack.c.l.b16 %v228
    %v492 = vunpack.c.l.b16 %v229
    %v493 = vunpack.c.l.b16 %v230
    %v494 = vunpack.c.l.b16 %v231
    %v495 = vunpack.c.l.b16 %v232
    %v496 = vunpack.c.l.b16 %v233
    %v497 = vunpack.c.l.b16 %v234
    %v498 = vunpack.c.l.b16 %v235
    %v499 = vunpack.c.l.b16 %v236
    %v500 = vunpack.c.l.b16 %v237
    %v501 = vunpack.c.l.b16 %v238
    %v502 = vunpack.c.l.b16 %v239
    %v503 = vunpack.c.l.b16 %v240
    %v504 = vunpack.c.l.b16 %v241
    %v505 = vunpack.c.l.b16 %v242
    %v506 = vunpack.c.l.b16 %v243
    %v507 = vpack.c.b16 %v380, %v379
    %v508 = vpack.c.b16 %v382, %v381
    %v509 = vpack.c.b16 %v384, %v383
    %v510 = vpack.c.b16 %v386, %v385
    %v511 = vpack.c.b16 %v388, %v387
    %v512 = vpack.c.b16 %v390, %v389
    %v513 = vpack.c.b16 %v392, %v391
    %v514 = vpack.c.b16 %v394, %v393
    %v515 = vpack.c.b16 %v396, %v395
    %v516 = vpack.c.b16 %v398, %v397
    %v517 = vpack.c.b16 %v400, %v399
    %v518 = vpack.c.b16 %v402, %v401
    %v519 = vpack.c.b16 %v404, %v403
    %v520 = vpack.c.b16 %v406, %v405
    %v521 = vpack.c.b16 %v408, %v407
    %v522 = vpack.c.b16 %v410, %v409
    %v523 = vpack.c.b16 %v412, %v411
    %v524 = vpack.c.b16 %v414, %v413
    %v525 = vpack.c.b16 %v416, %v415
    %v526 = vpack.c.b16 %v418, %v417
    %v527 = vpack.c.b16 %v420, %v419
    %v528 = vpack.c.b16 %v422, %v421
    %v529 = vpack.c.b16 %v424, %v423
    %v530 = vpack.c.b16 %v426, %v425
    %v531 = vpack.c.b16 %v428, %v427
    %v532 = vpack.c.b16 %v430, %v429
    %v533 = vpack.c.b16 %v432, %v431
    %v534 = vpack.c.b16 %v434, %v433
    %v535 = vpack.c.b16 %v436, %v435
    %v536 = vpack.c.b16 %v438, %v437
    %v537 = vpack.c.b16 %v440, %v439
    %v538 = vpack.c.b16 %v442, %v441
    %v539 = vpack.c.b16 %v444, %v443
    %v540 = vpack.c.b16 %v446, %v445
    %v541 = vpack.c.b16 %v448, %v447
    %v542 = vpack.c.b16 %v450, %v449
    %v543 = vpack.c.b16 %v452, %v451
    %v544 = vpack.c.b16 %v454, %v453
    %v545 = vpack.c.b16 %v456, %v455
    %v546 = vpack.c.b16 %v458, %v457
    %v547 = vpack.c.b16 %v460, %v459
    %v548 = vpack.c.b16 %v462, %v461
    %v549 = vpack.c.b16 %v464, %v463
    %v550 = vpack.c.b16 %v466, %v465
    %v551 = vpack.c.b16 %v468, %v467
    %v552 = vpack.c.b16 %v470, %v469
    %v553 = vpack.c.b16 %v472, %v471
    %v554 = vpack.c.b16 %v474, %v473
    %v555 = vpack.c.b16 %v476, %v475
    %v556 = vpack.c.b16 %v478, %v477
    %v557 = vpack.c.b16 %v480, %v479
    %v558 = vpack.c.b16 %v482, %v481
    %v559 = vpack.c.b16 %v484, %v483
    %v560 = vpack.c.b16 %v486, %v485
    %v561 = vpack.c.b16 %v488, %v487
    %v562 = vpack.c.b16 %v490, %v489
    %v563 = vpack.c.b16 %v492, %v491
    %v564 = vpack.c.b16 %v494, %v493
    %v565 = vpack.c.b16 %v496, %v495
    %v566 = vpack.c.b16 %v498, %v497
    %v567 = vpack.c.b16 %v500, %v499
    %v568 = vpack.c.b16 %v502, %v501
    %v569 = vpack.c.b16 %v504, %v503
    %v570 = vpack.c.b16 %v506, %v505
    %635 = vmatprep.subr.bf16.mxu0 0
    %636 = vmatpush1.bf16.msra.mxu0 %v507
    %637 = vmatprep.subr.bf16.mxu0 0
    %638 = vmatpush1.bf16.msra.mxu0 %v508
    %639 = vmatprep.subr.bf16.mxu0 0
    %640 = vmatpush1.bf16.msra.mxu0 %v509
    %641 = vmatprep.subr.bf16.mxu0 0
    %642 = vmatpush1.bf16.msra.mxu0 %v510
    %643 = vmatprep.subr.bf16.mxu0 0
    %644 = vmatpush1.bf16.msra.mxu0 %v511
    %645 = vmatprep.subr.bf16.mxu0 0
    %646 = vmatpush1.bf16.msra.mxu0 %v512
    %647 = vmatprep.subr.bf16.mxu0 0
    %648 = vmatpush1.bf16.msra.mxu0 %v513
    %649 = vmatprep.subr.bf16.mxu0 0
    %650 = vmatpush1.bf16.msra.mxu0 %v514
    %651 = vmatprep.subr.bf16.mxu0 0
    %652 = vmatpush1.bf16.msra.mxu0 %v515
    %653 = vmatprep.subr.bf16.mxu0 0
    %654 = vmatpush1.bf16.msra.mxu0 %v516
    %655 = vmatprep.subr.bf16.mxu0 0
    %656 = vmatpush1.bf16.msra.mxu0 %v517
    %657 = vmatprep.subr.bf16.mxu0 0
    %658 = vmatpush1.bf16.msra.mxu0 %v518
    %659 = vmatprep.subr.bf16.mxu0 0
    %660 = vmatpush1.bf16.msra.mxu0 %v519
    %661 = vmatprep.subr.bf16.mxu0 0
    %662 = vmatpush1.bf16.msra.mxu0 %v520
    %663 = vmatprep.subr.bf16.mxu0 0
    %664 = vmatpush1.bf16.msra.mxu0 %v521
    %665 = vmatprep.subr.bf16.mxu0 0
    %666 = vmatpush1.bf16.msra.mxu0 %v522
    %667 = vmatprep.mubr.bf16.mxu0 %v109
    %668 = vmatmul.mubr.bf16.gmra.mrb[0].mxu0 %v108
    %v669 = vpop.f32.mrb[0].mxu0
    %v670 = vadd.f32 %v249, %v669
    %v671 = vpop.f32.mrb[0].mxu0
    %v672 = vpop.f32.mrb[0].mxu0
    %v673 = vpop.f32.mrb[0].mxu0
    %674 = vdwg.mxu0
    %675 = vmatprep.subr.bf16.mxu0 0
    %676 = vmatpush1.bf16.msra.mxu0 %v523
    %677 = vmatprep.subr.bf16.mxu0 0
    %678 = vmatpush1.bf16.msra.mxu0 %v524
    %679 = vmatprep.subr.bf16.mxu0 0
    %680 = vmatpush1.bf16.msra.mxu0 %v525
    %681 = vmatprep.subr.bf16.mxu0 0
    %682 = vmatpush1.bf16.msra.mxu0 %v526
    %683 = vmatprep.subr.bf16.mxu0 0
    %684 = vmatpush1.bf16.msra.mxu0 %v527
    %685 = vmatprep.subr.bf16.mxu0 0
    %686 = vmatpush1.bf16.msra.mxu0 %v528
    %687 = vmatprep.subr.bf16.mxu0 0
    %688 = vmatpush1.bf16.msra.mxu0 %v529
    %689 = vmatprep.subr.bf16.mxu0 0
    %690 = vmatpush1.bf16.msra.mxu0 %v530
    %691 = vmatprep.subr.bf16.mxu0 0
    %692 = vmatpush1.bf16.msra.mxu0 %v531
    %693 = vmatprep.subr.bf16.mxu0 0
    %694 = vmatpush1.bf16.msra.mxu0 %v532
    %695 = vmatprep.subr.bf16.mxu0 0
    %696 = vmatpush1.bf16.msra.mxu0 %v533
    %697 = vmatprep.subr.bf16.mxu0 0
    %698 = vmatpush1.bf16.msra.mxu0 %v534
    %699 = vmatprep.subr.bf16.mxu0 0
    %700 = vmatpush1.bf16.msra.mxu0 %v535
    %701 = vmatprep.subr.bf16.mxu0 0
    %702 = vmatpush1.bf16.msra.mxu0 %v536
    %703 = vmatprep.subr.bf16.mxu0 0
    %704 = vmatpush1.bf16.msra.mxu0 %v537
    %705 = vmatprep.subr.bf16.mxu0 0
    %706 = vmatpush1.bf16.msra.mxu0 %v538
    %707 = vmatprep.mubr.bf16.mxu0 %v111
    %708 = vmatmul.mubr.bf16.gmra.mrb[0].mxu0 %v110
    %v709 = vpop.f32.mrb[0].mxu0
    %v710 = vadd.f32 %v670, %v709
    %v711 = vpop.f32.mrb[0].mxu0
    %v712 = vpop.f32.mrb[0].mxu0
    %v713 = vpop.f32.mrb[0].mxu0
    %714 = vdwg.mxu0
    %715 = vmatprep.subr.bf16.mxu0 0
    %716 = vmatpush1.bf16.msra.mxu0 %v539
    %717 = vmatprep.subr.bf16.mxu0 0
    %718 = vmatpush1.bf16.msra.mxu0 %v540
    %719 = vmatprep.subr.bf16.mxu0 0
    %720 = vmatpush1.bf16.msra.mxu0 %v541
    %721 = vmatprep.subr.bf16.mxu0 0
    %722 = vmatpush1.bf16.msra.mxu0 %v542
    %723 = vmatprep.subr.bf16.mxu0 0
    %724 = vmatpush1.bf16.msra.mxu0 %v543
    %725 = vmatprep.subr.bf16.mxu0 0
    %726 = vmatpush1.bf16.msra.mxu0 %v544
    %727 = vmatprep.subr.bf16.mxu0 0
    %728 = vmatpush1.bf16.msra.mxu0 %v545
    %729 = vmatprep.subr.bf16.mxu0 0
    %730 = vmatpush1.bf16.msra.mxu0 %v546
    %731 = vmatprep.subr.bf16.mxu0 0
    %732 = vmatpush1.bf16.msra.mxu0 %v547
    %733 = vmatprep.subr.bf16.mxu0 0
    %734 = vmatpush1.bf16.msra.mxu0 %v548
    %735 = vmatprep.subr.bf16.mxu0 0
    %736 = vmatpush1.bf16.msra.mxu0 %v549
    %737 = vmatprep.subr.bf16.mxu0 0
    %738 = vmatpush1.bf16.msra.mxu0 %v550
    %739 = vmatprep.subr.bf16.mxu0 0
    %740 = vmatpush1.bf16.msra.mxu0 %v551
    %741 = vmatprep.subr.bf16.mxu0 0
    %742 = vmatpush1.bf16.msra.mxu0 %v552
    %743 = vmatprep.subr.bf16.mxu0 0
    %744 = vmatpush1.bf16.msra.mxu0 %v553
    %745 = vmatprep.subr.bf16.mxu0 0
    %746 = vmatpush1.bf16.msra.mxu0 %v554
    %747 = vmatprep.mubr.bf16.mxu0 %v113
    %748 = vmatmul.mubr.bf16.gmra.mrb[0].mxu0 %v112
    %v749 = vpop.f32.mrb[0].mxu0
    %v750 = vadd.f32 %v710, %v749
    %v751 = vpop.f32.mrb[0].mxu0
    %v752 = vpop.f32.mrb[0].mxu0
    %v753 = vpop.f32.mrb[0].mxu0
    %754 = vdwg.mxu0
    %755 = vmatprep.subr.bf16.mxu0 0
    %756 = vmatpush1.bf16.msra.mxu0 %v555
    %757 = vmatprep.subr.bf16.mxu0 0
    %758 = vmatpush1.bf16.msra.mxu0 %v556
    %759 = vmatprep.subr.bf16.mxu0 0
    %760 = vmatpush1.bf16.msra.mxu0 %v557
    %761 = vmatprep.subr.bf16.mxu0 0
    %762 = vmatpush1.bf16.msra.mxu0 %v558
    %763 = vmatprep.subr.bf16.mxu0 0
    %764 = vmatpush1.bf16.msra.mxu0 %v559
    %765 = vmatprep.subr.bf16.mxu0 0
    %766 = vmatpush1.bf16.msra.mxu0 %v560
    %767 = vmatprep.subr.bf16.mxu0 0
    %768 = vmatpush1.bf16.msra.mxu0 %v561
    %769 = vmatprep.subr.bf16.mxu0 0
    %770 = vmatpush1.bf16.msra.mxu0 %v562
    %771 = vmatprep.subr.bf16.mxu0 0
    %772 = vmatpush1.bf16.msra.mxu0 %v563
    %773 = vmatprep.subr.bf16.mxu0 0
    %774 = vmatpush1.bf16.msra.mxu0 %v564
    %775 = vmatprep.subr.bf16.mxu0 0
    %776 = vmatpush1.bf16.msra.mxu0 %v565
    %777 = vmatprep.subr.bf16.mxu0 0
    %778 = vmatpush1.bf16.msra.mxu0 %v566
    %779 = vmatprep.subr.bf16.mxu0 0
    %780 = vmatpush1.bf16.msra.mxu0 %v567
    %781 = vmatprep.subr.bf16.mxu0 0
    %782 = vmatpush1.bf16.msra.mxu0 %v568
    %783 = vmatprep.subr.bf16.mxu0 0
    %784 = vmatpush1.bf16.msra.mxu0 %v569
    %785 = vmatprep.subr.bf16.mxu0 0
    %786 = vmatpush1.bf16.msra.mxu0 %v570
    %787 = vmatprep.mubr.bf16.mxu0 %v115
    %788 = vmatmul.mubr.bf16.gmra.mrb[0].mxu0 %v114
    %v789 = vpop.f32.mrb[0].mxu0
    %v790 = vadd.f32 %v750, %v789
    %v791 = vpop.f32.mrb[0].mxu0
    %v792 = vpop.f32.mrb[0].mxu0
    %v793 = vpop.f32.mrb[0].mxu0
    %794 = vdwg.mxu0
    %v795 = vmax.f32 %v790, 0.0
    %v796 = vpack.c.bf16 %v795, %v795
    %v797 = vld [vmem:[#allocation7] sm:$0xf]
    %v798 = vld [vmem:[#allocation7 + $0x4] sm:$0xf]
    %v799 = vld [vmem:[#allocation7 + $0x8] sm:$0xf]
    %v800 = vld [vmem:[#allocation7 + $0xc] sm:$0xf]
    %v801 = vld [vmem:[#allocation7 + $0x10] sm:$0xf]
    %v802 = vld [vmem:[#allocation7 + $0x14] sm:$0xf]
    %v803 = vld [vmem:[#allocation7 + $0x18] sm:$0xf]
    %v804 = vld [vmem:[#allocation7 + $0x1c] sm:$0xf]
    %v805 = vld [vmem:[#allocation7 + $0x20] sm:$0xf]
    %v806 = vld [vmem:[#allocation7 + $0x24] sm:$0xf]
    %v807 = vld [vmem:[#allocation7 + $0x28] sm:$0xf]
    %v808 = vld [vmem:[#allocation7 + $0x2c] sm:$0xf]
    %v809 = vld [vmem:[#allocation7 + $0x30] sm:$0xf]
    %v810 = vld [vmem:[#allocation7 + $0x34] sm:$0xf]
    %v811 = vld [vmem:[#allocation7 + $0x38] sm:$0xf]
    %v812 = vld [vmem:[#allocation7 + $0x3c] sm:$0xf]
    %v813 = vld [vmem:[%s4] sm:$0x1]
    %v815 = vlaneseq
    %v816 = vshrl.u32 %v815, 7
    %v817 = vsub.s32 0, %v816
    %v818 = vrot.slane %v813, %v817
    %v836 = vunpack.c.l.b16 %v797
    %v837 = vunpack.c.l.b16 %v798
    %v838 = vunpack.c.l.b16 %v799
    %v839 = vunpack.c.l.b16 %v800
    %v840 = vunpack.c.l.b16 %v801
    %v841 = vunpack.c.l.b16 %v802
    %v842 = vunpack.c.l.b16 %v803
    %v843 = vunpack.c.l.b16 %v804
    %v844 = vunpack.c.l.b16 %v805
    %v845 = vunpack.c.l.b16 %v806
    %v846 = vunpack.c.l.b16 %v807
    %v847 = vunpack.c.l.b16 %v808
    %v848 = vunpack.c.l.b16 %v809
    %v849 = vunpack.c.l.b16 %v810
    %v850 = vunpack.c.l.b16 %v811
    %v851 = vunpack.c.l.b16 %v812
    %v852 = vpack.c.b16 %v837, %v836
    %v853 = vpack.c.b16 %v839, %v838
    %v854 = vpack.c.b16 %v841, %v840
    %v855 = vpack.c.b16 %v843, %v842
    %v856 = vpack.c.b16 %v845, %v844
    %v857 = vpack.c.b16 %v847, %v846
    %v858 = vpack.c.b16 %v849, %v848
    %v859 = vpack.c.b16 %v851, %v850
    %868 = vmatprep.subr.bf16.mxu0 0
    %869 = vmatpush1.bf16.msra.mxu0 %v852
    %870 = vmatprep.subr.bf16.mxu0 0
    %871 = vmatpush1.bf16.msra.mxu0 %v853
    %872 = vmatprep.subr.bf16.mxu0 0
    %873 = vmatpush1.bf16.msra.mxu0 %v854
    %874 = vmatprep.subr.bf16.mxu0 0
    %875 = vmatpush1.bf16.msra.mxu0 %v855
    %876 = vmatprep.subr.bf16.mxu0 0
    %877 = vmatpush1.bf16.msra.mxu0 %v856
    %878 = vmatprep.subr.bf16.mxu0 0
    %879 = vmatpush1.bf16.msra.mxu0 %v857
    %880 = vmatprep.subr.bf16.mxu0 0
    %881 = vmatpush1.bf16.msra.mxu0 %v858
    %882 = vmatprep.subr.bf16.mxu0 0
    %883 = vmatpush1.bf16.msra.mxu0 %v859
    %884 = vmatprep.subr.bf16.mxu0 0
    %885 = vmatpush1.bf16.msra.mxu0 0
    %886 = vmatprep.subr.bf16.mxu0 0
    %887 = vmatpush1.bf16.msra.mxu0 0
    %888 = vmatprep.subr.bf16.mxu0 0
    %889 = vmatpush1.bf16.msra.mxu0 0
    %890 = vmatprep.subr.bf16.mxu0 0
    %891 = vmatpush1.bf16.msra.mxu0 0
    %892 = vmatprep.subr.bf16.mxu0 0
    %893 = vmatpush1.bf16.msra.mxu0 0
    %894 = vmatprep.subr.bf16.mxu0 0
    %895 = vmatpush1.bf16.msra.mxu0 0
    %896 = vmatprep.subr.bf16.mxu0 0
    %897 = vmatpush1.bf16.msra.mxu0 0
    %898 = vmatprep.subr.bf16.mxu0 0
    %899 = vmatpush1.bf16.msra.mxu0 0
    %900 = vmatprep.mubr.bf16.mxu0 0
    %901 = vmatmul.mubr.bf16.gmra.mrb[0].mxu0 %v796
    %v902 = vpop.f32.mrb[0].mxu0
    %v903 = vadd.f32 %v818, %v902
    %v904 = vpop.f32.mrb[0].mxu0
    %v905 = vpop.f32.mrb[0].mxu0
    %v906 = vpop.f32.mrb[0].mxu0
    %907 = vdwg.mxu0
    %v908 = vpack.c.bf16 %v903, %v903
    %v909 = vld [vmem:[#allocation8] sm:$0xf]
    %v910 = vld [vmem:[#allocation8 + $0x4] sm:$0xf]
    %v911 = vld [vmem:[#allocation8 + $0x8] sm:$0xf]
    %v912 = vld [vmem:[#allocation8 + $0xc] sm:$0xf]
    %v913 = vld [vmem:[#allocation8 + $0x10] sm:$0xf]
    %v914 = vld [vmem:[#allocation8 + $0x14] sm:$0xf]
    %v915 = vld [vmem:[#allocation8 + $0x18] sm:$0xf]
    %v916 = vld [vmem:[#allocation8 + $0x1c] sm:$0xf]
    %v917 = vld [vmem:[#allocation8 + $0x20] sm:$0xf]
    %v918 = vld [vmem:[#allocation8 + $0x24] sm:$0xf]
    %v919 = vld [vmem:[#allocation8 + $0x28] sm:$0xf]
    %v920 = vld [vmem:[#allocation8 + $0x2c] sm:$0xf]
    %v921 = vld [vmem:[#allocation8 + $0x30] sm:$0xf]
    %v922 = vld [vmem:[#allocation8 + $0x34] sm:$0xf]
    %v923 = vld [vmem:[#allocation8 + $0x38] sm:$0xf]
    %v924 = vld [vmem:[#allocation8 + $0x3c] sm:$0xf]
    %v925 = vld [vmem:[%s6] sm:$0x1]
    %v927 = vlaneseq
    %v928 = vshrl.u32 %v927, 7
    %v929 = vsub.s32 0, %v928
    %v930 = vrot.slane %v925, %v929
    %v948 = vunpack.c.l.b16 %v909
    %v949 = vunpack.c.l.b16 %v910
    %v950 = vunpack.c.l.b16 %v911
    %v951 = vunpack.c.l.b16 %v912
    %v952 = vunpack.c.l.b16 %v913
    %v953 = vunpack.c.l.b16 %v914
    %v954 = vunpack.c.l.b16 %v915
    %v955 = vunpack.c.l.b16 %v916
    %v956 = vunpack.c.l.b16 %v917
    %v957 = vunpack.c.l.b16 %v918
    %v958 = vunpack.c.l.b16 %v919
    %v959 = vunpack.c.l.b16 %v920
    %v960 = vunpack.c.l.b16 %v921
    %v961 = vunpack.c.l.b16 %v922
    %v962 = vunpack.c.l.b16 %v923
    %v963 = vunpack.c.l.b16 %v924
    %v964 = vpack.c.b16 %v949, %v948
    %v965 = vpack.c.b16 %v951, %v950
    %v966 = vpack.c.b16 %v953, %v952
    %v967 = vpack.c.b16 %v955, %v954
    %v968 = vpack.c.b16 %v957, %v956
    %v969 = vpack.c.b16 %v959, %v958
    %v970 = vpack.c.b16 %v961, %v960
    %v971 = vpack.c.b16 %v963, %v962
    %980 = vmatprep.subr.bf16.mxu0 0
    %981 = vmatpush1.bf16.msra.mxu0 %v964
    %982 = vmatprep.subr.bf16.mxu0 0
    %983 = vmatpush1.bf16.msra.mxu0 %v965
    %984 = vmatprep.subr.bf16.mxu0 0
    %985 = vmatpush1.bf16.msra.mxu0 %v966
    %986 = vmatprep.subr.bf16.mxu0 0
    %987 = vmatpush1.bf16.msra.mxu0 %v967
    %988 = vmatprep.subr.bf16.mxu0 0
    %989 = vmatpush1.bf16.msra.mxu0 %v968
    %990 = vmatprep.subr.bf16.mxu0 0
    %991 = vmatpush1.bf16.msra.mxu0 %v969
    %992 = vmatprep.subr.bf16.mxu0 0
    %993 = vmatpush1.bf16.msra.mxu0 %v970
    %994 = vmatprep.subr.bf16.mxu0 0
    %995 = vmatpush1.bf16.msra.mxu0 %v971
    %996 = vmatprep.subr.bf16.mxu0 0
    %997 = vmatpush1.bf16.msra.mxu0 0
    %998 = vmatprep.subr.bf16.mxu0 0
    %999 = vmatpush1.bf16.msra.mxu0 0
    %1000 = vmatprep.subr.bf16.mxu0 0
    %1001 = vmatpush1.bf16.msra.mxu0 0
    %1002 = vmatprep.subr.bf16.mxu0 0
    %1003 = vmatpush1.bf16.msra.mxu0 0
    %1004 = vmatprep.subr.bf16.mxu0 0
    %1005 = vmatpush1.bf16.msra.mxu0 0
    %1006 = vmatprep.subr.bf16.mxu0 0
    %1007 = vmatpush1.bf16.msra.mxu0 0
    %1008 = vmatprep.subr.bf16.mxu0 0
    %1009 = vmatpush1.bf16.msra.mxu0 0
    %1010 = vmatprep.subr.bf16.mxu0 0
    %1011 = vmatpush1.bf16.msra.mxu0 0
    %1012 = vmatprep.mubr.bf16.mxu0 0
    %1013 = vmatmul.mubr.bf16.gmra.mrb[0].mxu0 %v908
    %v1014 = vpop.f32.mrb[0].mxu0
    %v1015 = vadd.f32 %v930, %v1014
    %v1016 = vpop.f32.mrb[0].mxu0
    %v1017 = vpop.f32.mrb[0].mxu0
    %v1018 = vpop.f32.mrb[0].mxu0
    %1019 = vdwg.mxu0
    %v1020 = vmax.f32 %v1015, 0.0
    %v1021 = vpack.c.bf16 %v1020, %v1020
    %v1022 = vld [vmem:[#allocation10] sm:$0xff]
    %v1023 = vld [vmem:[#allocation10 + $0x8] sm:$0xff]
    %v1024 = vld [vmem:[#allocation10 + $0x10] sm:$0xff]
    %v1025 = vld [vmem:[#allocation10 + $0x18] sm:$0xff]
    %v1026 = vld [vmem:[#allocation10 + $0x20] sm:$0xff]
    %v1027 = vld [vmem:[#allocation10 + $0x28] sm:$0xff]
    %v1028 = vld [vmem:[#allocation10 + $0x30] sm:$0xff]
    %v1029 = vld [vmem:[#allocation10 + $0x38] sm:$0xff]
    %v1030 = vld [vmem:[#allocation10 + $0x40] sm:$0xff]
    %v1031 = vld [vmem:[#allocation10 + $0x48] sm:$0xff]
    %v1032 = vld [vmem:[#allocation10 + $0x50] sm:$0xff]
    %v1033 = vld [vmem:[#allocation10 + $0x58] sm:$0xff]
    %v1034 = vld [vmem:[#allocation10 + $0x60] sm:$0xff]
    %v1035 = vld [vmem:[#allocation10 + $0x68] sm:$0xff]
    %v1036 = vld [vmem:[#allocation10 + $0x70] sm:$0xff]
    %v1037 = vld [vmem:[#allocation10 + $0x78] sm:$0xff]
    %v1038 = vld [vmem:[#allocation10 + $0x80] sm:$0xff]
    %v1039 = vld [vmem:[#allocation10 + $0x88] sm:$0xff]
    %v1040 = vld [vmem:[#allocation10 + $0x90] sm:$0xff]
    %v1041 = vld [vmem:[#allocation10 + $0x98] sm:$0xff]
    %v1042 = vld [vmem:[#allocation10 + $0xa0] sm:$0xff]
    %v1043 = vld [vmem:[#allocation10 + $0xa8] sm:$0xff]
    %v1044 = vld [vmem:[#allocation10 + $0xb0] sm:$0xff]
    %v1045 = vld [vmem:[#allocation10 + $0xb8] sm:$0xff]
    %v1046 = vld [vmem:[#allocation10 + $0xc0] sm:$0xff]
    %v1047 = vld [vmem:[#allocation10 + $0xc8] sm:$0xff]
    %v1048 = vld [vmem:[#allocation10 + $0xd0] sm:$0xff]
    %v1049 = vld [vmem:[#allocation10 + $0xd8] sm:$0xff]
    %v1050 = vld [vmem:[#allocation10 + $0xe0] sm:$0xff]
    %v1051 = vld [vmem:[#allocation10 + $0xe8] sm:$0xff]
    %v1052 = vld [vmem:[#allocation10 + $0xf0] sm:$0xff]
    %v1053 = vld [vmem:[#allocation10 + $0xf8] sm:$0xff]
    %v1054 = vld [vmem:[#allocation10 + $0x100] sm:$0xff]
    %v1055 = vld [vmem:[#allocation10 + $0x108] sm:$0xff]
    %v1056 = vld [vmem:[#allocation10 + $0x110] sm:$0xff]
    %v1057 = vld [vmem:[#allocation10 + $0x118] sm:$0xff]
    %v1058 = vld [vmem:[#allocation10 + $0x120] sm:$0xff]
    %v1059 = vld [vmem:[#allocation10 + $0x128] sm:$0xff]
    %v1060 = vld [vmem:[#allocation10 + $0x130] sm:$0xff]
    %v1061 = vld [vmem:[#allocation10 + $0x138] sm:$0xff]
    %v1062 = vld [vmem:[#allocation10 + $0x140] sm:$0xff]
    %v1063 = vld [vmem:[#allocation10 + $0x148] sm:$0xff]
    %v1064 = vld [vmem:[#allocation10 + $0x150] sm:$0xff]
    %v1065 = vld [vmem:[#allocation10 + $0x158] sm:$0xff]
    %v1066 = vld [vmem:[#allocation10 + $0x160] sm:$0xff]
    %v1067 = vld [vmem:[#allocation10 + $0x168] sm:$0xff]
    %v1068 = vld [vmem:[#allocation10 + $0x170] sm:$0xff]
    %v1069 = vld [vmem:[#allocation10 + $0x178] sm:$0xff]
    %v1070 = vld [vmem:[#allocation10 + $0x180] sm:$0xff]
    %v1071 = vld [vmem:[#allocation10 + $0x188] sm:$0xff]
    %v1072 = vld [vmem:[#allocation10 + $0x190] sm:$0xff]
    %v1073 = vld [vmem:[#allocation10 + $0x198] sm:$0xff]
    %v1074 = vld [vmem:[#allocation10 + $0x1a0] sm:$0xff]
    %v1075 = vld [vmem:[#allocation10 + $0x1a8] sm:$0xff]
    %v1076 = vld [vmem:[#allocation10 + $0x1b0] sm:$0xff]
    %v1077 = vld [vmem:[#allocation10 + $0x1b8] sm:$0xff]
    %v1078 = vld [vmem:[#allocation10 + $0x1c0] sm:$0xff]
    %v1079 = vld [vmem:[#allocation10 + $0x1c8] sm:$0xff]
    %v1080 = vld [vmem:[#allocation10 + $0x1d0] sm:$0xff]
    %v1081 = vld [vmem:[#allocation10 + $0x1d8] sm:$0xff]
    %v1082 = vld [vmem:[#allocation10 + $0x1e0] sm:$0xff]
    %v1083 = vld [vmem:[#allocation10 + $0x1e8] sm:$0xff]
    %v1084 = vld [vmem:[#allocation10 + $0x1f0] sm:$0xff]
    %v1085 = vld [vmem:[#allocation10 + $0x1f8] sm:$0xff]
    %v1086 = vld [vmem:[%s8] sm:$0xff]
    %v1088 = vlaneseq
    %v1089 = vshrl.u32 %v1088, 7
    %v1090 = vsub.s32 0, %v1089
    %v1091 = vrot.slane %v1086, %v1090
    %v1092 = vlaneseq
    %v1093 = vshrl.u32 %v1092, 7
    %v1094 = vsub.s32 1, %v1093
    %v1095 = vrot.slane %v1086, %v1094
    %v1096 = vlaneseq
    %v1097 = vshrl.u32 %v1096, 7
    %v1098 = vsub.s32 2, %v1097
    %v1099 = vrot.slane %v1086, %v1098
    %v1100 = vlaneseq
    %v1101 = vshrl.u32 %v1100, 7
    %v1102 = vsub.s32 3, %v1101
    %v1103 = vrot.slane %v1086, %v1102
    %v1104 = vlaneseq
    %v1105 = vshrl.u32 %v1104, 7
    %v1106 = vsub.s32 4, %v1105
    %v1107 = vrot.slane %v1086, %v1106
    %v1108 = vlaneseq
    %v1109 = vshrl.u32 %v1108, 7
    %v1110 = vsub.s32 5, %v1109
    %v1111 = vrot.slane %v1086, %v1110
    %v1112 = vlaneseq
    %v1113 = vshrl.u32 %v1112, 7
    %v1114 = vsub.s32 6, %v1113
    %v1115 = vrot.slane %v1086, %v1114
    %v1116 = vlaneseq
    %v1117 = vshrl.u32 %v1116, 7
    %v1118 = vsub.s32 7, %v1117
    %v1119 = vrot.slane %v1086, %v1118
    %v1192 = vunpack.c.l.b16 %v1022
    %v1193 = vunpack.c.h.b16 %v1022
    %v1194 = vunpack.c.l.b16 %v1023
    %v1195 = vunpack.c.h.b16 %v1023
    %v1196 = vunpack.c.l.b16 %v1024
    %v1197 = vunpack.c.h.b16 %v1024
    %v1198 = vunpack.c.l.b16 %v1025
    %v1199 = vunpack.c.h.b16 %v1025
    %v1200 = vunpack.c.l.b16 %v1026
    %v1201 = vunpack.c.h.b16 %v1026
    %v1202 = vunpack.c.l.b16 %v1027
    %v1203 = vunpack.c.h.b16 %v1027
    %v1204 = vunpack.c.l.b16 %v1028
    %v1205 = vunpack.c.h.b16 %v1028
    %v1206 = vunpack.c.l.b16 %v1029
    %v1207 = vunpack.c.h.b16 %v1029
    %v1208 = vunpack.c.l.b16 %v1030
    %v1209 = vunpack.c.h.b16 %v1030
    %v1210 = vunpack.c.l.b16 %v1031
    %v1211 = vunpack.c.h.b16 %v1031
    %v1212 = vunpack.c.l.b16 %v1032
    %v1213 = vunpack.c.h.b16 %v1032
    %v1214 = vunpack.c.l.b16 %v1033
    %v1215 = vunpack.c.h.b16 %v1033
    %v1216 = vunpack.c.l.b16 %v1034
    %v1217 = vunpack.c.h.b16 %v1034
    %v1218 = vunpack.c.l.b16 %v1035
    %v1219 = vunpack.c.h.b16 %v1035
    %v1220 = vunpack.c.l.b16 %v1036
    %v1221 = vunpack.c.h.b16 %v1036
    %v1222 = vunpack.c.l.b16 %v1037
    %v1223 = vunpack.c.h.b16 %v1037
    %v1224 = vunpack.c.l.b16 %v1038
    %v1225 = vunpack.c.h.b16 %v1038
    %v1226 = vunpack.c.l.b16 %v1039
    %v1227 = vunpack.c.h.b16 %v1039
    %v1228 = vunpack.c.l.b16 %v1040
    %v1229 = vunpack.c.h.b16 %v1040
    %v1230 = vunpack.c.l.b16 %v1041
    %v1231 = vunpack.c.h.b16 %v1041
    %v1232 = vunpack.c.l.b16 %v1042
    %v1233 = vunpack.c.h.b16 %v1042
    %v1234 = vunpack.c.l.b16 %v1043
    %v1235 = vunpack.c.h.b16 %v1043
    %v1236 = vunpack.c.l.b16 %v1044
    %v1237 = vunpack.c.h.b16 %v1044
    %v1238 = vunpack.c.l.b16 %v1045
    %v1239 = vunpack.c.h.b16 %v1045
    %v1240 = vunpack.c.l.b16 %v1046
    %v1241 = vunpack.c.h.b16 %v1046
    %v1242 = vunpack.c.l.b16 %v1047
    %v1243 = vunpack.c.h.b16 %v1047
    %v1244 = vunpack.c.l.b16 %v1048
    %v1245 = vunpack.c.h.b16 %v1048
    %v1246 = vunpack.c.l.b16 %v1049
    %v1247 = vunpack.c.h.b16 %v1049
    %v1248 = vunpack.c.l.b16 %v1050
    %v1249 = vunpack.c.h.b16 %v1050
    %v1250 = vunpack.c.l.b16 %v1051
    %v1251 = vunpack.c.h.b16 %v1051
    %v1252 = vunpack.c.l.b16 %v1052
    %v1253 = vunpack.c.h.b16 %v1052
    %v1254 = vunpack.c.l.b16 %v1053
    %v1255 = vunpack.c.h.b16 %v1053
    %v1256 = vunpack.c.l.b16 %v1054
    %v1257 = vunpack.c.h.b16 %v1054
    %v1258 = vunpack.c.l.b16 %v1055
    %v1259 = vunpack.c.h.b16 %v1055
    %v1260 = vunpack.c.l.b16 %v1056
    %v1261 = vunpack.c.h.b16 %v1056
    %v1262 = vunpack.c.l.b16 %v1057
    %v1263 = vunpack.c.h.b16 %v1057
    %v1264 = vunpack.c.l.b16 %v1058
    %v1265 = vunpack.c.h.b16 %v1058
    %v1266 = vunpack.c.l.b16 %v1059
    %v1267 = vunpack.c.h.b16 %v1059
    %v1268 = vunpack.c.l.b16 %v1060
    %v1269 = vunpack.c.h.b16 %v1060
    %v1270 = vunpack.c.l.b16 %v1061
    %v1271 = vunpack.c.h.b16 %v1061
    %v1272 = vunpack.c.l.b16 %v1062
    %v1273 = vunpack.c.h.b16 %v1062
    %v1274 = vunpack.c.l.b16 %v1063
    %v1275 = vunpack.c.h.b16 %v1063
    %v1276 = vunpack.c.l.b16 %v1064
    %v1277 = vunpack.c.h.b16 %v1064
    %v1278 = vunpack.c.l.b16 %v1065
    %v1279 = vunpack.c.h.b16 %v1065
    %v1280 = vunpack.c.l.b16 %v1066
    %v1281 = vunpack.c.h.b16 %v1066
    %v1282 = vunpack.c.l.b16 %v1067
    %v1283 = vunpack.c.h.b16 %v1067
    %v1284 = vunpack.c.l.b16 %v1068
    %v1285 = vunpack.c.h.b16 %v1068
    %v1286 = vunpack.c.l.b16 %v1069
    %v1287 = vunpack.c.h.b16 %v1069
    %v1288 = vunpack.c.l.b16 %v1070
    %v1289 = vunpack.c.h.b16 %v1070
    %v1290 = vunpack.c.l.b16 %v1071
    %v1291 = vunpack.c.h.b16 %v1071
    %v1292 = vunpack.c.l.b16 %v1072
    %v1293 = vunpack.c.h.b16 %v1072
    %v1294 = vunpack.c.l.b16 %v1073
    %v1295 = vunpack.c.h.b16 %v1073
    %v1296 = vunpack.c.l.b16 %v1074
    %v1297 = vunpack.c.h.b16 %v1074
    %v1298 = vunpack.c.l.b16 %v1075
    %v1299 = vunpack.c.h.b16 %v1075
    %v1300 = vunpack.c.l.b16 %v1076
    %v1301 = vunpack.c.h.b16 %v1076
    %v1302 = vunpack.c.l.b16 %v1077
    %v1303 = vunpack.c.h.b16 %v1077
    %v1304 = vunpack.c.l.b16 %v1078
    %v1305 = vunpack.c.h.b16 %v1078
    %v1306 = vunpack.c.l.b16 %v1079
    %v1307 = vunpack.c.h.b16 %v1079
    %v1308 = vunpack.c.l.b16 %v1080
    %v1309 = vunpack.c.h.b16 %v1080
    %v1310 = vunpack.c.l.b16 %v1081
    %v1311 = vunpack.c.h.b16 %v1081
    %v1312 = vunpack.c.l.b16 %v1082
    %v1313 = vunpack.c.h.b16 %v1082
    %v1314 = vunpack.c.l.b16 %v1083
    %v1315 = vunpack.c.h.b16 %v1083
    %v1316 = vunpack.c.l.b16 %v1084
    %v1317 = vunpack.c.h.b16 %v1084
    %v1318 = vunpack.c.l.b16 %v1085
    %v1319 = vunpack.c.h.b16 %v1085
    %v1320 = vpack.c.b16 %v1200, %v1192
    %v1321 = vpack.c.b16 %v1201, %v1193
    %v1322 = vpack.c.b16 %v1202, %v1194
    %v1323 = vpack.c.b16 %v1203, %v1195
    %v1324 = vpack.c.b16 %v1204, %v1196
    %v1325 = vpack.c.b16 %v1205, %v1197
    %v1326 = vpack.c.b16 %v1206, %v1198
    %v1327 = vpack.c.b16 %v1207, %v1199
    %v1328 = vpack.c.b16 %v1216, %v1208
    %v1329 = vpack.c.b16 %v1217, %v1209
    %v1330 = vpack.c.b16 %v1218, %v1210
    %v1331 = vpack.c.b16 %v1219, %v1211
    %v1332 = vpack.c.b16 %v1220, %v1212
    %v1333 = vpack.c.b16 %v1221, %v1213
    %v1334 = vpack.c.b16 %v1222, %v1214
    %v1335 = vpack.c.b16 %v1223, %v1215
    %v1336 = vpack.c.b16 %v1232, %v1224
    %v1337 = vpack.c.b16 %v1233, %v1225
    %v1338 = vpack.c.b16 %v1234, %v1226
    %v1339 = vpack.c.b16 %v1235, %v1227
    %v1340 = vpack.c.b16 %v1236, %v1228
    %v1341 = vpack.c.b16 %v1237, %v1229
    %v1342 = vpack.c.b16 %v1238, %v1230
    %v1343 = vpack.c.b16 %v1239, %v1231
    %v1344 = vpack.c.b16 %v1248, %v1240
    %v1345 = vpack.c.b16 %v1249, %v1241
    %v1346 = vpack.c.b16 %v1250, %v1242
    %v1347 = vpack.c.b16 %v1251, %v1243
    %v1348 = vpack.c.b16 %v1252, %v1244
    %v1349 = vpack.c.b16 %v1253, %v1245
    %v1350 = vpack.c.b16 %v1254, %v1246
    %v1351 = vpack.c.b16 %v1255, %v1247
    %v1352 = vpack.c.b16 %v1264, %v1256
    %v1353 = vpack.c.b16 %v1265, %v1257
    %v1354 = vpack.c.b16 %v1266, %v1258
    %v1355 = vpack.c.b16 %v1267, %v1259
    %v1356 = vpack.c.b16 %v1268, %v1260
    %v1357 = vpack.c.b16 %v1269, %v1261
    %v1358 = vpack.c.b16 %v1270, %v1262
    %v1359 = vpack.c.b16 %v1271, %v1263
    %v1360 = vpack.c.b16 %v1280, %v1272
    %v1361 = vpack.c.b16 %v1281, %v1273
    %v1362 = vpack.c.b16 %v1282, %v1274
    %v1363 = vpack.c.b16 %v1283, %v1275
    %v1364 = vpack.c.b16 %v1284, %v1276
    %v1365 = vpack.c.b16 %v1285, %v1277
    %v1366 = vpack.c.b16 %v1286, %v1278
    %v1367 = vpack.c.b16 %v1287, %v1279
    %v1368 = vpack.c.b16 %v1296, %v1288
    %v1369 = vpack.c.b16 %v1297, %v1289
    %v1370 = vpack.c.b16 %v1298, %v1290
    %v1371 = vpack.c.b16 %v1299, %v1291
    %v1372 = vpack.c.b16 %v1300, %v1292
    %v1373 = vpack.c.b16 %v1301, %v1293
    %v1374 = vpack.c.b16 %v1302, %v1294
    %v1375 = vpack.c.b16 %v1303, %v1295
    %v1376 = vpack.c.b16 %v1312, %v1304
    %v1377 = vpack.c.b16 %v1313, %v1305
    %v1378 = vpack.c.b16 %v1314, %v1306
    %v1379 = vpack.c.b16 %v1315, %v1307
    %v1380 = vpack.c.b16 %v1316, %v1308
    %v1381 = vpack.c.b16 %v1317, %v1309
    %v1382 = vpack.c.b16 %v1318, %v1310
    %v1383 = vpack.c.b16 %v1319, %v1311
    %1448 = vmatprep.subr.bf16.mxu0 %v1321
    %1449 = vmatpush1.bf16.msra.mxu0 %v1320
    %1450 = vmatprep.subr.bf16.mxu0 %v1329
    %1451 = vmatpush1.bf16.msra.mxu0 %v1328
    %1452 = vmatprep.subr.bf16.mxu0 %v1337
    %1453 = vmatpush1.bf16.msra.mxu0 %v1336
    %1454 = vmatprep.subr.bf16.mxu0 %v1345
    %1455 = vmatpush1.bf16.msra.mxu0 %v1344
    %1456 = vmatprep.subr.bf16.mxu0 %v1353
    %1457 = vmatpush1.bf16.msra.mxu0 %v1352
    %1458 = vmatprep.subr.bf16.mxu0 %v1361
    %1459 = vmatpush1.bf16.msra.mxu0 %v1360
    %1460 = vmatprep.subr.bf16.mxu0 %v1369
    %1461 = vmatpush1.bf16.msra.mxu0 %v1368
    %1462 = vmatprep.subr.bf16.mxu0 %v1377
    %1463 = vmatpush1.bf16.msra.mxu0 %v1376
    %1464 = vmatprep.subr.bf16.mxu0 0
    %1465 = vmatpush1.bf16.msra.mxu0 0
    %1466 = vmatprep.subr.bf16.mxu0 0
    %1467 = vmatpush1.bf16.msra.mxu0 0
    %1468 = vmatprep.subr.bf16.mxu0 0
    %1469 = vmatpush1.bf16.msra.mxu0 0
    %1470 = vmatprep.subr.bf16.mxu0 0
    %1471 = vmatpush1.bf16.msra.mxu0 0
    %1472 = vmatprep.subr.bf16.mxu0 0
    %1473 = vmatpush1.bf16.msra.mxu0 0
    %1474 = vmatprep.subr.bf16.mxu0 0
    %1475 = vmatpush1.bf16.msra.mxu0 0
    %1476 = vmatprep.subr.bf16.mxu0 0
    %1477 = vmatpush1.bf16.msra.mxu0 0
    %1478 = vmatprep.subr.bf16.mxu0 0
    %1479 = vmatpush1.bf16.msra.mxu0 0
    %1480 = vmatprep.mubr.bf16.mxu0 0
    %1481 = vmatmul.mubr.bf16.gmra.mrb[0].mxu0 %v1021
    %v1482 = vpop.f32.mrb[0].mxu0
    %v1483 = vadd.f32 %v1091, %v1482
    %v1484 = vpop.f32.mrb[0].mxu0
    %v1485 = vadd.f32 %v1095, %v1484
    %v1486 = vpop.f32.mrb[0].mxu0
    %v1487 = vpop.f32.mrb[0].mxu0
    %1488 = vdwg.mxu0
    %1489 = vmatprep.subr.bf16.mxu0 %v1323
    %1490 = vmatpush1.bf16.msra.mxu0 %v1322
    %1491 = vmatprep.subr.bf16.mxu0 %v1331
    %1492 = vmatpush1.bf16.msra.mxu0 %v1330
    %1493 = vmatprep.subr.bf16.mxu0 %v1339
    %1494 = vmatpush1.bf16.msra.mxu0 %v1338
    %1495 = vmatprep.subr.bf16.mxu0 %v1347
    %1496 = vmatpush1.bf16.msra.mxu0 %v1346
    %1497 = vmatprep.subr.bf16.mxu0 %v1355
    %1498 = vmatpush1.bf16.msra.mxu0 %v1354
    %1499 = vmatprep.subr.bf16.mxu0 %v1363
    %1500 = vmatpush1.bf16.msra.mxu0 %v1362
    %1501 = vmatprep.subr.bf16.mxu0 %v1371
    %1502 = vmatpush1.bf16.msra.mxu0 %v1370
    %1503 = vmatprep.subr.bf16.mxu0 %v1379
    %1504 = vmatpush1.bf16.msra.mxu0 %v1378
    %1505 = vmatprep.subr.bf16.mxu0 0
    %1506 = vmatpush1.bf16.msra.mxu0 0
    %1507 = vmatprep.subr.bf16.mxu0 0
    %1508 = vmatpush1.bf16.msra.mxu0 0
    %1509 = vmatprep.subr.bf16.mxu0 0
    %1510 = vmatpush1.bf16.msra.mxu0 0
    %1511 = vmatprep.subr.bf16.mxu0 0
    %1512 = vmatpush1.bf16.msra.mxu0 0
    %1513 = vmatprep.subr.bf16.mxu0 0
    %1514 = vmatpush1.bf16.msra.mxu0 0
    %1515 = vmatprep.subr.bf16.mxu0 0
    %1516 = vmatpush1.bf16.msra.mxu0 0
    %1517 = vmatprep.subr.bf16.mxu0 0
    %1518 = vmatpush1.bf16.msra.mxu0 0
    %1519 = vmatprep.subr.bf16.mxu0 0
    %1520 = vmatpush1.bf16.msra.mxu0 0
    %1521 = vmatprep.mubr.bf16.mxu0 0
    %1522 = vmatmul.mubr.bf16.gmra.mrb[0].mxu0 %v1021
    %v1523 = vpop.f32.mrb[0].mxu0
    %v1524 = vadd.f32 %v1099, %v1523
    %v1525 = vpop.f32.mrb[0].mxu0
    %v1526 = vadd.f32 %v1103, %v1525
    %v1527 = vpop.f32.mrb[0].mxu0
    %v1528 = vpop.f32.mrb[0].mxu0
    %1529 = vdwg.mxu0
    %1530 = vmatprep.subr.bf16.mxu0 %v1325
    %1531 = vmatpush1.bf16.msra.mxu0 %v1324
    %1532 = vmatprep.subr.bf16.mxu0 %v1333
    %1533 = vmatpush1.bf16.msra.mxu0 %v1332
    %1534 = vmatprep.subr.bf16.mxu0 %v1341
    %1535 = vmatpush1.bf16.msra.mxu0 %v1340
    %1536 = vmatprep.subr.bf16.mxu0 %v1349
    %1537 = vmatpush1.bf16.msra.mxu0 %v1348
    %1538 = vmatprep.subr.bf16.mxu0 %v1357
    %1539 = vmatpush1.bf16.msra.mxu0 %v1356
    %1540 = vmatprep.subr.bf16.mxu0 %v1365
    %1541 = vmatpush1.bf16.msra.mxu0 %v1364
    %1542 = vmatprep.subr.bf16.mxu0 %v1373
    %1543 = vmatpush1.bf16.msra.mxu0 %v1372
    %1544 = vmatprep.subr.bf16.mxu0 %v1381
    %1545 = vmatpush1.bf16.msra.mxu0 %v1380
    %1546 = vmatprep.subr.bf16.mxu0 0
    %1547 = vmatpush1.bf16.msra.mxu0 0
    %1548 = vmatprep.subr.bf16.mxu0 0
    %1549 = vmatpush1.bf16.msra.mxu0 0
    %1550 = vmatprep.subr.bf16.mxu0 0
    %1551 = vmatpush1.bf16.msra.mxu0 0
    %1552 = vmatprep.subr.bf16.mxu0 0
    %1553 = vmatpush1.bf16.msra.mxu0 0
    %1554 = vmatprep.subr.bf16.mxu0 0
    %1555 = vmatpush1.bf16.msra.mxu0 0
    %1556 = vmatprep.subr.bf16.mxu0 0
    %1557 = vmatpush1.bf16.msra.mxu0 0
    %1558 = vmatprep.subr.bf16.mxu0 0
    %1559 = vmatpush1.bf16.msra.mxu0 0
    %1560 = vmatprep.subr.bf16.mxu0 0
    %1561 = vmatpush1.bf16.msra.mxu0 0
    %1562 = vmatprep.mubr.bf16.mxu0 0
    %1563 = vmatmul.mubr.bf16.gmra.mrb[0].mxu0 %v1021
    %v1564 = vpop.f32.mrb[0].mxu0
    %v1565 = vadd.f32 %v1107, %v1564
    %v1566 = vpop.f32.mrb[0].mxu0
    %v1567 = vadd.f32 %v1111, %v1566
    %v1568 = vpop.f32.mrb[0].mxu0
    %v1569 = vpop.f32.mrb[0].mxu0
    %1570 = vdwg.mxu0
    %1571 = vmatprep.subr.bf16.mxu0 %v1327
    %1572 = vmatpush1.bf16.msra.mxu0 %v1326
    %1573 = vmatprep.subr.bf16.mxu0 %v1335
    %1574 = vmatpush1.bf16.msra.mxu0 %v1334
    %1575 = vmatprep.subr.bf16.mxu0 %v1343
    %1576 = vmatpush1.bf16.msra.mxu0 %v1342
    %1577 = vmatprep.subr.bf16.mxu0 %v1351
    %1578 = vmatpush1.bf16.msra.mxu0 %v1350
    %1579 = vmatprep.subr.bf16.mxu0 %v1359
    %1580 = vmatpush1.bf16.msra.mxu0 %v1358
    %1581 = vmatprep.subr.bf16.mxu0 %v1367
    %1582 = vmatpush1.bf16.msra.mxu0 %v1366
    %1583 = vmatprep.subr.bf16.mxu0 %v1375
    %1584 = vmatpush1.bf16.msra.mxu0 %v1374
    %1585 = vmatprep.subr.bf16.mxu0 %v1383
    %1586 = vmatpush1.bf16.msra.mxu0 %v1382
    %1587 = vmatprep.subr.bf16.mxu0 0
    %1588 = vmatpush1.bf16.msra.mxu0 0
    %1589 = vmatprep.subr.bf16.mxu0 0
    %1590 = vmatpush1.bf16.msra.mxu0 0
    %1591 = vmatprep.subr.bf16.mxu0 0
    %1592 = vmatpush1.bf16.msra.mxu0 0
    %1593 = vmatprep.subr.bf16.mxu0 0
    %1594 = vmatpush1.bf16.msra.mxu0 0
    %1595 = vmatprep.subr.bf16.mxu0 0
    %1596 = vmatpush1.bf16.msra.mxu0 0
    %1597 = vmatprep.subr.bf16.mxu0 0
    %1598 = vmatpush1.bf16.msra.mxu0 0
    %1599 = vmatprep.subr.bf16.mxu0 0
    %1600 = vmatpush1.bf16.msra.mxu0 0
    %1601 = vmatprep.subr.bf16.mxu0 0
    %1602 = vmatpush1.bf16.msra.mxu0 0
    %1603 = vmatprep.mubr.bf16.mxu0 0
    %1604 = vmatmul.mubr.bf16.gmra.mrb[0].mxu0 %v1021
    %v1605 = vpop.f32.mrb[0].mxu0
    %v1606 = vadd.f32 %v1115, %v1605
    %v1607 = vpop.f32.mrb[0].mxu0
    %v1608 = vadd.f32 %v1119, %v1607
    %v1609 = vpop.f32.mrb[0].mxu0
    %v1610 = vpop.f32.mrb[0].mxu0
    %1611 = vdwg.mxu0
    %1612 = vst [vmem:[#allocation11] sm:$0xff] %v1483
    %1613 = vst [vmem:[#allocation11 + $0x8] sm:$0xff] %v1485
    %1614 = vst [vmem:[#allocation11 + $0x10] sm:$0xff] %v1524
    %1615 = vst [vmem:[#allocation11 + $0x18] sm:$0xff] %v1526
    %1616 = vst [vmem:[#allocation11 + $0x20] sm:$0xff] %v1565
    %1617 = vst [vmem:[#allocation11 + $0x28] sm:$0xff] %v1567
    %1618 = vst [vmem:[#allocation11 + $0x30] sm:$0xff] %v1606
    %1619 = vst [vmem:[#allocation11 + $0x38] sm:$0xff] %v1608
    // Predicated region
    $region58: #{tpu_custom_call.1} parent=1 // pred_check
      _
    $region59: #{tpu_custom_call.1} parent=1 // pred_check_branch
      %1621 = sbr.rel (0) target = $region61
    $region60: #{tpu_custom_call.1} parent=1 // pred_region
      %s1623 = ssub.s32 1024, 1024
      %1624 = vsyncadd [#allocation4], %s1623
      %s1626 = sshll.u32 [#allocation11], 4
      %s1627 = int_to_ptr.vmem [resolvable:$true] %s1626
      %1629 = dma.vmem_to_hbm [thread:$0]  %s1627, 1024, %s9, [#allocation4]
    $region61: #{tpu_custom_call.1} parent=1 // pred_fallthru
      _
    // Predicated region
    $region62: #{tpu_custom_call.1} parent=1 // pred_check
      _
    $region63: #{tpu_custom_call.1} parent=1 // pred_check_branch
      %1631 = sbr.rel (0) target = $region65
    $region64: #{tpu_custom_call.1} parent=1 // pred_region
      %1632 = dma.done [#allocation4], 1024
    $region65: #{tpu_custom_call.1} parent=1 // pred_fallthru
      _
    %1633 = vsyncpa [#allocation3], 1
    %1634 = vsyncpa [#allocation6], 1
    %1635 = vsyncpa [#allocation9], 1
    %1636 = vsyncpa [#allocation4], 1

</llo_original>
